<compile_context>
chip_gen: v6e
topology: v6e:2x2x1
jax: 0.10.0
libtpu: 0.0.40
codegen_flags: <defaults>
</compile_context>

<pallas_src>
import functools

import jax
import jax.numpy as jnp
from jax.experimental import pallas as pl
from jax.experimental.pallas import tpu as pltpu

EPS = 1e-5        # PyTorch nn.LayerNorm default eps
NEG_INF = -1e30   # mask value for padded attention keys


def _ln(x, g, b):
    """LayerNorm over the last dim (f32 statistics). g, b broadcast as (1, F)."""
    x = x.astype(jnp.float32)
    mu = jnp.mean(x, axis=-1, keepdims=True)
    var = jnp.mean(jnp.square(x - mu), axis=-1, keepdims=True)
    return (x - mu) * jax.lax.rsqrt(var + EPS) * g + b


# --------------------------- patch-embedding kernel ---------------------------


def patch_embed_kernel(patches_ref, base_ref, g1_ref, b1_ref, w_ref, wb_ref,
                       g2_ref, b2_ref, o_ref, *, n_patches, tb, n_pad):
    patch_dim = patches_ref.shape[-1]
    dim = o_ref.shape[-1]
    m_rows = tb * n_pad

    p = patches_ref[...].reshape(m_rows, patch_dim)              # bf16 input
    pn = _ln(p, g1_ref[...], b1_ref[...]).astype(jnp.bfloat16)
    emb = jnp.dot(pn, w_ref[...],
                  preferred_element_type=jnp.float32) + wb_ref[...]
    emb = _ln(emb, g2_ref[...], b2_ref[...])                     # (M, dim) f32

    # rows: 0 = cls slot, 1..n_patches = patches, rest = padding
    row = jax.lax.broadcasted_iota(jnp.int32, (n_pad, 1), 0)
    pmask = jnp.logical_and(row >= 1, row <= n_patches).astype(jnp.float32)

    # base = cls token (row 0) + positional embedding, zero on padded rows
    o_ref[...] = base_ref[...] + emb.reshape(tb, n_pad, dim) * pmask[None]


# ------------------------------ transformer kernel ----------------------------


def transformer_kernel(x0_ref, ag_ref, ab_ref, wq_ref, wk_ref, wv_ref, wo_ref,
                       bo_ref, fg_ref, fb_ref, w1_ref, b1_ref, w2_ref, b2_ref,
                       lg_ref, lb_ref, o_ref,
                       *, heads, dim_head, n_valid, n_pad, tb, depth):
    dh = dim_head
    dim = x0_ref.shape[-1]
    m_rows = tb * n_pad

    x0 = x0_ref[...].reshape(m_rows, dim)                        # (M, dim) f32

    # padded-key bias, computed once per batch step (hoisted out of layer loop)
    col = jax.lax.broadcasted_iota(jnp.int32, (1, n_pad), 1)
    key_bias = jnp.where(col < n_valid, 0.0, NEG_INF).astype(jnp.float32)[None]

    def layer(li, x):
        # ---- pre-LN multi-head attention + residual --------------------------
        xn = _ln(x, ag_ref[li], ab_ref[li]).astype(jnp.bfloat16)
        # fused lane-dense projections; attention scale pre-folded into wq
        q = jnp.dot(xn, wq_ref[li], preferred_element_type=jnp.float32)
        k = jnp.dot(xn, wk_ref[li], preferred_element_type=jnp.float32)
        v = jnp.dot(xn, wv_ref[li], preferred_element_type=jnp.float32)

        ctx_heads = []
        for h in range(heads):                   # static unroll: softmax core only
            sl = slice(h * dh, (h + 1) * dh)
            qh = q[:, sl].reshape(tb, n_pad, dh).astype(jnp.bfloat16)
            kh = k[:, sl].reshape(tb, n_pad, dh).astype(jnp.bfloat16)
            vh = v[:, sl].reshape(tb, n_pad, dh).astype(jnp.bfloat16)
            logits = jnp.einsum('bqd,bkd->bqk', qh, kh,
                                preferred_element_type=jnp.float32) + key_bias
            mx = jnp.max(logits, axis=-1, keepdims=True)
            e = jnp.exp(logits - mx)
            attn = (e / jnp.sum(e, axis=-1, keepdims=True)).astype(jnp.bfloat16)
            ctx = jnp.einsum('bqk,bkd->bqd', attn, vh,
                             preferred_element_type=jnp.float32)  # (tb, n_pad, dh)
            ctx_heads.append(ctx.reshape(m_rows, dh))

        ctx_all = (jnp.concatenate(ctx_heads, axis=-1)
                   if heads > 1 else ctx_heads[0]).astype(jnp.bfloat16)
        x = x + jnp.dot(ctx_all, wo_ref[li],
                        preferred_element_type=jnp.float32) + bo_ref[li]

        # ---- pre-LN feed-forward + residual ----------------------------------
        xn = _ln(x, fg_ref[li], fb_ref[li]).astype(jnp.bfloat16)
        hdn = jnp.dot(xn, w1_ref[li],
                      preferred_element_type=jnp.float32) + b1_ref[li]
        # TODO(synk): PyTorch nn.GELU default is the exact erf form; tanh
        # approximation used here for guaranteed Mosaic lowering.
        hdn = jax.nn.gelu(hdn, approximate=True)
        x = x + jnp.dot(hdn.astype(jnp.bfloat16), w2_ref[li],
                        preferred_element_type=jnp.float32) + b2_ref[li]
        return x

    x = jax.lax.fori_loop(0, depth, layer, x0, unroll=True)

    # final LayerNorm; single HBM writeback per batch tile
    o_ref[...] = _ln(x, lg_ref[...], lb_ref[...]).reshape(tb, n_pad, dim)


# --------------------------------- parameters ---------------------------------


def init_params(key, cfg):
    C, ph = cfg["in_channels"], cfg["patch_size"]
    patch_dim = C * ph * ph
    dim, mlp = cfg["dim"], cfg["mlp_dim"]
    H, dh = cfg["heads"], cfg["dim_head"]
    L = cfg["depth"]
    hd = H * dh
    num_patches = (cfg["image_size"] // ph) ** 2

    keys = iter(jax.random.split(key, 32))

    def nrm(shape, scale=0.02, dtype=jnp.float32):
        return (scale * jax.random.normal(next(keys), shape)).astype(dtype)

    ones = lambda *s: jnp.ones(s, jnp.float32)
    zeros = lambda *s: jnp.zeros(s, jnp.float32)

    return {
        # patch embedding: LN(patch_dim) -> Linear(patch_dim, dim) -> LN(dim)
        "pe_g1": ones(1, patch_dim), "pe_b1": zeros(1, patch_dim),
        "pe_w": nrm((patch_dim, dim), dtype=jnp.bfloat16),
        "pe_wb": nrm((1, dim)),
        "pe_g2": ones(1, dim), "pe_b2": zeros(1, dim),
        # per-layer attention params (stacked over the layer axis, lane-dense)
        "attn_g": ones(L, 1, dim), "attn_b": zeros(L, 1, dim),
        "wq": nrm((L, dim, hd), dtype=jnp.bfloat16),
        "wk": nrm((L, dim, hd), dtype=jnp.bfloat16),
        "wv": nrm((L, dim, hd), dtype=jnp.bfloat16),
        "wo": nrm((L, hd, dim), dtype=jnp.bfloat16),
        "bo": nrm((L, 1, dim)),
        # per-layer MLP params
        "ff_g": ones(L, 1, dim), "ff_b": zeros(L, 1, dim),
        "w1": nrm((L, dim, mlp), dtype=jnp.bfloat16), "b1": nrm((L, 1, mlp)),
        "w2": nrm((L, mlp, dim), dtype=jnp.bfloat16), "b2": nrm((L, 1, dim)),
        # final LayerNorm
        "ln_g": ones(1, dim), "ln_b": zeros(1, dim),
        # cls token + positional embedding
        "cls_token": jax.random.normal(next(keys), (1, 1, dim), jnp.float32),
        "pos_embedding": jax.random.normal(
            next(keys), (1, num_patches + 1, dim), jnp.float32),
    }


# -------------------------------- forward pass --------------------------------


def sparse_ternary_vit_forward(img, params, cfg, sparsity=None):
    del sparsity  # dense (sparsity=None) path; see TODO at top
    B, C, H, W = img.shape
    ph = cfg["patch_size"]
    hh, ww = H // ph, W // ph
    n_patch = hh * ww
    dim = cfg["dim"]
    patch_dim = C * ph * ph
    n_valid = n_patch + 1                          # cls token + patches
    n_pad = max(8, ((n_valid + 7) // 8) * 8)       # pad token axis to 8 sublanes
    depth, heads, dh, mlp = cfg["depth"], cfg["heads"], cfg["dim_head"], cfg["mlp_dim"]
    hd = heads * dh

    # Batch tile: as large as possible while keeping >=2 parallel grid steps
    # (so v7x's second TensorCore has work); at B=2 this is TB=1, grid=(2,).
    tb = B // 2 if (B >= 2 and B % 2 == 0) else 1
    nb = B // tb

    # 'b c (h p1) (w p2) -> b (h w) (p1 p2 c)'   (glue, plain JAX)
    x = img.reshape(B, C, hh, ph, ww, ph)
    x = x.transpose(0, 2, 4, 3, 5, 1).reshape(B, n_patch, patch_dim)
    # row 0 reserved for the cls token; zero-pad the token axis; ship as bf16
    patches = jnp.pad(x, ((0, 0), (1, n_pad - 1 - n_patch), (0, 0)))
    patches = patches.astype(jnp.bfloat16)

    # cls token + positional embedding (added to the embedding in-kernel)
    base = jnp.concatenate(
        [params["cls_token"], jnp.zeros((1, n_patch, dim), jnp.float32)], axis=1)
    base = base + params["pos_embedding"][:, :n_valid]
    base = jnp.pad(base, ((0, 0), (0, n_pad - n_valid), (0, 0)))

    # fold the attention scale into wq once (saves a per-layer VPU multiply)
    wq = (params["wq"].astype(jnp.float32) * (dh ** -0.5)).astype(jnp.bfloat16)

    def const_spec(shape):
        nd = len(shape)
        return pl.BlockSpec(shape, lambda b, _nd=nd: (0,) * _nd)

    # ---- kernel 1: patch embedding -------------------------------------------
    pe_kernel = functools.partial(
        patch_embed_kernel, n_patches=n_patch, tb=tb, n_pad=n_pad)
    x0 = pl.pallas_call(
        pe_kernel,
        out_shape=jax.ShapeDtypeStruct((B, n_pad, dim), jnp.float32),
        grid=(nb,),
        in_specs=[
            pl.BlockSpec((tb, n_pad, patch_dim), lambda b: (b, 0, 0)),  # patches
            const_spec((1, n_pad, dim)),                                # cls+pos
            const_spec((1, patch_dim)), const_spec((1, patch_dim)),     # LN1
            const_spec((patch_dim, dim)), const_spec((1, dim)),         # Linear
            const_spec((1, dim)), const_spec((1, dim)),                 # LN2
        ],
        out_specs=pl.BlockSpec((tb, n_pad, dim), lambda b: (b, 0, 0)),
        compiler_params=pltpu.CompilerParams(dimension_semantics=("parallel",)),
    )(patches, base, params["pe_g1"], params["pe_b1"], params["pe_w"],
      params["pe_wb"], params["pe_g2"], params["pe_b2"])

    # ---- kernel 2: all transformer layers + final LN (layers loop in-kernel) --
    tf_kernel = functools.partial(
        transformer_kernel, heads=heads, dim_head=dh,
        n_valid=n_valid, n_pad=n_pad, tb=tb, depth=depth)

    out = pl.pallas_call(
        tf_kernel,
        out_shape=jax.ShapeDtypeStruct((B, n_pad, dim), jnp.float32),
        grid=(nb,),
        in_specs=[
            pl.BlockSpec((tb, n_pad, dim), lambda b: (b, 0, 0)),        # x0
            const_spec((depth, 1, dim)), const_spec((depth, 1, dim)),   # attn LN
            const_spec((depth, dim, hd)), const_spec((depth, dim, hd)),
            const_spec((depth, dim, hd)),                               # wq wk wv
            const_spec((depth, hd, dim)), const_spec((depth, 1, dim)),  # wo, bo
            const_spec((depth, 1, dim)), const_spec((depth, 1, dim)),   # ff LN
            const_spec((depth, dim, mlp)), const_spec((depth, 1, mlp)), # w1, b1
            const_spec((depth, mlp, dim)), const_spec((depth, 1, dim)), # w2, b2
            const_spec((1, dim)), const_spec((1, dim)),                 # final LN
        ],
        out_specs=pl.BlockSpec((tb, n_pad, dim), lambda b: (b, 0, 0)),
        compiler_params=pltpu.CompilerParams(dimension_semantics=("parallel",)),
    )(x0, params["attn_g"], params["attn_b"], wq, params["wk"], params["wv"],
      params["wo"], params["bo"], params["ff_g"], params["ff_b"],
      params["w1"], params["b1"], params["w2"], params["b2"],
      params["ln_g"], params["ln_b"])

    # drop the padded token rows
    return out[:, :n_valid]


if __name__ == "__main__":
    cfg = dict(
        image_size=16,
        patch_size=8,
        dim=32,
        depth=2,
        heads=2,
        mlp_dim=64,
        in_channels=4,
        dim_head=16,
    )
    key = jax.random.PRNGKey(0)
    k_img, k_par = jax.random.split(key)
    img = jax.random.normal(
        k_img, (2, cfg["in_channels"], cfg["image_size"], cfg["image_size"]),
        dtype=jnp.float32)
    params = init_params(k_par, cfg)

    fwd = jax.jit(lambda im, p: sparse_ternary_vit_forward(im, p, cfg))
    out = jax.block_until_ready(fwd(img, params))

    n_tokens = (cfg["image_size"] // cfg["patch_size"]) ** 2 + 1
    assert out.shape == (2, n_tokens, cfg["dim"]), out.shape
    assert bool(jnp.all(jnp.isfinite(out)))
    print("KERNEL_OK")
</pallas_src>

<mosaic_0001>
module attributes {stable_mosaic.version = 11 : i64} {
  func.func @patch_embed_kernel(%arg0: i32, %arg1: memref<1x8x256xbf16, #tpu.memory_space<vmem>>, %arg2: memref<1x8x32xf32, #tpu.memory_space<vmem>>, %arg3: memref<1x256xf32, #tpu.memory_space<vmem>>, %arg4: memref<1x256xf32, #tpu.memory_space<vmem>>, %arg5: memref<256x32xbf16, #tpu.memory_space<vmem>>, %arg6: memref<1x32xf32, #tpu.memory_space<vmem>>, %arg7: memref<1x32xf32, #tpu.memory_space<vmem>>, %arg8: memref<1x32xf32, #tpu.memory_space<vmem>>, %arg9: memref<1x8x32xf32, #tpu.memory_space<vmem>>) attributes {dimension_semantics = [#tpu.dimension_semantics<parallel>], iteration_bounds = array<i64: 2>, scalar_prefetch = 0 : i64, scratch_operands = 0 : i64, tpu.core_type = #tpu.core_type<tc>, window_params = [{transform_indices = @transform_0, window_bounds = array<i64: 1, 8, 256>}, {pipeline_mode = #tpu.pipeline_mode<synchronous>, transform_indices = @transform_1, window_bounds = array<i64: 1, 8, 32>}, {pipeline_mode = #tpu.pipeline_mode<synchronous>, transform_indices = @transform_2, window_bounds = array<i64: 1, 256>}, {pipeline_mode = #tpu.pipeline_mode<synchronous>, transform_indices = @transform_3, window_bounds = array<i64: 1, 256>}, {pipeline_mode = #tpu.pipeline_mode<synchronous>, transform_indices = @transform_4, window_bounds = array<i64: 256, 32>}, {pipeline_mode = #tpu.pipeline_mode<synchronous>, transform_indices = @transform_5, window_bounds = array<i64: 1, 32>}, {pipeline_mode = #tpu.pipeline_mode<synchronous>, transform_indices = @transform_6, window_bounds = array<i64: 1, 32>}, {pipeline_mode = #tpu.pipeline_mode<synchronous>, transform_indices = @transform_7, window_bounds = array<i64: 1, 32>}, {transform_indices = @transform_8, window_bounds = array<i64: 1, 8, 32>}]} {
    %c0 = arith.constant 0 : index
    %c0_0 = arith.constant 0 : index
    %c0_1 = arith.constant 0 : index
    %0 = vector.load %arg1[%c0, %c0_0, %c0_1] : memref<1x8x256xbf16, #tpu.memory_space<vmem>>, vector<1x8x256xbf16>
    %1 = vector.shape_cast %0 : vector<1x8x256xbf16> to vector<8x256xbf16>
    %c0_2 = arith.constant 0 : index
    %c0_3 = arith.constant 0 : index
    %2 = vector.load %arg3[%c0_2, %c0_3] : memref<1x256xf32, #tpu.memory_space<vmem>>, vector<1x256xf32>
    %c0_4 = arith.constant 0 : index
    %c0_5 = arith.constant 0 : index
    %3 = vector.load %arg4[%c0_4, %c0_5] : memref<1x256xf32, #tpu.memory_space<vmem>>, vector<1x256xf32>
    %4 = arith.extf %1 : vector<8x256xbf16> to vector<8x256xf32>
    %cst = arith.constant dense<0.000000e+00> : vector<8xf32>
    %5 = vector.multi_reduction <add>, %4, %cst [1] : vector<8x256xf32> to vector<8xf32>
    %6 = vector.shape_cast %5 : vector<8xf32> to vector<8x1xf32>
    %cst_6 = arith.constant 2.560000e+02 : f32
    %7 = vector.broadcast %cst_6 : f32 to vector<8x1xf32>
    %8 = arith.divf %6, %7 : vector<8x1xf32>
    %9 = vector.broadcast %8 : vector<8x1xf32> to vector<8x256xf32>
    %10 = arith.subf %4, %9 : vector<8x256xf32>
    %11 = arith.mulf %10, %10 : vector<8x256xf32>
    %cst_7 = arith.constant dense<0.000000e+00> : vector<8xf32>
    %12 = vector.multi_reduction <add>, %11, %cst_7 [1] : vector<8x256xf32> to vector<8xf32>
    %13 = vector.shape_cast %12 : vector<8xf32> to vector<8x1xf32>
    %cst_8 = arith.constant 2.560000e+02 : f32
    %14 = vector.broadcast %cst_8 : f32 to vector<8x1xf32>
    %15 = arith.divf %13, %14 : vector<8x1xf32>
    %16 = vector.broadcast %8 : vector<8x1xf32> to vector<8x256xf32>
    %17 = arith.subf %4, %16 : vector<8x256xf32>
    %cst_9 = arith.constant 9.99999974E-6 : f32
    %18 = vector.broadcast %cst_9 : f32 to vector<8x1xf32>
    %19 = arith.addf %15, %18 : vector<8x1xf32>
    %20 = math.rsqrt %19 : vector<8x1xf32>
    %21 = vector.broadcast %20 : vector<8x1xf32> to vector<8x256xf32>
    %22 = arith.mulf %17, %21 : vector<8x256xf32>
    %23 = vector.broadcast %2 : vector<1x256xf32> to vector<8x256xf32>
    %24 = arith.mulf %22, %23 : vector<8x256xf32>
    %25 = vector.broadcast %3 : vector<1x256xf32> to vector<8x256xf32>
    %26 = arith.addf %24, %25 : vector<8x256xf32>
    %27 = arith.truncf %26 : vector<8x256xf32> to vector<8x256xbf16>
    %c0_10 = arith.constant 0 : index
    %c0_11 = arith.constant 0 : index
    %28 = vector.load %arg5[%c0_10, %c0_11] : memref<256x32xbf16, #tpu.memory_space<vmem>>, vector<256x32xbf16>
    %cst_12 = arith.constant dense<0.000000e+00> : vector<8x32xf32>
    %29 = tpu.matmul %27, %28, %cst_12 {dimension_numbers = #tpu.dot_dimension_numbers<[1], [0], [0], [1], [0, 0, 1, 1], [], []>} : vector<8x256xbf16>, vector<256x32xbf16>, vector<8x32xf32> -> vector<8x32xf32>
    %c0_13 = arith.constant 0 : index
    %c0_14 = arith.constant 0 : index
    %30 = vector.load %arg6[%c0_13, %c0_14] : memref<1x32xf32, #tpu.memory_space<vmem>>, vector<1x32xf32>
    %31 = vector.broadcast %30 : vector<1x32xf32> to vector<8x32xf32>
    %32 = arith.addf %29, %31 : vector<8x32xf32>
    %c0_15 = arith.constant 0 : index
    %c0_16 = arith.constant 0 : index
    %33 = vector.load %arg7[%c0_15, %c0_16] : memref<1x32xf32, #tpu.memory_space<vmem>>, vector<1x32xf32>
    %c0_17 = arith.constant 0 : index
    %c0_18 = arith.constant 0 : index
    %34 = vector.load %arg8[%c0_17, %c0_18] : memref<1x32xf32, #tpu.memory_space<vmem>>, vector<1x32xf32>
    %cst_19 = arith.constant dense<0.000000e+00> : vector<8xf32>
    %35 = vector.multi_reduction <add>, %32, %cst_19 [1] : vector<8x32xf32> to vector<8xf32>
    %36 = vector.shape_cast %35 : vector<8xf32> to vector<8x1xf32>
    %cst_20 = arith.constant 3.200000e+01 : f32
    %37 = vector.broadcast %cst_20 : f32 to vector<8x1xf32>
    %38 = arith.divf %36, %37 : vector<8x1xf32>
    %39 = vector.broadcast %38 : vector<8x1xf32> to vector<8x32xf32>
    %40 = arith.subf %32, %39 : vector<8x32xf32>
    %41 = arith.mulf %40, %40 : vector<8x32xf32>
    %cst_21 = arith.constant dense<0.000000e+00> : vector<8xf32>
    %42 = vector.multi_reduction <add>, %41, %cst_21 [1] : vector<8x32xf32> to vector<8xf32>
    %43 = vector.shape_cast %42 : vector<8xf32> to vector<8x1xf32>
    %cst_22 = arith.constant 3.200000e+01 : f32
    %44 = vector.broadcast %cst_22 : f32 to vector<8x1xf32>
    %45 = arith.divf %43, %44 : vector<8x1xf32>
    %46 = vector.broadcast %38 : vector<8x1xf32> to vector<8x32xf32>
    %47 = arith.subf %32, %46 : vector<8x32xf32>
    %cst_23 = arith.constant 9.99999974E-6 : f32
    %48 = vector.broadcast %cst_23 : f32 to vector<8x1xf32>
    %49 = arith.addf %45, %48 : vector<8x1xf32>
    %50 = math.rsqrt %49 : vector<8x1xf32>
    %51 = vector.broadcast %50 : vector<8x1xf32> to vector<8x32xf32>
    %52 = arith.mulf %47, %51 : vector<8x32xf32>
    %53 = vector.broadcast %33 : vector<1x32xf32> to vector<8x32xf32>
    %54 = arith.mulf %52, %53 : vector<8x32xf32>
    %55 = vector.broadcast %34 : vector<1x32xf32> to vector<8x32xf32>
    %56 = arith.addf %54, %55 : vector<8x32xf32>
    %57 = tpu.iota {dimensions = array<i32: 0>} : vector<8x1xi32>
    %c1_i32 = arith.constant 1 : i32
    %58 = vector.broadcast %c1_i32 : i32 to vector<8x1xi32>
    %59 = arith.cmpi sge, %57, %58 : vector<8x1xi32>
    %c4_i32 = arith.constant 4 : i32
    %60 = vector.broadcast %c4_i32 : i32 to vector<8x1xi32>
    %61 = arith.cmpi sle, %57, %60 : vector<8x1xi32>
    %62 = arith.andi %59, %61 : vector<8x1xi1>
    %63 = arith.extui %62 : vector<8x1xi1> to vector<8x1xi32>
    %64 = arith.sitofp %63 : vector<8x1xi32> to vector<8x1xf32>
    %c0_24 = arith.constant 0 : index
    %c0_25 = arith.constant 0 : index
    %c0_26 = arith.constant 0 : index
    %65 = vector.load %arg2[%c0_24, %c0_25, %c0_26] : memref<1x8x32xf32, #tpu.memory_space<vmem>>, vector<1x8x32xf32>
    %66 = vector.shape_cast %56 : vector<8x32xf32> to vector<1x8x32xf32>
    %67 = vector.shape_cast %64 : vector<8x1xf32> to vector<1x8x1xf32>
    %68 = vector.broadcast %67 : vector<1x8x1xf32> to vector<1x8x32xf32>
    %69 = arith.mulf %66, %68 : vector<1x8x32xf32>
    %70 = arith.addf %65, %69 : vector<1x8x32xf32>
    %c0_27 = arith.constant 0 : index
    %c0_28 = arith.constant 0 : index
    %c0_29 = arith.constant 0 : index
    %71 = vector.load %arg9[%c0_27, %c0_28, %c0_29] : memref<1x8x32xf32, #tpu.memory_space<vmem>>, vector<1x8x32xf32>
    tpu.vector_store %arg9[%c0_27, %c0_28, %c0_29], %70 {strides = array<i32>} : memref<1x8x32xf32, #tpu.memory_space<vmem>>, vector<1x8x32xf32>,
    return
  }
  func.func @transform_0(%arg0: i32) -> (i32, i32, i32) {
    %c0_i32 = arith.constant 0 : i32
    %c0_i32_0 = arith.constant 0 : i32
    %c0_i32_1 = arith.constant 0 : i32
    return %arg0, %c0_i32, %c0_i32_0 : i32, i32, i32
  }
  func.func @transform_1(%arg0: i32) -> (i32, i32, i32) {
    %c0_i32 = arith.constant 0 : i32
    %c0_i32_0 = arith.constant 0 : i32
    %c0_i32_1 = arith.constant 0 : i32
    %c0_i32_2 = arith.constant 0 : i32
    return %c0_i32, %c0_i32_0, %c0_i32_1 : i32, i32, i32
  }
  func.func @transform_2(%arg0: i32) -> (i32, i32) {
    %c0_i32 = arith.constant 0 : i32
    %c0_i32_0 = arith.constant 0 : i32
    %c0_i32_1 = arith.constant 0 : i32
    return %c0_i32, %c0_i32_0 : i32, i32
  }
  func.func @transform_3(%arg0: i32) -> (i32, i32) {
    %c0_i32 = arith.constant 0 : i32
    %c0_i32_0 = arith.constant 0 : i32
    %c0_i32_1 = arith.constant 0 : i32
    return %c0_i32, %c0_i32_0 : i32, i32
  }
  func.func @transform_4(%arg0: i32) -> (i32, i32) {
    %c0_i32 = arith.constant 0 : i32
    %c0_i32_0 = arith.constant 0 : i32
    %c0_i32_1 = arith.constant 0 : i32
    return %c0_i32, %c0_i32_0 : i32, i32
  }
  func.func @transform_5(%arg0: i32) -> (i32, i32) {
    %c0_i32 = arith.constant 0 : i32
    %c0_i32_0 = arith.constant 0 : i32
    %c0_i32_1 = arith.constant 0 : i32
    return %c0_i32, %c0_i32_0 : i32, i32
  }
  func.func @transform_6(%arg0: i32) -> (i32, i32) {
    %c0_i32 = arith.constant 0 : i32
    %c0_i32_0 = arith.constant 0 : i32
    %c0_i32_1 = arith.constant 0 : i32
    return %c0_i32, %c0_i32_0 : i32, i32
  }
  func.func @transform_7(%arg0: i32) -> (i32, i32) {
    %c0_i32 = arith.constant 0 : i32
    %c0_i32_0 = arith.constant 0 : i32
    %c0_i32_1 = arith.constant 0 : i32
    return %c0_i32, %c0_i32_0 : i32, i32
  }
  func.func @transform_8(%arg0: i32) -> (i32, i32, i32) {
    %c0_i32 = arith.constant 0 : i32
    %c0_i32_0 = arith.constant 0 : i32
    %c0_i32_1 = arith.constant 0 : i32
    return %arg0, %c0_i32, %c0_i32_0 : i32, i32, i32
  }
}

module attributes {stable_mosaic.version = 11 : i64} {
  func.func @transformer_kernel(%arg0: i32, %arg1: memref<1x8x32xf32, #tpu.memory_space<vmem>>, %arg2: memref<2x1x32xf32, #tpu.memory_space<vmem>>, %arg3: memref<2x1x32xf32, #tpu.memory_space<vmem>>, %arg4: memref<2x32x32xbf16, #tpu.memory_space<vmem>>, %arg5: memref<2x32x32xbf16, #tpu.memory_space<vmem>>, %arg6: memref<2x32x32xbf16, #tpu.memory_space<vmem>>, %arg7: memref<2x32x32xbf16, #tpu.memory_space<vmem>>, %arg8: memref<2x1x32xf32, #tpu.memory_space<vmem>>, %arg9: memref<2x1x32xf32, #tpu.memory_space<vmem>>, %arg10: memref<2x1x32xf32, #tpu.memory_space<vmem>>, %arg11: memref<2x32x64xbf16, #tpu.memory_space<vmem>>, %arg12: memref<2x1x64xf32, #tpu.memory_space<vmem>>, %arg13: memref<2x64x32xbf16, #tpu.memory_space<vmem>>, %arg14: memref<2x1x32xf32, #tpu.memory_space<vmem>>, %arg15: memref<1x32xf32, #tpu.memory_space<vmem>>, %arg16: memref<1x32xf32, #tpu.memory_space<vmem>>, %arg17: memref<1x8x32xf32, #tpu.memory_space<vmem>>) attributes {dimension_semantics = [#tpu.dimension_semantics<parallel>], iteration_bounds = array<i64: 2>, scalar_prefetch = 0 : i64, scratch_operands = 0 : i64, tpu.core_type = #tpu.core_type<tc>, window_params = [{transform_indices = @transform_0, window_bounds = array<i64: 1, 8, 32>}, {pipeline_mode = #tpu.pipeline_mode<synchronous>, transform_indices = @transform_1, window_bounds = array<i64: 2, 1, 32>}, {pipeline_mode = #tpu.pipeline_mode<synchronous>, transform_indices = @transform_2, window_bounds = array<i64: 2, 1, 32>}, {pipeline_mode = #tpu.pipeline_mode<synchronous>, transform_indices = @transform_3, window_bounds = array<i64: 2, 32, 32>}, {pipeline_mode = #tpu.pipeline_mode<synchronous>, transform_indices = @transform_4, window_bounds = array<i64: 2, 32, 32>}, {pipeline_mode = #tpu.pipeline_mode<synchronous>, transform_indices = @transform_5, window_bounds = array<i64: 2, 32, 32>}, {pipeline_mode = #tpu.pipeline_mode<synchronous>, transform_indices = @transform_6, window_bounds = array<i64: 2, 32, 32>}, {pipeline_mode = #tpu.pipeline_mode<synchronous>, transform_indices = @transform_7, window_bounds = array<i64: 2, 1, 32>}, {pipeline_mode = #tpu.pipeline_mode<synchronous>, transform_indices = @transform_8, window_bounds = array<i64: 2, 1, 32>}, {pipeline_mode = #tpu.pipeline_mode<synchronous>, transform_indices = @transform_9, window_bounds = array<i64: 2, 1, 32>}, {pipeline_mode = #tpu.pipeline_mode<synchronous>, transform_indices = @transform_10, window_bounds = array<i64: 2, 32, 64>}, {pipeline_mode = #tpu.pipeline_mode<synchronous>, transform_indices = @transform_11, window_bounds = array<i64: 2, 1, 64>}, {pipeline_mode = #tpu.pipeline_mode<synchronous>, transform_indices = @transform_12, window_bounds = array<i64: 2, 64, 32>}, {pipeline_mode = #tpu.pipeline_mode<synchronous>, transform_indices = @transform_13, window_bounds = array<i64: 2, 1, 32>}, {pipeline_mode = #tpu.pipeline_mode<synchronous>, transform_indices = @transform_14, window_bounds = array<i64: 1, 32>}, {pipeline_mode = #tpu.pipeline_mode<synchronous>, transform_indices = @transform_15, window_bounds = array<i64: 1, 32>}, {transform_indices = @transform_16, window_bounds = array<i64: 1, 8, 32>}]} {
    %c0 = arith.constant 0 : index
    %c0_0 = arith.constant 0 : index
    %c0_1 = arith.constant 0 : index
    %0 = vector.load %arg1[%c0, %c0_0, %c0_1] : memref<1x8x32xf32, #tpu.memory_space<vmem>>, vector<1x8x32xf32>
    %1 = vector.shape_cast %0 : vector<1x8x32xf32> to vector<8x32xf32>
    %2 = tpu.iota {dimensions = array<i32: 1>} : vector<1x8xi32>
    %c5_i32 = arith.constant 5 : i32
    %3 = vector.broadcast %c5_i32 : i32 to vector<1x8xi32>
    %4 = arith.cmpi slt, %2, %3 : vector<1x8xi32>
    %cst = arith.constant 0.000000e+00 : f32
    %cst_2 = arith.constant -1.000000e+30 : f32
    %5 = vector.broadcast %cst : f32 to vector<1x8xf32>
    %6 = vector.broadcast %cst_2 : f32 to vector<1x8xf32>
    %7 = arith.select %4, %5, %6 : vector<1x8xi1>, vector<1x8xf32>
    %8 = vector.shape_cast %7 : vector<1x8xf32> to vector<1x1x8xf32>
    %c0_i32 = arith.constant 0 : i32
    %9 = arith.index_cast %c0_i32 : i32 to index
    %c0_3 = arith.constant 0 : index
    %c0_4 = arith.constant 0 : index
    %10 = vector.load %arg2[%9, %c0_3, %c0_4] : memref<2x1x32xf32, #tpu.memory_space<vmem>>, vector<1x1x32xf32>
    %11 = vector.shape_cast %10 : vector<1x1x32xf32> to vector<1x32xf32>
    %12 = arith.index_cast %c0_i32 : i32 to index
    %c0_5 = arith.constant 0 : index
    %c0_6 = arith.constant 0 : index
    %13 = vector.load %arg3[%12, %c0_5, %c0_6] : memref<2x1x32xf32, #tpu.memory_space<vmem>>, vector<1x1x32xf32>
    %14 = vector.shape_cast %13 : vector<1x1x32xf32> to vector<1x32xf32>
    %cst_7 = arith.constant dense<0.000000e+00> : vector<8xf32>
    %15 = vector.multi_reduction <add>, %1, %cst_7 [1] : vector<8x32xf32> to vector<8xf32>
    %16 = vector.shape_cast %15 : vector<8xf32> to vector<8x1xf32>
    %cst_8 = arith.constant 3.200000e+01 : f32
    %17 = vector.broadcast %cst_8 : f32 to vector<8x1xf32>
    %18 = arith.divf %16, %17 : vector<8x1xf32>
    %19 = vector.broadcast %18 : vector<8x1xf32> to vector<8x32xf32>
    %20 = arith.subf %1, %19 : vector<8x32xf32>
    %21 = arith.mulf %20, %20 : vector<8x32xf32>
    %cst_9 = arith.constant dense<0.000000e+00> : vector<8xf32>
    %22 = vector.multi_reduction <add>, %21, %cst_9 [1] : vector<8x32xf32> to vector<8xf32>
    %23 = vector.shape_cast %22 : vector<8xf32> to vector<8x1xf32>
    %cst_10 = arith.constant 3.200000e+01 : f32
    %24 = vector.broadcast %cst_10 : f32 to vector<8x1xf32>
    %25 = arith.divf %23, %24 : vector<8x1xf32>
    %26 = vector.broadcast %18 : vector<8x1xf32> to vector<8x32xf32>
    %27 = arith.subf %1, %26 : vector<8x32xf32>
    %cst_11 = arith.constant 9.99999974E-6 : f32
    %28 = vector.broadcast %cst_11 : f32 to vector<8x1xf32>
    %29 = arith.addf %25, %28 : vector<8x1xf32>
    %30 = math.rsqrt %29 : vector<8x1xf32>
    %31 = vector.broadcast %30 : vector<8x1xf32> to vector<8x32xf32>
    %32 = arith.mulf %27, %31 : vector<8x32xf32>
    %33 = vector.broadcast %11 : vector<1x32xf32> to vector<8x32xf32>
    %34 = arith.mulf %32, %33 : vector<8x32xf32>
    %35 = vector.broadcast %14 : vector<1x32xf32> to vector<8x32xf32>
    %36 = arith.addf %34, %35 : vector<8x32xf32>
    %37 = arith.truncf %36 : vector<8x32xf32> to vector<8x32xbf16>
    %38 = arith.index_cast %c0_i32 : i32 to index
    %c0_12 = arith.constant 0 : index
    %c0_13 = arith.constant 0 : index
    %39 = vector.load %arg4[%38, %c0_12, %c0_13] : memref<2x32x32xbf16, #tpu.memory_space<vmem>>, vector<1x32x32xbf16>
    %40 = vector.shape_cast %39 : vector<1x32x32xbf16> to vector<32x32xbf16>
    %cst_14 = arith.constant dense<0.000000e+00> : vector<8x32xf32>
    %41 = tpu.matmul %37, %40, %cst_14 {dimension_numbers = #tpu.dot_dimension_numbers<[1], [0], [0], [1], [0, 0, 1, 1], [], []>} : vector<8x32xbf16>, vector<32x32xbf16>, vector<8x32xf32> -> vector<8x32xf32>
    %42 = arith.index_cast %c0_i32 : i32 to index
    %c0_15 = arith.constant 0 : index
    %c0_16 = arith.constant 0 : index
    %43 = vector.load %arg5[%42, %c0_15, %c0_16] : memref<2x32x32xbf16, #tpu.memory_space<vmem>>, vector<1x32x32xbf16>
    %44 = vector.shape_cast %43 : vector<1x32x32xbf16> to vector<32x32xbf16>
    %cst_17 = arith.constant dense<0.000000e+00> : vector<8x32xf32>
    %45 = tpu.matmul %37, %44, %cst_17 {dimension_numbers = #tpu.dot_dimension_numbers<[1], [0], [0], [1], [0, 0, 1, 1], [], []>} : vector<8x32xbf16>, vector<32x32xbf16>, vector<8x32xf32> -> vector<8x32xf32>
    %46 = arith.index_cast %c0_i32 : i32 to index
    %c0_18 = arith.constant 0 : index
    %c0_19 = arith.constant 0 : index
    %47 = vector.load %arg6[%46, %c0_18, %c0_19] : memref<2x32x32xbf16, #tpu.memory_space<vmem>>, vector<1x32x32xbf16>
    %48 = vector.shape_cast %47 : vector<1x32x32xbf16> to vector<32x32xbf16>
    %cst_20 = arith.constant dense<0.000000e+00> : vector<8x32xf32>
    %49 = tpu.matmul %37, %48, %cst_20 {dimension_numbers = #tpu.dot_dimension_numbers<[1], [0], [0], [1], [0, 0, 1, 1], [], []>} : vector<8x32xbf16>, vector<32x32xbf16>, vector<8x32xf32> -> vector<8x32xf32>
    %50 = vector.extract_strided_slice %41 {offsets = [0, 0], sizes = [8, 16], strides = [1, 1]} : vector<8x32xf32> to vector<8x16xf32>
    %51 = vector.shape_cast %50 : vector<8x16xf32> to vector<1x8x16xf32>
    %52 = arith.truncf %51 : vector<1x8x16xf32> to vector<1x8x16xbf16>
    %53 = vector.extract_strided_slice %45 {offsets = [0, 0], sizes = [8, 16], strides = [1, 1]} : vector<8x32xf32> to vector<8x16xf32>
    %54 = vector.shape_cast %53 : vector<8x16xf32> to vector<1x8x16xf32>
    %55 = arith.truncf %54 : vector<1x8x16xf32> to vector<1x8x16xbf16>
    %56 = vector.extract_strided_slice %49 {offsets = [0, 0], sizes = [8, 16], strides = [1, 1]} : vector<8x32xf32> to vector<8x16xf32>
    %57 = vector.shape_cast %56 : vector<8x16xf32> to vector<1x8x16xf32>
    %58 = arith.truncf %57 : vector<1x8x16xf32> to vector<1x8x16xbf16>
    "tpu.trace_start"() <{level = 10 : i32, message = "bqd,bkd->bqk"}> : () -> ()
    %cst_21 = arith.constant dense<0.000000e+00> : vector<1x8x8xf32>
    %59 = tpu.matmul %52, %55, %cst_21 {dimension_numbers = #tpu.dot_dimension_numbers<[2], [2], [1], [1], [0, 0, 0, 1, 1, 1], [0], [0]>} : vector<1x8x16xbf16>, vector<1x8x16xbf16>, vector<1x8x8xf32> -> vector<1x8x8xf32>
    "tpu.trace_stop"() : () -> ()
    %60 = vector.broadcast %8 : vector<1x1x8xf32> to vector<1x8x8xf32>
    %61 = arith.addf %59, %60 : vector<1x8x8xf32>
    %cst_22 = arith.constant dense<0xFF800000> : vector<1x8xf32>
    %62 = vector.multi_reduction <maximumf>, %61, %cst_22 [2] : vector<1x8x8xf32> to vector<1x8xf32>
    %63 = vector.shape_cast %62 : vector<1x8xf32> to vector<1x8x1xf32>
    %64 = vector.broadcast %63 : vector<1x8x1xf32> to vector<1x8x8xf32>
    %65 = arith.subf %61, %64 : vector<1x8x8xf32>
    %66 = math.exp %65 : vector<1x8x8xf32>
    %cst_23 = arith.constant dense<0.000000e+00> : vector<1x8xf32>
    %67 = vector.multi_reduction <add>, %66, %cst_23 [2] : vector<1x8x8xf32> to vector<1x8xf32>
    %68 = vector.shape_cast %67 : vector<1x8xf32> to vector<1x8x1xf32>
    %69 = vector.broadcast %68 : vector<1x8x1xf32> to vector<1x8x8xf32>
    %70 = arith.divf %66, %69 : vector<1x8x8xf32>
    %71 = arith.truncf %70 : vector<1x8x8xf32> to vector<1x8x8xbf16>
    "tpu.trace_start"() <{level = 10 : i32, message = "bqk,bkd->bqd"}> : () -> ()
    %cst_24 = arith.constant dense<0.000000e+00> : vector<1x8x16xf32>
    %72 = tpu.matmul %71, %58, %cst_24 {dimension_numbers = #tpu.dot_dimension_numbers<[2], [1], [1], [2], [0, 0, 0, 1, 1, 2], [0], [0]>} : vector<1x8x8xbf16>, vector<1x8x16xbf16>, vector<1x8x16xf32> -> vector<1x8x16xf32>
    "tpu.trace_stop"() : () -> ()
    %73 = vector.shape_cast %72 : vector<1x8x16xf32> to vector<8x16xf32>
    %74 = vector.extract_strided_slice %41 {offsets = [0, 16], sizes = [8, 16], strides = [1, 1]} : vector<8x32xf32> to vector<8x16xf32>
    %75 = vector.shape_cast %74 : vector<8x16xf32> to vector<1x8x16xf32>
    %76 = arith.truncf %75 : vector<1x8x16xf32> to vector<1x8x16xbf16>
    %77 = vector.extract_strided_slice %45 {offsets = [0, 16], sizes = [8, 16], strides = [1, 1]} : vector<8x32xf32> to vector<8x16xf32>
    %78 = vector.shape_cast %77 : vector<8x16xf32> to vector<1x8x16xf32>
    %79 = arith.truncf %78 : vector<1x8x16xf32> to vector<1x8x16xbf16>
    %80 = vector.extract_strided_slice %49 {offsets = [0, 16], sizes = [8, 16], strides = [1, 1]} : vector<8x32xf32> to vector<8x16xf32>
    %81 = vector.shape_cast %80 : vector<8x16xf32> to vector<1x8x16xf32>
    %82 = arith.truncf %81 : vector<1x8x16xf32> to vector<1x8x16xbf16>
    "tpu.trace_start"() <{level = 10 : i32, message = "bqd,bkd->bqk"}> : () -> ()
    %cst_25 = arith.constant dense<0.000000e+00> : vector<1x8x8xf32>
    %83 = tpu.matmul %76, %79, %cst_25 {dimension_numbers = #tpu.dot_dimension_numbers<[2], [2], [1], [1], [0, 0, 0, 1, 1, 1], [0], [0]>} : vector<1x8x16xbf16>, vector<1x8x16xbf16>, vector<1x8x8xf32> -> vector<1x8x8xf32>
    "tpu.trace_stop"() : () -> ()
    %84 = vector.broadcast %8 : vector<1x1x8xf32> to vector<1x8x8xf32>
    %85 = arith.addf %83, %84 : vector<1x8x8xf32>
    %cst_26 = arith.constant dense<0xFF800000> : vector<1x8xf32>
    %86 = vector.multi_reduction <maximumf>, %85, %cst_26 [2] : vector<1x8x8xf32> to vector<1x8xf32>
    %87 = vector.shape_cast %86 : vector<1x8xf32> to vector<1x8x1xf32>
    %88 = vector.broadcast %87 : vector<1x8x1xf32> to vector<1x8x8xf32>
    %89 = arith.subf %85, %88 : vector<1x8x8xf32>
    %90 = math.exp %89 : vector<1x8x8xf32>
    %cst_27 = arith.constant dense<0.000000e+00> : vector<1x8xf32>
    %91 = vector.multi_reduction <add>, %90, %cst_27 [2] : vector<1x8x8xf32> to vector<1x8xf32>
    %92 = vector.shape_cast %91 : vector<1x8xf32> to vector<1x8x1xf32>
    %93 = vector.broadcast %92 : vector<1x8x1xf32> to vector<1x8x8xf32>
    %94 = arith.divf %90, %93 : vector<1x8x8xf32>
    %95 = arith.truncf %94 : vector<1x8x8xf32> to vector<1x8x8xbf16>
    "tpu.trace_start"() <{level = 10 : i32, message = "bqk,bkd->bqd"}> : () -> ()
    %cst_28 = arith.constant dense<0.000000e+00> : vector<1x8x16xf32>
    %96 = tpu.matmul %95, %82, %cst_28 {dimension_numbers = #tpu.dot_dimension_numbers<[2], [1], [1], [2], [0, 0, 0, 1, 1, 2], [0], [0]>} : vector<1x8x8xbf16>, vector<1x8x16xbf16>, vector<1x8x16xf32> -> vector<1x8x16xf32>
    "tpu.trace_stop"() : () -> ()
    %97 = vector.shape_cast %96 : vector<1x8x16xf32> to vector<8x16xf32>
    %98 = tpu.concatenate %73, %97 in 1 : vector<8x16xf32>, vector<8x16xf32> -> vector<8x32xf32>
    %99 = arith.truncf %98 : vector<8x32xf32> to vector<8x32xbf16>
    %100 = arith.index_cast %c0_i32 : i32 to index
    %c0_29 = arith.constant 0 : index
    %c0_30 = arith.constant 0 : index
    %101 = vector.load %arg7[%100, %c0_29, %c0_30] : memref<2x32x32xbf16, #tpu.memory_space<vmem>>, vector<1x32x32xbf16>
    %102 = vector.shape_cast %101 : vector<1x32x32xbf16> to vector<32x32xbf16>
    %cst_31 = arith.constant dense<0.000000e+00> : vector<8x32xf32>
    %103 = tpu.matmul %99, %102, %cst_31 {dimension_numbers = #tpu.dot_dimension_numbers<[1], [0], [0], [1], [0, 0, 1, 1], [], []>} : vector<8x32xbf16>, vector<32x32xbf16>, vector<8x32xf32> -> vector<8x32xf32>
    %104 = arith.addf %1, %103 : vector<8x32xf32>
    %105 = arith.index_cast %c0_i32 : i32 to index
    %c0_32 = arith.constant 0 : index
    %c0_33 = arith.constant 0 : index
    %106 = vector.load %arg8[%105, %c0_32, %c0_33] : memref<2x1x32xf32, #tpu.memory_space<vmem>>, vector<1x1x32xf32>
    %107 = vector.shape_cast %106 : vector<1x1x32xf32> to vector<1x32xf32>
    %108 = vector.broadcast %107 : vector<1x32xf32> to vector<8x32xf32>
    %109 = arith.addf %104, %108 : vector<8x32xf32>
    %110 = arith.index_cast %c0_i32 : i32 to index
    %c0_34 = arith.constant 0 : index
    %c0_35 = arith.constant 0 : index
    %111 = vector.load %arg9[%110, %c0_34, %c0_35] : memref<2x1x32xf32, #tpu.memory_space<vmem>>, vector<1x1x32xf32>
    %112 = vector.shape_cast %111 : vector<1x1x32xf32> to vector<1x32xf32>
    %113 = arith.index_cast %c0_i32 : i32 to index
    %c0_36 = arith.constant 0 : index
    %c0_37 = arith.constant 0 : index
    %114 = vector.load %arg10[%113, %c0_36, %c0_37] : memref<2x1x32xf32, #tpu.memory_space<vmem>>, vector<1x1x32xf32>
    %115 = vector.shape_cast %114 : vector<1x1x32xf32> to vector<1x32xf32>
    %cst_38 = arith.constant dense<0.000000e+00> : vector<8xf32>
    %116 = vector.multi_reduction <add>, %109, %cst_38 [1] : vector<8x32xf32> to vector<8xf32>
    %117 = vector.shape_cast %116 : vector<8xf32> to vector<8x1xf32>
    %cst_39 = arith.constant 3.200000e+01 : f32
    %118 = vector.broadcast %cst_39 : f32 to vector<8x1xf32>
    %119 = arith.divf %117, %118 : vector<8x1xf32>
    %120 = vector.broadcast %119 : vector<8x1xf32> to vector<8x32xf32>
    %121 = arith.subf %109, %120 : vector<8x32xf32>
    %122 = arith.mulf %121, %121 : vector<8x32xf32>
    %cst_40 = arith.constant dense<0.000000e+00> : vector<8xf32>
    %123 = vector.multi_reduction <add>, %122, %cst_40 [1] : vector<8x32xf32> to vector<8xf32>
    %124 = vector.shape_cast %123 : vector<8xf32> to vector<8x1xf32>
    %cst_41 = arith.constant 3.200000e+01 : f32
    %125 = vector.broadcast %cst_41 : f32 to vector<8x1xf32>
    %126 = arith.divf %124, %125 : vector<8x1xf32>
    %127 = vector.broadcast %119 : vector<8x1xf32> to vector<8x32xf32>
    %128 = arith.subf %109, %127 : vector<8x32xf32>
    %cst_42 = arith.constant 9.99999974E-6 : f32
    %129 = vector.broadcast %cst_42 : f32 to vector<8x1xf32>
    %130 = arith.addf %126, %129 : vector<8x1xf32>
    %131 = math.rsqrt %130 : vector<8x1xf32>
    %132 = vector.broadcast %131 : vector<8x1xf32> to vector<8x32xf32>
    %133 = arith.mulf %128, %132 : vector<8x32xf32>
    %134 = vector.broadcast %112 : vector<1x32xf32> to vector<8x32xf32>
    %135 = arith.mulf %133, %134 : vector<8x32xf32>
    %136 = vector.broadcast %115 : vector<1x32xf32> to vector<8x32xf32>
    %137 = arith.addf %135, %136 : vector<8x32xf32>
    %138 = arith.truncf %137 : vector<8x32xf32> to vector<8x32xbf16>
    %139 = arith.index_cast %c0_i32 : i32 to index
    %c0_43 = arith.constant 0 : index
    %c0_44 = arith.constant 0 : index
    %140 = vector.load %arg11[%139, %c0_43, %c0_44] : memref<2x32x64xbf16, #tpu.memory_space<vmem>>, vector<1x32x64xbf16>
    %141 = vector.shape_cast %140 : vector<1x32x64xbf16> to vector<32x64xbf16>
    %cst_45 = arith.constant dense<0.000000e+00> : vector<8x64xf32>
    %142 = tpu.matmul %138, %141, %cst_45 {dimension_numbers = #tpu.dot_dimension_numbers<[1], [0], [0], [1], [0, 0, 1, 1], [], []>} : vector<8x32xbf16>, vector<32x64xbf16>, vector<8x64xf32> -> vector<8x64xf32>
    %143 = arith.index_cast %c0_i32 : i32 to index
    %c0_46 = arith.constant 0 : index
    %c0_47 = arith.constant 0 : index
    %144 = vector.load %arg12[%143, %c0_46, %c0_47] : memref<2x1x64xf32, #tpu.memory_space<vmem>>, vector<1x1x64xf32>
    %145 = vector.shape_cast %144 : vector<1x1x64xf32> to vector<1x64xf32>
    %146 = vector.broadcast %145 : vector<1x64xf32> to vector<8x64xf32>
    %147 = arith.addf %142, %146 : vector<8x64xf32>
    %148 = arith.mulf %147, %147 : vector<8x64xf32>
    %149 = arith.mulf %147, %148 : vector<8x64xf32>
    %cst_48 = arith.constant 4.471500e-02 : f32
    %150 = vector.broadcast %cst_48 : f32 to vector<8x64xf32>
    %151 = arith.mulf %150, %149 : vector<8x64xf32>
    %152 = arith.addf %147, %151 : vector<8x64xf32>
    %cst_49 = arith.constant 0.797884583 : f32
    %153 = vector.broadcast %cst_49 : f32 to vector<8x64xf32>
    %154 = arith.mulf %153, %152 : vector<8x64xf32>
    %155 = math.tanh %154 : vector<8x64xf32>
    %cst_50 = arith.constant 1.000000e+00 : f32
    %156 = vector.broadcast %cst_50 : f32 to vector<8x64xf32>
    %157 = arith.addf %156, %155 : vector<8x64xf32>
    %cst_51 = arith.constant 5.000000e-01 : f32
    %158 = vector.broadcast %cst_51 : f32 to vector<8x64xf32>
    %159 = arith.mulf %158, %157 : vector<8x64xf32>
    %160 = arith.mulf %147, %159 : vector<8x64xf32>
    %161 = arith.truncf %160 : vector<8x64xf32> to vector<8x64xbf16>
    %162 = arith.index_cast %c0_i32 : i32 to index
    %c0_52 = arith.constant 0 : index
    %c0_53 = arith.constant 0 : index
    %163 = vector.load %arg13[%162, %c0_52, %c0_53] : memref<2x64x32xbf16, #tpu.memory_space<vmem>>, vector<1x64x32xbf16>
    %164 = vector.shape_cast %163 : vector<1x64x32xbf16> to vector<64x32xbf16>
    %cst_54 = arith.constant dense<0.000000e+00> : vector<8x32xf32>
    %165 = tpu.matmul %161, %164, %cst_54 {dimension_numbers = #tpu.dot_dimension_numbers<[1], [0], [0], [1], [0, 0, 1, 1], [], []>} : vector<8x64xbf16>, vector<64x32xbf16>, vector<8x32xf32> -> vector<8x32xf32>
    %166 = arith.addf %109, %165 : vector<8x32xf32>
    %167 = arith.index_cast %c0_i32 : i32 to index
    %c0_55 = arith.constant 0 : index
    %c0_56 = arith.constant 0 : index
    %168 = vector.load %arg14[%167, %c0_55, %c0_56] : memref<2x1x32xf32, #tpu.memory_space<vmem>>, vector<1x1x32xf32>
    %169 = vector.shape_cast %168 : vector<1x1x32xf32> to vector<1x32xf32>
    %170 = vector.broadcast %169 : vector<1x32xf32> to vector<8x32xf32>
    %171 = arith.addf %166, %170 : vector<8x32xf32>
    %c1_i32 = arith.constant 1 : i32
    %172 = arith.index_cast %c1_i32 : i32 to index
    %c0_57 = arith.constant 0 : index
    %c0_58 = arith.constant 0 : index
    %173 = vector.load %arg2[%172, %c0_57, %c0_58] : memref<2x1x32xf32, #tpu.memory_space<vmem>>, vector<1x1x32xf32>
    %174 = vector.shape_cast %173 : vector<1x1x32xf32> to vector<1x32xf32>
    %175 = arith.index_cast %c1_i32 : i32 to index
    %c0_59 = arith.constant 0 : index
    %c0_60 = arith.constant 0 : index
    %176 = vector.load %arg3[%175, %c0_59, %c0_60] : memref<2x1x32xf32, #tpu.memory_space<vmem>>, vector<1x1x32xf32>
    %177 = vector.shape_cast %176 : vector<1x1x32xf32> to vector<1x32xf32>
    %cst_61 = arith.constant dense<0.000000e+00> : vector<8xf32>
    %178 = vector.multi_reduction <add>, %171, %cst_61 [1] : vector<8x32xf32> to vector<8xf32>
    %179 = vector.shape_cast %178 : vector<8xf32> to vector<8x1xf32>
    %cst_62 = arith.constant 3.200000e+01 : f32
    %180 = vector.broadcast %cst_62 : f32 to vector<8x1xf32>
    %181 = arith.divf %179, %180 : vector<8x1xf32>
    %182 = vector.broadcast %181 : vector<8x1xf32> to vector<8x32xf32>
    %183 = arith.subf %171, %182 : vector<8x32xf32>
    %184 = arith.mulf %183, %183 : vector<8x32xf32>
    %cst_63 = arith.constant dense<0.000000e+00> : vector<8xf32>
    %185 = vector.multi_reduction <add>, %184, %cst_63 [1] : vector<8x32xf32> to vector<8xf32>
    %186 = vector.shape_cast %185 : vector<8xf32> to vector<8x1xf32>
    %cst_64 = arith.constant 3.200000e+01 : f32
    %187 = vector.broadcast %cst_64 : f32 to vector<8x1xf32>
    %188 = arith.divf %186, %187 : vector<8x1xf32>
    %189 = vector.broadcast %181 : vector<8x1xf32> to vector<8x32xf32>
    %190 = arith.subf %171, %189 : vector<8x32xf32>
    %cst_65 = arith.constant 9.99999974E-6 : f32
    %191 = vector.broadcast %cst_65 : f32 to vector<8x1xf32>
    %192 = arith.addf %188, %191 : vector<8x1xf32>
    %193 = math.rsqrt %192 : vector<8x1xf32>
    %194 = vector.broadcast %193 : vector<8x1xf32> to vector<8x32xf32>
    %195 = arith.mulf %190, %194 : vector<8x32xf32>
    %196 = vector.broadcast %174 : vector<1x32xf32> to vector<8x32xf32>
    %197 = arith.mulf %195, %196 : vector<8x32xf32>
    %198 = vector.broadcast %177 : vector<1x32xf32> to vector<8x32xf32>
    %199 = arith.addf %197, %198 : vector<8x32xf32>
    %200 = arith.truncf %199 : vector<8x32xf32> to vector<8x32xbf16>
    %201 = arith.index_cast %c1_i32 : i32 to index
    %c0_66 = arith.constant 0 : index
    %c0_67 = arith.constant 0 : index
    %202 = vector.load %arg4[%201, %c0_66, %c0_67] : memref<2x32x32xbf16, #tpu.memory_space<vmem>>, vector<1x32x32xbf16>
    %203 = vector.shape_cast %202 : vector<1x32x32xbf16> to vector<32x32xbf16>
    %cst_68 = arith.constant dense<0.000000e+00> : vector<8x32xf32>
    %204 = tpu.matmul %200, %203, %cst_68 {dimension_numbers = #tpu.dot_dimension_numbers<[1], [0], [0], [1], [0, 0, 1, 1], [], []>} : vector<8x32xbf16>, vector<32x32xbf16>, vector<8x32xf32> -> vector<8x32xf32>
    %205 = arith.index_cast %c1_i32 : i32 to index
    %c0_69 = arith.constant 0 : index
    %c0_70 = arith.constant 0 : index
    %206 = vector.load %arg5[%205, %c0_69, %c0_70] : memref<2x32x32xbf16, #tpu.memory_space<vmem>>, vector<1x32x32xbf16>
    %207 = vector.shape_cast %206 : vector<1x32x32xbf16> to vector<32x32xbf16>
    %cst_71 = arith.constant dense<0.000000e+00> : vector<8x32xf32>
    %208 = tpu.matmul %200, %207, %cst_71 {dimension_numbers = #tpu.dot_dimension_numbers<[1], [0], [0], [1], [0, 0, 1, 1], [], []>} : vector<8x32xbf16>, vector<32x32xbf16>, vector<8x32xf32> -> vector<8x32xf32>
    %209 = arith.index_cast %c1_i32 : i32 to index
    %c0_72 = arith.constant 0 : index
    %c0_73 = arith.constant 0 : index
    %210 = vector.load %arg6[%209, %c0_72, %c0_73] : memref<2x32x32xbf16, #tpu.memory_space<vmem>>, vector<1x32x32xbf16>
    %211 = vector.shape_cast %210 : vector<1x32x32xbf16> to vector<32x32xbf16>
    %cst_74 = arith.constant dense<0.000000e+00> : vector<8x32xf32>
    %212 = tpu.matmul %200, %211, %cst_74 {dimension_numbers = #tpu.dot_dimension_numbers<[1], [0], [0], [1], [0, 0, 1, 1], [], []>} : vector<8x32xbf16>, vector<32x32xbf16>, vector<8x32xf32> -> vector<8x32xf32>
    %213 = vector.extract_strided_slice %204 {offsets = [0, 0], sizes = [8, 16], strides = [1, 1]} : vector<8x32xf32> to vector<8x16xf32>
    %214 = vector.shape_cast %213 : vector<8x16xf32> to vector<1x8x16xf32>
    %215 = arith.truncf %214 : vector<1x8x16xf32> to vector<1x8x16xbf16>
    %216 = vector.extract_strided_slice %208 {offsets = [0, 0], sizes = [8, 16], strides = [1, 1]} : vector<8x32xf32> to vector<8x16xf32>
    %217 = vector.shape_cast %216 : vector<8x16xf32> to vector<1x8x16xf32>
    %218 = arith.truncf %217 : vector<1x8x16xf32> to vector<1x8x16xbf16>
    %219 = vector.extract_strided_slice %212 {offsets = [0, 0], sizes = [8, 16], strides = [1, 1]} : vector<8x32xf32> to vector<8x16xf32>
    %220 = vector.shape_cast %219 : vector<8x16xf32> to vector<1x8x16xf32>
    %221 = arith.truncf %220 : vector<1x8x16xf32> to vector<1x8x16xbf16>
    "tpu.trace_start"() <{level = 10 : i32, message = "bqd,bkd->bqk"}> : () -> ()
    %cst_75 = arith.constant dense<0.000000e+00> : vector<1x8x8xf32>
    %222 = tpu.matmul %215, %218, %cst_75 {dimension_numbers = #tpu.dot_dimension_numbers<[2], [2], [1], [1], [0, 0, 0, 1, 1, 1], [0], [0]>} : vector<1x8x16xbf16>, vector<1x8x16xbf16>, vector<1x8x8xf32> -> vector<1x8x8xf32>
    "tpu.trace_stop"() : () -> ()
    %223 = vector.broadcast %8 : vector<1x1x8xf32> to vector<1x8x8xf32>
    %224 = arith.addf %222, %223 : vector<1x8x8xf32>
    %cst_76 = arith.constant dense<0xFF800000> : vector<1x8xf32>
    %225 = vector.multi_reduction <maximumf>, %224, %cst_76 [2] : vector<1x8x8xf32> to vector<1x8xf32>
    %226 = vector.shape_cast %225 : vector<1x8xf32> to vector<1x8x1xf32>
    %227 = vector.broadcast %226 : vector<1x8x1xf32> to vector<1x8x8xf32>
    %228 = arith.subf %224, %227 : vector<1x8x8xf32>
    %229 = math.exp %228 : vector<1x8x8xf32>
    %cst_77 = arith.constant dense<0.000000e+00> : vector<1x8xf32>
    %230 = vector.multi_reduction <add>, %229, %cst_77 [2] : vector<1x8x8xf32> to vector<1x8xf32>
    %231 = vector.shape_cast %230 : vector<1x8xf32> to vector<1x8x1xf32>
    %232 = vector.broadcast %231 : vector<1x8x1xf32> to vector<1x8x8xf32>
    %233 = arith.divf %229, %232 : vector<1x8x8xf32>
    %234 = arith.truncf %233 : vector<1x8x8xf32> to vector<1x8x8xbf16>
    "tpu.trace_start"() <{level = 10 : i32, message = "bqk,bkd->bqd"}> : () -> ()
    %cst_78 = arith.constant dense<0.000000e+00> : vector<1x8x16xf32>
    %235 = tpu.matmul %234, %221, %cst_78 {dimension_numbers = #tpu.dot_dimension_numbers<[2], [1], [1], [2], [0, 0, 0, 1, 1, 2], [0], [0]>} : vector<1x8x8xbf16>, vector<1x8x16xbf16>, vector<1x8x16xf32> -> vector<1x8x16xf32>
    "tpu.trace_stop"() : () -> ()
    %236 = vector.shape_cast %235 : vector<1x8x16xf32> to vector<8x16xf32>
    %237 = vector.extract_strided_slice %204 {offsets = [0, 16], sizes = [8, 16], strides = [1, 1]} : vector<8x32xf32> to vector<8x16xf32>
    %238 = vector.shape_cast %237 : vector<8x16xf32> to vector<1x8x16xf32>
    %239 = arith.truncf %238 : vector<1x8x16xf32> to vector<1x8x16xbf16>
    %240 = vector.extract_strided_slice %208 {offsets = [0, 16], sizes = [8, 16], strides = [1, 1]} : vector<8x32xf32> to vector<8x16xf32>
    %241 = vector.shape_cast %240 : vector<8x16xf32> to vector<1x8x16xf32>
    %242 = arith.truncf %241 : vector<1x8x16xf32> to vector<1x8x16xbf16>
    %243 = vector.extract_strided_slice %212 {offsets = [0, 16], sizes = [8, 16], strides = [1, 1]} : vector<8x32xf32> to vector<8x16xf32>
    %244 = vector.shape_cast %243 : vector<8x16xf32> to vector<1x8x16xf32>
    %245 = arith.truncf %244 : vector<1x8x16xf32> to vector<1x8x16xbf16>
    "tpu.trace_start"() <{level = 10 : i32, message = "bqd,bkd->bqk"}> : () -> ()
    %cst_79 = arith.constant dense<0.000000e+00> : vector<1x8x8xf32>
    %246 = tpu.matmul %239, %242, %cst_79 {dimension_numbers = #tpu.dot_dimension_numbers<[2], [2], [1], [1], [0, 0, 0, 1, 1, 1], [0], [0]>} : vector<1x8x16xbf16>, vector<1x8x16xbf16>, vector<1x8x8xf32> -> vector<1x8x8xf32>
    "tpu.trace_stop"() : () -> ()
    %247 = vector.broadcast %8 : vector<1x1x8xf32> to vector<1x8x8xf32>
    %248 = arith.addf %246, %247 : vector<1x8x8xf32>
    %cst_80 = arith.constant dense<0xFF800000> : vector<1x8xf32>
    %249 = vector.multi_reduction <maximumf>, %248, %cst_80 [2] : vector<1x8x8xf32> to vector<1x8xf32>
    %250 = vector.shape_cast %249 : vector<1x8xf32> to vector<1x8x1xf32>
    %251 = vector.broadcast %250 : vector<1x8x1xf32> to vector<1x8x8xf32>
    %252 = arith.subf %248, %251 : vector<1x8x8xf32>
    %253 = math.exp %252 : vector<1x8x8xf32>
    %cst_81 = arith.constant dense<0.000000e+00> : vector<1x8xf32>
    %254 = vector.multi_reduction <add>, %253, %cst_81 [2] : vector<1x8x8xf32> to vector<1x8xf32>
    %255 = vector.shape_cast %254 : vector<1x8xf32> to vector<1x8x1xf32>
    %256 = vector.broadcast %255 : vector<1x8x1xf32> to vector<1x8x8xf32>
    %257 = arith.divf %253, %256 : vector<1x8x8xf32>
    %258 = arith.truncf %257 : vector<1x8x8xf32> to vector<1x8x8xbf16>
    "tpu.trace_start"() <{level = 10 : i32, message = "bqk,bkd->bqd"}> : () -> ()
    %cst_82 = arith.constant dense<0.000000e+00> : vector<1x8x16xf32>
    %259 = tpu.matmul %258, %245, %cst_82 {dimension_numbers = #tpu.dot_dimension_numbers<[2], [1], [1], [2], [0, 0, 0, 1, 1, 2], [0], [0]>} : vector<1x8x8xbf16>, vector<1x8x16xbf16>, vector<1x8x16xf32> -> vector<1x8x16xf32>
    "tpu.trace_stop"() : () -> ()
    %260 = vector.shape_cast %259 : vector<1x8x16xf32> to vector<8x16xf32>
    %261 = tpu.concatenate %236, %260 in 1 : vector<8x16xf32>, vector<8x16xf32> -> vector<8x32xf32>
    %262 = arith.truncf %261 : vector<8x32xf32> to vector<8x32xbf16>
    %263 = arith.index_cast %c1_i32 : i32 to index
    %c0_83 = arith.constant 0 : index
    %c0_84 = arith.constant 0 : index
    %264 = vector.load %arg7[%263, %c0_83, %c0_84] : memref<2x32x32xbf16, #tpu.memory_space<vmem>>, vector<1x32x32xbf16>
    %265 = vector.shape_cast %264 : vector<1x32x32xbf16> to vector<32x32xbf16>
    %cst_85 = arith.constant dense<0.000000e+00> : vector<8x32xf32>
    %266 = tpu.matmul %262, %265, %cst_85 {dimension_numbers = #tpu.dot_dimension_numbers<[1], [0], [0], [1], [0, 0, 1, 1], [], []>} : vector<8x32xbf16>, vector<32x32xbf16>, vector<8x32xf32> -> vector<8x32xf32>
    %267 = arith.addf %171, %266 : vector<8x32xf32>
    %268 = arith.index_cast %c1_i32 : i32 to index
    %c0_86 = arith.constant 0 : index
    %c0_87 = arith.constant 0 : index
    %269 = vector.load %arg8[%268, %c0_86, %c0_87] : memref<2x1x32xf32, #tpu.memory_space<vmem>>, vector<1x1x32xf32>
    %270 = vector.shape_cast %269 : vector<1x1x32xf32> to vector<1x32xf32>
    %271 = vector.broadcast %270 : vector<1x32xf32> to vector<8x32xf32>
    %272 = arith.addf %267, %271 : vector<8x32xf32>
    %273 = arith.index_cast %c1_i32 : i32 to index
    %c0_88 = arith.constant 0 : index
    %c0_89 = arith.constant 0 : index
    %274 = vector.load %arg9[%273, %c0_88, %c0_89] : memref<2x1x32xf32, #tpu.memory_space<vmem>>, vector<1x1x32xf32>
    %275 = vector.shape_cast %274 : vector<1x1x32xf32> to vector<1x32xf32>
    %276 = arith.index_cast %c1_i32 : i32 to index
    %c0_90 = arith.constant 0 : index
    %c0_91 = arith.constant 0 : index
    %277 = vector.load %arg10[%276, %c0_90, %c0_91] : memref<2x1x32xf32, #tpu.memory_space<vmem>>, vector<1x1x32xf32>
    %278 = vector.shape_cast %277 : vector<1x1x32xf32> to vector<1x32xf32>
    %cst_92 = arith.constant dense<0.000000e+00> : vector<8xf32>
    %279 = vector.multi_reduction <add>, %272, %cst_92 [1] : vector<8x32xf32> to vector<8xf32>
    %280 = vector.shape_cast %279 : vector<8xf32> to vector<8x1xf32>
    %cst_93 = arith.constant 3.200000e+01 : f32
    %281 = vector.broadcast %cst_93 : f32 to vector<8x1xf32>
    %282 = arith.divf %280, %281 : vector<8x1xf32>
    %283 = vector.broadcast %282 : vector<8x1xf32> to vector<8x32xf32>
    %284 = arith.subf %272, %283 : vector<8x32xf32>
    %285 = arith.mulf %284, %284 : vector<8x32xf32>
    %cst_94 = arith.constant dense<0.000000e+00> : vector<8xf32>
    %286 = vector.multi_reduction <add>, %285, %cst_94 [1] : vector<8x32xf32> to vector<8xf32>
    %287 = vector.shape_cast %286 : vector<8xf32> to vector<8x1xf32>
    %cst_95 = arith.constant 3.200000e+01 : f32
    %288 = vector.broadcast %cst_95 : f32 to vector<8x1xf32>
    %289 = arith.divf %287, %288 : vector<8x1xf32>
    %290 = vector.broadcast %282 : vector<8x1xf32> to vector<8x32xf32>
    %291 = arith.subf %272, %290 : vector<8x32xf32>
    %cst_96 = arith.constant 9.99999974E-6 : f32
    %292 = vector.broadcast %cst_96 : f32 to vector<8x1xf32>
    %293 = arith.addf %289, %292 : vector<8x1xf32>
    %294 = math.rsqrt %293 : vector<8x1xf32>
    %295 = vector.broadcast %294 : vector<8x1xf32> to vector<8x32xf32>
    %296 = arith.mulf %291, %295 : vector<8x32xf32>
    %297 = vector.broadcast %275 : vector<1x32xf32> to vector<8x32xf32>
    %298 = arith.mulf %296, %297 : vector<8x32xf32>
    %299 = vector.broadcast %278 : vector<1x32xf32> to vector<8x32xf32>
    %300 = arith.addf %298, %299 : vector<8x32xf32>
    %301 = arith.truncf %300 : vector<8x32xf32> to vector<8x32xbf16>
    %302 = arith.index_cast %c1_i32 : i32 to index
    %c0_97 = arith.constant 0 : index
    %c0_98 = arith.constant 0 : index
    %303 = vector.load %arg11[%302, %c0_97, %c0_98] : memref<2x32x64xbf16, #tpu.memory_space<vmem>>, vector<1x32x64xbf16>
    %304 = vector.shape_cast %303 : vector<1x32x64xbf16> to vector<32x64xbf16>
    %cst_99 = arith.constant dense<0.000000e+00> : vector<8x64xf32>
    %305 = tpu.matmul %301, %304, %cst_99 {dimension_numbers = #tpu.dot_dimension_numbers<[1], [0], [0], [1], [0, 0, 1, 1], [], []>} : vector<8x32xbf16>, vector<32x64xbf16>, vector<8x64xf32> -> vector<8x64xf32>
    %306 = arith.index_cast %c1_i32 : i32 to index
    %c0_100 = arith.constant 0 : index
    %c0_101 = arith.constant 0 : index
    %307 = vector.load %arg12[%306, %c0_100, %c0_101] : memref<2x1x64xf32, #tpu.memory_space<vmem>>, vector<1x1x64xf32>
    %308 = vector.shape_cast %307 : vector<1x1x64xf32> to vector<1x64xf32>
    %309 = vector.broadcast %308 : vector<1x64xf32> to vector<8x64xf32>
    %310 = arith.addf %305, %309 : vector<8x64xf32>
    %311 = arith.mulf %310, %310 : vector<8x64xf32>
    %312 = arith.mulf %310, %311 : vector<8x64xf32>
    %cst_102 = arith.constant 4.471500e-02 : f32
    %313 = vector.broadcast %cst_102 : f32 to vector<8x64xf32>
    %314 = arith.mulf %313, %312 : vector<8x64xf32>
    %315 = arith.addf %310, %314 : vector<8x64xf32>
    %cst_103 = arith.constant 0.797884583 : f32
    %316 = vector.broadcast %cst_103 : f32 to vector<8x64xf32>
    %317 = arith.mulf %316, %315 : vector<8x64xf32>
    %318 = math.tanh %317 : vector<8x64xf32>
    %cst_104 = arith.constant 1.000000e+00 : f32
    %319 = vector.broadcast %cst_104 : f32 to vector<8x64xf32>
    %320 = arith.addf %319, %318 : vector<8x64xf32>
    %cst_105 = arith.constant 5.000000e-01 : f32
    %321 = vector.broadcast %cst_105 : f32 to vector<8x64xf32>
    %322 = arith.mulf %321, %320 : vector<8x64xf32>
    %323 = arith.mulf %310, %322 : vector<8x64xf32>
    %324 = arith.truncf %323 : vector<8x64xf32> to vector<8x64xbf16>
    %325 = arith.index_cast %c1_i32 : i32 to index
    %c0_106 = arith.constant 0 : index
    %c0_107 = arith.constant 0 : index
    %326 = vector.load %arg13[%325, %c0_106, %c0_107] : memref<2x64x32xbf16, #tpu.memory_space<vmem>>, vector<1x64x32xbf16>
    %327 = vector.shape_cast %326 : vector<1x64x32xbf16> to vector<64x32xbf16>
    %cst_108 = arith.constant dense<0.000000e+00> : vector<8x32xf32>
    %328 = tpu.matmul %324, %327, %cst_108 {dimension_numbers = #tpu.dot_dimension_numbers<[1], [0], [0], [1], [0, 0, 1, 1], [], []>} : vector<8x64xbf16>, vector<64x32xbf16>, vector<8x32xf32> -> vector<8x32xf32>
    %329 = arith.addf %272, %328 : vector<8x32xf32>
    %330 = arith.index_cast %c1_i32 : i32 to index
    %c0_109 = arith.constant 0 : index
    %c0_110 = arith.constant 0 : index
    %331 = vector.load %arg14[%330, %c0_109, %c0_110] : memref<2x1x32xf32, #tpu.memory_space<vmem>>, vector<1x1x32xf32>
    %332 = vector.shape_cast %331 : vector<1x1x32xf32> to vector<1x32xf32>
    %333 = vector.broadcast %332 : vector<1x32xf32> to vector<8x32xf32>
    %334 = arith.addf %329, %333 : vector<8x32xf32>
    %c2_i32 = arith.constant 2 : i32
    %c0_111 = arith.constant 0 : index
    %c0_112 = arith.constant 0 : index
    %335 = vector.load %arg15[%c0_111, %c0_112] : memref<1x32xf32, #tpu.memory_space<vmem>>, vector<1x32xf32>
    %c0_113 = arith.constant 0 : index
    %c0_114 = arith.constant 0 : index
    %336 = vector.load %arg16[%c0_113, %c0_114] : memref<1x32xf32, #tpu.memory_space<vmem>>, vector<1x32xf32>
    %cst_115 = arith.constant dense<0.000000e+00> : vector<8xf32>
    %337 = vector.multi_reduction <add>, %334, %cst_115 [1] : vector<8x32xf32> to vector<8xf32>
    %338 = vector.shape_cast %337 : vector<8xf32> to vector<8x1xf32>
    %cst_116 = arith.constant 3.200000e+01 : f32
    %339 = vector.broadcast %cst_116 : f32 to vector<8x1xf32>
    %340 = arith.divf %338, %339 : vector<8x1xf32>
    %341 = vector.broadcast %340 : vector<8x1xf32> to vector<8x32xf32>
    %342 = arith.subf %334, %341 : vector<8x32xf32>
    %343 = arith.mulf %342, %342 : vector<8x32xf32>
    %cst_117 = arith.constant dense<0.000000e+00> : vector<8xf32>
    %344 = vector.multi_reduction <add>, %343, %cst_117 [1] : vector<8x32xf32> to vector<8xf32>
    %345 = vector.shape_cast %344 : vector<8xf32> to vector<8x1xf32>
    %cst_118 = arith.constant 3.200000e+01 : f32
    %346 = vector.broadcast %cst_118 : f32 to vector<8x1xf32>
    %347 = arith.divf %345, %346 : vector<8x1xf32>
    %348 = vector.broadcast %340 : vector<8x1xf32> to vector<8x32xf32>
    %349 = arith.subf %334, %348 : vector<8x32xf32>
    %cst_119 = arith.constant 9.99999974E-6 : f32
    %350 = vector.broadcast %cst_119 : f32 to vector<8x1xf32>
    %351 = arith.addf %347, %350 : vector<8x1xf32>
    %352 = math.rsqrt %351 : vector<8x1xf32>
    %353 = vector.broadcast %352 : vector<8x1xf32> to vector<8x32xf32>
    %354 = arith.mulf %349, %353 : vector<8x32xf32>
    %355 = vector.broadcast %335 : vector<1x32xf32> to vector<8x32xf32>
    %356 = arith.mulf %354, %355 : vector<8x32xf32>
    %357 = vector.broadcast %336 : vector<1x32xf32> to vector<8x32xf32>
    %358 = arith.addf %356, %357 : vector<8x32xf32>
    %359 = vector.shape_cast %358 : vector<8x32xf32> to vector<1x8x32xf32>
    %c0_120 = arith.constant 0 : index
    %c0_121 = arith.constant 0 : index
    %c0_122 = arith.constant 0 : index
    %360 = vector.load %arg17[%c0_120, %c0_121, %c0_122] : memref<1x8x32xf32, #tpu.memory_space<vmem>>, vector<1x8x32xf32>
    tpu.vector_store %arg17[%c0_120, %c0_121, %c0_122], %359 {strides = array<i32>} : memref<1x8x32xf32, #tpu.memory_space<vmem>>, vector<1x8x32xf32>,
    return
  }
  func.func @transform_0(%arg0: i32) -> (i32, i32, i32) {
    %c0_i32 = arith.constant 0 : i32
    %c0_i32_0 = arith.constant 0 : i32
    %c0_i32_1 = arith.constant 0 : i32
    return %arg0, %c0_i32, %c0_i32_0 : i32, i32, i32
  }
  func.func @transform_1(%arg0: i32) -> (i32, i32, i32) {
    %c0_i32 = arith.constant 0 : i32
    %c0_i32_0 = arith.constant 0 : i32
    %c0_i32_1 = arith.constant 0 : i32
    %c0_i32_2 = arith.constant 0 : i32
    return %c0_i32, %c0_i32_0, %c0_i32_1 : i32, i32, i32
  }
  func.func @transform_2(%arg0: i32) -> (i32, i32, i32) {
    %c0_i32 = arith.constant 0 : i32
    %c0_i32_0 = arith.constant 0 : i32
    %c0_i32_1 = arith.constant 0 : i32
    %c0_i32_2 = arith.constant 0 : i32
    return %c0_i32, %c0_i32_0, %c0_i32_1 : i32, i32, i32
  }
  func.func @transform_3(%arg0: i32) -> (i32, i32, i32) {
    %c0_i32 = arith.constant 0 : i32
    %c0_i32_0 = arith.constant 0 : i32
    %c0_i32_1 = arith.constant 0 : i32
    %c0_i32_2 = arith.constant 0 : i32
    return %c0_i32, %c0_i32_0, %c0_i32_1 : i32, i32, i32
  }
  func.func @transform_4(%arg0: i32) -> (i32, i32, i32) {
    %c0_i32 = arith.constant 0 : i32
    %c0_i32_0 = arith.constant 0 : i32
    %c0_i32_1 = arith.constant 0 : i32
    %c0_i32_2 = arith.constant 0 : i32
    return %c0_i32, %c0_i32_0, %c0_i32_1 : i32, i32, i32
  }
  func.func @transform_5(%arg0: i32) -> (i32, i32, i32) {
    %c0_i32 = arith.constant 0 : i32
    %c0_i32_0 = arith.constant 0 : i32
    %c0_i32_1 = arith.constant 0 : i32
    %c0_i32_2 = arith.constant 0 : i32
    return %c0_i32, %c0_i32_0, %c0_i32_1 : i32, i32, i32
  }
  func.func @transform_6(%arg0: i32) -> (i32, i32, i32) {
    %c0_i32 = arith.constant 0 : i32
    %c0_i32_0 = arith.constant 0 : i32
    %c0_i32_1 = arith.constant 0 : i32
    %c0_i32_2 = arith.constant 0 : i32
    return %c0_i32, %c0_i32_0, %c0_i32_1 : i32, i32, i32
  }
  func.func @transform_7(%arg0: i32) -> (i32, i32, i32) {
    %c0_i32 = arith.constant 0 : i32
    %c0_i32_0 = arith.constant 0 : i32
    %c0_i32_1 = arith.constant 0 : i32
    %c0_i32_2 = arith.constant 0 : i32
    return %c0_i32, %c0_i32_0, %c0_i32_1 : i32, i32, i32
  }
  func.func @transform_8(%arg0: i32) -> (i32, i32, i32) {
    %c0_i32 = arith.constant 0 : i32
    %c0_i32_0 = arith.constant 0 : i32
    %c0_i32_1 = arith.constant 0 : i32
    %c0_i32_2 = arith.constant 0 : i32
    return %c0_i32, %c0_i32_0, %c0_i32_1 : i32, i32, i32
  }
  func.func @transform_9(%arg0: i32) -> (i32, i32, i32) {
    %c0_i32 = arith.constant 0 : i32
    %c0_i32_0 = arith.constant 0 : i32
    %c0_i32_1 = arith.constant 0 : i32
    %c0_i32_2 = arith.constant 0 : i32
    return %c0_i32, %c0_i32_0, %c0_i32_1 : i32, i32, i32
  }
  func.func @transform_10(%arg0: i32) -> (i32, i32, i32) {
    %c0_i32 = arith.constant 0 : i32
    %c0_i32_0 = arith.constant 0 : i32
    %c0_i32_1 = arith.constant 0 : i32
    %c0_i32_2 = arith.constant 0 : i32
    return %c0_i32, %c0_i32_0, %c0_i32_1 : i32, i32, i32
  }
  func.func @transform_11(%arg0: i32) -> (i32, i32, i32) {
    %c0_i32 = arith.constant 0 : i32
    %c0_i32_0 = arith.constant 0 : i32
    %c0_i32_1 = arith.constant 0 : i32
    %c0_i32_2 = arith.constant 0 : i32
    return %c0_i32, %c0_i32_0, %c0_i32_1 : i32, i32, i32
  }
  func.func @transform_12(%arg0: i32) -> (i32, i32, i32) {
    %c0_i32 = arith.constant 0 : i32
    %c0_i32_0 = arith.constant 0 : i32
    %c0_i32_1 = arith.constant 0 : i32
    %c0_i32_2 = arith.constant 0 : i32
    return %c0_i32, %c0_i32_0, %c0_i32_1 : i32, i32, i32
  }
  func.func @transform_13(%arg0: i32) -> (i32, i32, i32) {
    %c0_i32 = arith.constant 0 : i32
    %c0_i32_0 = arith.constant 0 : i32
    %c0_i32_1 = arith.constant 0 : i32
    %c0_i32_2 = arith.constant 0 : i32
    return %c0_i32, %c0_i32_0, %c0_i32_1 : i32, i32, i32
  }
  func.func @transform_14(%arg0: i32) -> (i32, i32) {
    %c0_i32 = arith.constant 0 : i32
    %c0_i32_0 = arith.constant 0 : i32
    %c0_i32_1 = arith.constant 0 : i32
    return %c0_i32, %c0_i32_0 : i32, i32
  }
  func.func @transform_15(%arg0: i32) -> (i32, i32) {
    %c0_i32 = arith.constant 0 : i32
    %c0_i32_0 = arith.constant 0 : i32
    %c0_i32_1 = arith.constant 0 : i32
    return %c0_i32, %c0_i32_0 : i32, i32
  }
  func.func @transform_16(%arg0: i32) -> (i32, i32, i32) {
    %c0_i32 = arith.constant 0 : i32
    %c0_i32_0 = arith.constant 0 : i32
    %c0_i32_1 = arith.constant 0 : i32
    return %arg0, %c0_i32, %c0_i32_0 : i32, i32, i32
  }
}

</mosaic_0001>

<llo_original>
// kernel: _lambda_.2
$region0: #{_lambda_.2}
  #allocation0 [shape = 'u32[]', space=smem, size = 0x4, offset = 0x4, fixed_abs, tag = 'smem constant byte address 0x4 - core index']
  #allocation1 [shape = 'u32[144,128]{1,0:T(1,128)}', space=vmem, size = 0x12000, scoped, tag = 'internal scratch']
  %s0 = inlined_call_operand.vmem [shape: bf16[2,8,256], index: 0, kind: input, shape index: {}]
  %s1 = inlined_call_operand.vmem [shape: f32[1,8,32], index: 1, kind: input, shape index: {}]
  %s2 = inlined_call_operand.vmem [shape: f32[1,256], index: 2, kind: input, shape index: {}]
  %s3 = inlined_call_operand.vmem [shape: f32[1,256], index: 3, kind: input, shape index: {}]
  %s4 = inlined_call_operand.vmem [shape: bf16[256,32], index: 4, kind: input, shape index: {}]
  %s5 = inlined_call_operand.vmem [shape: f32[1,32], index: 5, kind: input, shape index: {}]
  %s6 = inlined_call_operand.vmem [shape: f32[1,32], index: 6, kind: input, shape index: {}]
  %s7 = inlined_call_operand.vmem [shape: f32[1,32], index: 7, kind: input, shape index: {}]
  %s8 = inlined_call_operand.vmem [shape: f32[2,8,32], index: 8, kind: output, shape index: {}]
  %s9 = sld [smem:[#allocation0]]
  $region65: #{_lambda_.2} parent=0
    _
  %s11 = ssub.s32 1, %s9
  %s12 = scalar_select 0, %s11, %s9
  loop: start=0, step=1, limit=4
  $region2: #{_lambda_.2} parent=0 // loop_pre_header
    _
  $region3: #{_lambda_.2} parent=0 // loop_header
    %s14 = sphi 0, %s18
    %p15 = scmp.ge.s32.totalorder %s14, 4
    %s24 = sphi 0, %s26
    %s27 = sphi 0, %s24
    %s28 = sphi 0, %s27
    %s44 = sphi 0, %s28
    %s48 = sphi 0, %s48
    %s50 = sphi 0, %s48
    %s51 = sphi 0, %s50
    %s65 = sphi 0, %s51
    %s69 = sphi 0, %s69
    %s71 = sphi 0, %s69
    %s72 = sphi 0, %s71
    %s86 = sphi 0, %s72
    %s90 = sphi 0, %s90
    %s92 = sphi 0, %s90
    %s93 = sphi 0, %s92
    %s107 = sphi 0, %s93
    %s111 = sphi 0, %s111
    %s113 = sphi 0, %s111
    %s114 = sphi 0, %s113
    %s128 = sphi 0, %s114
    %s132 = sphi 0, %s132
    %s134 = sphi 0, %s132
    %s135 = sphi 0, %s134
    %s149 = sphi 0, %s135
    %s153 = sphi 0, %s153
    %s155 = sphi 0, %s153
    %s156 = sphi 0, %s155
    %s170 = sphi 0, %s156
    %s174 = sphi 0, %s174
    %s176 = sphi 0, %s174
    %s177 = sphi 0, %s176
    %s191 = sphi 0, %s177
    %s197 = sphi 0, %s199
    %s200 = sphi 0, %s197
    %s201 = sphi 0, %s200
    %s217 = sphi 0, %s201
  $region4: #{_lambda_.2} parent=0 // loop_header_branch
    %17 = sbr.rel (%p15) target = $region8
  $region5: #{_lambda_.2} parent=0 // loop_body
    %s19 = ssub.s32 %s14, 1
    %s20 = ssub.s32 %s14, 2
    %s21 = sadd.s32 %s14, 1
    %s22 = ssub.s32 %s14, %s21
    %p23 = scmp.eq.s32.totalorder %s22, 0
    %s25 = sadd.s32 %s24, 1
    %s26 = scalar_select %p23, %s24, %s25
    %p29 = pneg %p23
    %p30 = scmp.eq.s32.totalorder %s14, 1
    %p31 = por %p29, %p30
    %p32 = scmp.ne.s32.totalorder %s24, %s27
    %p33 = scmp.eq.s32.totalorder %s14, 0
    %p34 = por %p32, %p33
    %p35 = scmp.ne.s32.totalorder %s24, %s27
    %p36 = scmp.eq.s32.totalorder %s19, 1
    %p37 = por %p35, %p36
    %p38 = scmp.ne.s32.totalorder %s27, %s28
    %p39 = scmp.eq.s32.totalorder %s19, 0
    %p40 = por %p38, %p39
    %p41 = scmp.ne.s32.totalorder %s27, %s28
    %p42 = scmp.eq.s32.totalorder %s20, 1
    %p43 = por %p41, %p42
    %p45 = scmp.ne.s32.totalorder %s28, %s44
    %p46 = scmp.eq.s32.totalorder %s20, 0
    %p47 = por %p45, %p46
    %s49 = sadd.s32 %s48, 1
    %p52 = scmp.eq.s32.totalorder %s14, 1
    %p53 = scmp.ne.s32.totalorder %s48, %s50
    %p54 = scmp.eq.s32.totalorder %s14, 0
    %p55 = por %p53, %p54
    %p56 = scmp.ne.s32.totalorder %s48, %s50
    %p57 = scmp.eq.s32.totalorder %s19, 1
    %p58 = por %p56, %p57
    %p59 = scmp.ne.s32.totalorder %s50, %s51
    %p60 = scmp.eq.s32.totalorder %s19, 0
    %p61 = por %p59, %p60
    %p62 = scmp.ne.s32.totalorder %s50, %s51
    %p63 = scmp.eq.s32.totalorder %s20, 1
    %p64 = por %p62, %p63
    %p66 = scmp.ne.s32.totalorder %s51, %s65
    %p67 = scmp.eq.s32.totalorder %s20, 0
    %p68 = por %p66, %p67
    %s70 = sadd.s32 %s69, 1
    %p73 = scmp.eq.s32.totalorder %s14, 1
    %p74 = scmp.ne.s32.totalorder %s69, %s71
    %p75 = scmp.eq.s32.totalorder %s14, 0
    %p76 = por %p74, %p75
    %p77 = scmp.ne.s32.totalorder %s69, %s71
    %p78 = scmp.eq.s32.totalorder %s19, 1
    %p79 = por %p77, %p78
    %p80 = scmp.ne.s32.totalorder %s71, %s72
    %p81 = scmp.eq.s32.totalorder %s19, 0
    %p82 = por %p80, %p81
    %p83 = scmp.ne.s32.totalorder %s71, %s72
    %p84 = scmp.eq.s32.totalorder %s20, 1
    %p85 = por %p83, %p84
    %p87 = scmp.ne.s32.totalorder %s72, %s86
    %p88 = scmp.eq.s32.totalorder %s20, 0
    %p89 = por %p87, %p88
    %s91 = sadd.s32 %s90, 1
    %p94 = scmp.eq.s32.totalorder %s14, 1
    %p95 = scmp.ne.s32.totalorder %s90, %s92
    %p96 = scmp.eq.s32.totalorder %s14, 0
    %p97 = por %p95, %p96
    %p98 = scmp.ne.s32.totalorder %s90, %s92
    %p99 = scmp.eq.s32.totalorder %s19, 1
    %p100 = por %p98, %p99
    %p101 = scmp.ne.s32.totalorder %s92, %s93
    %p102 = scmp.eq.s32.totalorder %s19, 0
    %p103 = por %p101, %p102
    %p104 = scmp.ne.s32.totalorder %s92, %s93
    %p105 = scmp.eq.s32.totalorder %s20, 1
    %p106 = por %p104, %p105
    %p108 = scmp.ne.s32.totalorder %s93, %s107
    %p109 = scmp.eq.s32.totalorder %s20, 0
    %p110 = por %p108, %p109
    %s112 = sadd.s32 %s111, 1
    %p115 = scmp.eq.s32.totalorder %s14, 1
    %p116 = scmp.ne.s32.totalorder %s111, %s113
    %p117 = scmp.eq.s32.totalorder %s14, 0
    %p118 = por %p116, %p117
    %p119 = scmp.ne.s32.totalorder %s111, %s113
    %p120 = scmp.eq.s32.totalorder %s19, 1
    %p121 = por %p119, %p120
    %p122 = scmp.ne.s32.totalorder %s113, %s114
    %p123 = scmp.eq.s32.totalorder %s19, 0
    %p124 = por %p122, %p123
    %p125 = scmp.ne.s32.totalorder %s113, %s114
    %p126 = scmp.eq.s32.totalorder %s20, 1
    %p127 = por %p125, %p126
    %p129 = scmp.ne.s32.totalorder %s114, %s128
    %p130 = scmp.eq.s32.totalorder %s20, 0
    %p131 = por %p129, %p130
    %s133 = sadd.s32 %s132, 1
    %p136 = scmp.eq.s32.totalorder %s14, 1
    %p137 = scmp.ne.s32.totalorder %s132, %s134
    %p138 = scmp.eq.s32.totalorder %s14, 0
    %p139 = por %p137, %p138
    %p140 = scmp.ne.s32.totalorder %s132, %s134
    %p141 = scmp.eq.s32.totalorder %s19, 1
    %p142 = por %p140, %p141
    %p143 = scmp.ne.s32.totalorder %s134, %s135
    %p144 = scmp.eq.s32.totalorder %s19, 0
    %p145 = por %p143, %p144
    %p146 = scmp.ne.s32.totalorder %s134, %s135
    %p147 = scmp.eq.s32.totalorder %s20, 1
    %p148 = por %p146, %p147
    %p150 = scmp.ne.s32.totalorder %s135, %s149
    %p151 = scmp.eq.s32.totalorder %s20, 0
    %p152 = por %p150, %p151
    %s154 = sadd.s32 %s153, 1
    %p157 = scmp.eq.s32.totalorder %s14, 1
    %p158 = scmp.ne.s32.totalorder %s153, %s155
    %p159 = scmp.eq.s32.totalorder %s14, 0
    %p160 = por %p158, %p159
    %p161 = scmp.ne.s32.totalorder %s153, %s155
    %p162 = scmp.eq.s32.totalorder %s19, 1
    %p163 = por %p161, %p162
    %p164 = scmp.ne.s32.totalorder %s155, %s156
    %p165 = scmp.eq.s32.totalorder %s19, 0
    %p166 = por %p164, %p165
    %p167 = scmp.ne.s32.totalorder %s155, %s156
    %p168 = scmp.eq.s32.totalorder %s20, 1
    %p169 = por %p167, %p168
    %p171 = scmp.ne.s32.totalorder %s156, %s170
    %p172 = scmp.eq.s32.totalorder %s20, 0
    %p173 = por %p171, %p172
    %s175 = sadd.s32 %s174, 1
    %p178 = scmp.eq.s32.totalorder %s14, 1
    %p179 = scmp.ne.s32.totalorder %s174, %s176
    %p180 = scmp.eq.s32.totalorder %s14, 0
    %p181 = por %p179, %p180
    %p182 = scmp.ne.s32.totalorder %s174, %s176
    %p183 = scmp.eq.s32.totalorder %s19, 1
    %p184 = por %p182, %p183
    %p185 = scmp.ne.s32.totalorder %s176, %s177
    %p186 = scmp.eq.s32.totalorder %s19, 0
    %p187 = por %p185, %p186
    %p188 = scmp.ne.s32.totalorder %s176, %s177
    %p189 = scmp.eq.s32.totalorder %s20, 1
    %p190 = por %p188, %p189
    %p192 = scmp.ne.s32.totalorder %s177, %s191
    %p193 = scmp.eq.s32.totalorder %s20, 0
    %p194 = por %p192, %p193
    %s195 = ssub.s32 %s14, %s21
    %p196 = scmp.eq.s32.totalorder %s195, 0
    %s198 = sadd.s32 %s197, 1
    %s199 = scalar_select %p196, %s197, %s198
    %p202 = pneg %p196
    %p203 = scmp.eq.s32.totalorder %s14, 1
    %p204 = por %p202, %p203
    %p205 = scmp.ne.s32.totalorder %s197, %s200
    %p206 = scmp.eq.s32.totalorder %s14, 0
    %p207 = por %p205, %p206
    %p208 = scmp.ne.s32.totalorder %s197, %s200
    %p209 = scmp.eq.s32.totalorder %s19, 1
    %p210 = por %p208, %p209
    %p211 = scmp.ne.s32.totalorder %s200, %s201
    %p212 = scmp.eq.s32.totalorder %s19, 0
    %p213 = por %p211, %p212
    %p214 = scmp.ne.s32.totalorder %s200, %s201
    %p215 = scmp.eq.s32.totalorder %s20, 1
    %p216 = por %p214, %p215
    %p218 = scmp.ne.s32.totalorder %s201, %s217
    %p219 = scmp.eq.s32.totalorder %s20, 0
    %p220 = por %p218, %p219
    %p221 = scmp.le.s32.totalorder 1, %s14
    %p222 = scmp.lt.s32.totalorder %s14, 3
    %p223 = pnand %p221, %p222
    %p224 = pneg %p223
    // Predicated region
    $region9: #{_lambda_.2} parent=5 // pred_check
      _
    $region10: #{_lambda_.2} parent=5 // pred_check_branch
      %226 = sbr.rel (%p223) target = $region12
    $region11: #{_lambda_.2} parent=5 // pred_region
      %s227 = ssub.s32 %s14, 1
      // Predicated region
      $region13: #{_lambda_.2} parent=11 // pred_check
        %p228 = pneg %p61
      $region14: #{_lambda_.2} parent=11 // pred_check_branch
        %230 = sbr.rel (%p228) target = $region16
      $region15: #{_lambda_.2} parent=11 // pred_region
        _
      $region16: #{_lambda_.2} parent=11 // pred_fallthru
        _
      // Predicated region
      $region17: #{_lambda_.2} parent=11 // pred_check
        %p231 = pneg %p82
      $region18: #{_lambda_.2} parent=11 // pred_check_branch
        %233 = sbr.rel (%p231) target = $region20
      $region19: #{_lambda_.2} parent=11 // pred_region
        _
      $region20: #{_lambda_.2} parent=11 // pred_fallthru
        _
      // Predicated region
      $region21: #{_lambda_.2} parent=11 // pred_check
        %p234 = pneg %p103
      $region22: #{_lambda_.2} parent=11 // pred_check_branch
        %236 = sbr.rel (%p234) target = $region24
      $region23: #{_lambda_.2} parent=11 // pred_region
        _
      $region24: #{_lambda_.2} parent=11 // pred_fallthru
        _
      // Predicated region
      $region25: #{_lambda_.2} parent=11 // pred_check
        %p237 = pneg %p124
      $region26: #{_lambda_.2} parent=11 // pred_check_branch
        %239 = sbr.rel (%p237) target = $region28
      $region27: #{_lambda_.2} parent=11 // pred_region
        _
      $region28: #{_lambda_.2} parent=11 // pred_fallthru
        _
      // Predicated region
      $region29: #{_lambda_.2} parent=11 // pred_check
        %p240 = pneg %p145
      $region30: #{_lambda_.2} parent=11 // pred_check_branch
        %242 = sbr.rel (%p240) target = $region32
      $region31: #{_lambda_.2} parent=11 // pred_region
        _
      $region32: #{_lambda_.2} parent=11 // pred_fallthru
        _
      // Predicated region
      $region33: #{_lambda_.2} parent=11 // pred_check
        %p243 = pneg %p166
      $region34: #{_lambda_.2} parent=11 // pred_check_branch
        %245 = sbr.rel (%p243) target = $region36
      $region35: #{_lambda_.2} parent=11 // pred_region
        _
      $region36: #{_lambda_.2} parent=11 // pred_fallthru
        _
      // Predicated region
      $region37: #{_lambda_.2} parent=11 // pred_check
        %p246 = pneg %p187
      $region38: #{_lambda_.2} parent=11 // pred_check_branch
        %248 = sbr.rel (%p246) target = $region40
      $region39: #{_lambda_.2} parent=11 // pred_region
        _
      $region40: #{_lambda_.2} parent=11 // pred_fallthru
        _
    $region12: #{_lambda_.2} parent=5 // pred_fallthru
      _
    %p249 = scmp.lt.s32.totalorder %s14, 2
    // Predicated region
    $region41: #{_lambda_.2} parent=5 // pred_check
      %p250 = pneg %p249
    $region42: #{_lambda_.2} parent=5 // pred_check_branch
      %252 = sbr.rel (%p250) target = $region44
    $region43: #{_lambda_.2} parent=5 // pred_region
      // Predicated region
      $region45: #{_lambda_.2} parent=43 // pred_check
        %p253 = pneg %p34
      $region46: #{_lambda_.2} parent=43 // pred_check_branch
        %255 = sbr.rel (%p253) target = $region48
      $region47: #{_lambda_.2} parent=43 // pred_region
        %p256 = scmp.lt.s32.totalorder %s14, 1
        %s257 = scalar_select %p256, %s14, 1
        %s258 = smul.addr %s257, 2
        %s259 = smul.addr %s258, 4
        %s260 = scalar_lea.vmem %s0, %s259
      $region48: #{_lambda_.2} parent=43 // pred_fallthru
        _
    $region44: #{_lambda_.2} parent=5 // pred_fallthru
      _
    %p261 = scmp.le.s32.totalorder 1, %s14
    %p262 = scmp.lt.s32.totalorder %s14, 3
    %p263 = pnand %p261, %p262
    %p264 = pneg %p263
    // Predicated region
    $region49: #{_lambda_.2} parent=5 // pred_check
      _
    $region50: #{_lambda_.2} parent=5 // pred_check_branch
      %266 = sbr.rel (%p263) target = $region52
    $region51: #{_lambda_.2} parent=5 // pred_region
      %s267 = ssub.s32 %s14, 1
      %p268 = scmp.lt.s32.totalorder %s19, 1
      %s269 = scalar_select %p268, %s19, 1
      %s270 = smul.addr %s269, 2
      %s271 = smul.addr %s270, 4
      %s272 = scalar_lea.vmem %s0, %s271
      %p273 = pneg %p40
      %p274 = pneg %p37
      %p275 = pneg %p61
      %p276 = pneg %p58
      %p277 = pneg %p82
      %p278 = pneg %p79
      %p279 = pneg %p103
      %p280 = pneg %p100
      %p281 = pneg %p124
      %p282 = pneg %p121
      %p283 = pneg %p145
      %p284 = pneg %p142
      %p285 = pneg %p166
      %p286 = pneg %p163
      %p287 = pneg %p187
      %p288 = pneg %p184
      %p289 = pneg %p213
      %p290 = pneg %p210
      %p291 = scmp.lt.s32.totalorder %s19, 1
      %s292 = scalar_select %p291, %s19, 1
      %s293 = smul.addr %s292, 8
      %s294 = scalar_lea.vmem %s8, %s293
      %p295 = scmp.lt.s32.totalorder %s19, 1
      %s296 = scalar_select %p295, %s19, 1
      %s297 = smul.addr %s296, 2
      %s298 = smul.addr %s297, 4
      %s299 = scalar_lea.vmem %s0, %s298
      %p300 = scmp.lt.s32.totalorder %s19, 1
      %s301 = scalar_select %p300, %s19, 1
      %s302 = smul.addr %s301, 8
      %s303 = scalar_lea.vmem %s8, %s302
      %v305 = vld [vmem:[%s299] sm:$0xff]
      %v306 = vld [vmem:[%s2] sm:$0x3]
      %v307 = vld [vmem:[%s3] sm:$0x3]
      %v308 = vunpack.c.l.bf16 %v305
      %v309 = vunpack.c.h.bf16 %v305
      %v310 = vadd.f32 %v308, %v309
      %311 = vadd.xlane.f32.xlu0 %v310
      %v312 = vpop.xlane.xlu0 %311
      %v313 = vrcp.pop 256.0
      %v314 = vmul.f32 %v312, %v313
      %v315 = vsub.f32 %v308, %v314
      %v316 = vsub.f32 %v309, %v314
      %v317 = vmul.f32 %v315, %v315
      %v318 = vmul.f32 %v316, %v316
      %v319 = vadd.f32 %v317, %v318
      %320 = vadd.xlane.f32.xlu0 %v319
      %v321 = vpop.xlane.xlu0 %320
      %v322 = vmul.f32 %v321, %v313
      %v323 = vadd.f32 %v322, 1e-05
      %v324 = vrsqrt.pop %v323
      %v325 = vmul.f32 %v315, %v324
      %v326 = vmul.f32 %v316, %v324
      %v328 = vlaneseq
      %v329 = vshrl.u32 %v328, 7
      %v330 = vsub.s32 0, %v329
      %v331 = vrot.slane %v306, %v330
      %v332 = vlaneseq
      %v333 = vshrl.u32 %v332, 7
      %v334 = vsub.s32 1, %v333
      %v335 = vrot.slane %v306, %v334
      %v338 = vmul.f32 %v325, %v331
      %v339 = vmul.f32 %v326, %v335
      %v341 = vlaneseq
      %v342 = vshrl.u32 %v341, 7
      %v343 = vsub.s32 0, %v342
      %v344 = vrot.slane %v307, %v343
      %v345 = vlaneseq
      %v346 = vshrl.u32 %v345, 7
      %v347 = vsub.s32 1, %v346
      %v348 = vrot.slane %v307, %v347
      %v351 = vadd.f32 %v338, %v344
      %v352 = vadd.f32 %v339, %v348
      %v353 = vpack.c.bf16 %v351, %v351
      %v354 = vpack.c.bf16 %v352, %v352
      %v355 = vld [vmem:[%s4] sm:$0xf]
      %v356 = vld [vmem:[%s4 + $0x4] sm:$0xf]
      %v357 = vld [vmem:[%s4 + $0x8] sm:$0xf]
      %v358 = vld [vmem:[%s4 + $0xc] sm:$0xf]
      %v359 = vld [vmem:[%s4 + $0x10] sm:$0xf]
      %v360 = vld [vmem:[%s4 + $0x14] sm:$0xf]
      %v361 = vld [vmem:[%s4 + $0x18] sm:$0xf]
      %v362 = vld [vmem:[%s4 + $0x1c] sm:$0xf]
      %v363 = vld [vmem:[%s4 + $0x20] sm:$0xf]
      %v364 = vld [vmem:[%s4 + $0x24] sm:$0xf]
      %v365 = vld [vmem:[%s4 + $0x28] sm:$0xf]
      %v366 = vld [vmem:[%s4 + $0x2c] sm:$0xf]
      %v367 = vld [vmem:[%s4 + $0x30] sm:$0xf]
      %v368 = vld [vmem:[%s4 + $0x34] sm:$0xf]
      %v369 = vld [vmem:[%s4 + $0x38] sm:$0xf]
      %v370 = vld [vmem:[%s4 + $0x3c] sm:$0xf]
      %v371 = vld [vmem:[%s4 + $0x40] sm:$0xf]
      %v372 = vld [vmem:[%s4 + $0x44] sm:$0xf]
      %v373 = vld [vmem:[%s4 + $0x48] sm:$0xf]
      %v374 = vld [vmem:[%s4 + $0x4c] sm:$0xf]
      %v375 = vld [vmem:[%s4 + $0x50] sm:$0xf]
      %v376 = vld [vmem:[%s4 + $0x54] sm:$0xf]
      %v377 = vld [vmem:[%s4 + $0x58] sm:$0xf]
      %v378 = vld [vmem:[%s4 + $0x5c] sm:$0xf]
      %v379 = vld [vmem:[%s4 + $0x60] sm:$0xf]
      %v380 = vld [vmem:[%s4 + $0x64] sm:$0xf]
      %v381 = vld [vmem:[%s4 + $0x68] sm:$0xf]
      %v382 = vld [vmem:[%s4 + $0x6c] sm:$0xf]
      %v383 = vld [vmem:[%s4 + $0x70] sm:$0xf]
      %v384 = vld [vmem:[%s4 + $0x74] sm:$0xf]
      %v385 = vld [vmem:[%s4 + $0x78] sm:$0xf]
      %v386 = vld [vmem:[%s4 + $0x7c] sm:$0xf]
      %v387 = vld [vmem:[%s5] sm:$0x1]
      %v389 = vlaneseq
      %v390 = vshrl.u32 %v389, 7
      %v391 = vsub.s32 0, %v390
      %v392 = vrot.slane %v387, %v391
      %v426 = vunpack.c.l.b16 %v355
      %v427 = vunpack.c.l.b16 %v356
      %v428 = vunpack.c.l.b16 %v357
      %v429 = vunpack.c.l.b16 %v358
      %v430 = vunpack.c.l.b16 %v359
      %v431 = vunpack.c.l.b16 %v360
      %v432 = vunpack.c.l.b16 %v361
      %v433 = vunpack.c.l.b16 %v362
      %v434 = vunpack.c.l.b16 %v363
      %v435 = vunpack.c.l.b16 %v364
      %v436 = vunpack.c.l.b16 %v365
      %v437 = vunpack.c.l.b16 %v366
      %v438 = vunpack.c.l.b16 %v367
      %v439 = vunpack.c.l.b16 %v368
      %v440 = vunpack.c.l.b16 %v369
      %v441 = vunpack.c.l.b16 %v370
      %v442 = vunpack.c.l.b16 %v371
      %v443 = vunpack.c.l.b16 %v372
      %v444 = vunpack.c.l.b16 %v373
      %v445 = vunpack.c.l.b16 %v374
      %v446 = vunpack.c.l.b16 %v375
      %v447 = vunpack.c.l.b16 %v376
      %v448 = vunpack.c.l.b16 %v377
      %v449 = vunpack.c.l.b16 %v378
      %v450 = vunpack.c.l.b16 %v379
      %v451 = vunpack.c.l.b16 %v380
      %v452 = vunpack.c.l.b16 %v381
      %v453 = vunpack.c.l.b16 %v382
      %v454 = vunpack.c.l.b16 %v383
      %v455 = vunpack.c.l.b16 %v384
      %v456 = vunpack.c.l.b16 %v385
      %v457 = vunpack.c.l.b16 %v386
      %v458 = vpack.c.b16 %v427, %v426
      %v459 = vpack.c.b16 %v429, %v428
      %v460 = vpack.c.b16 %v431, %v430
      %v461 = vpack.c.b16 %v433, %v432
      %v462 = vpack.c.b16 %v435, %v434
      %v463 = vpack.c.b16 %v437, %v436
      %v464 = vpack.c.b16 %v439, %v438
      %v465 = vpack.c.b16 %v441, %v440
      %v466 = vpack.c.b16 %v443, %v442
      %v467 = vpack.c.b16 %v445, %v444
      %v468 = vpack.c.b16 %v447, %v446
      %v469 = vpack.c.b16 %v449, %v448
      %v470 = vpack.c.b16 %v451, %v450
      %v471 = vpack.c.b16 %v453, %v452
      %v472 = vpack.c.b16 %v455, %v454
      %v473 = vpack.c.b16 %v457, %v456
      %490 = vmatprep.subr.bf16.mxu0 0
      %491 = vmatpush1.bf16.msra.mxu0 %v465
      %492 = vmatprep.subr.bf16.mxu0 0
      %493 = vmatpush1.bf16.msra.mxu0 %v464
      %494 = vmatprep.subr.bf16.mxu0 0
      %495 = vmatpush1.bf16.msra.mxu0 %v463
      %496 = vmatprep.subr.bf16.mxu0 0
      %497 = vmatpush1.bf16.msra.mxu0 %v462
      %498 = vmatprep.subr.bf16.mxu0 0
      %499 = vmatpush1.bf16.msra.mxu0 %v461
      %500 = vmatprep.subr.bf16.mxu0 0
      %501 = vmatpush1.bf16.msra.mxu0 %v460
      %502 = vmatprep.subr.bf16.mxu0 0
      %503 = vmatpush1.bf16.msra.mxu0 %v459
      %504 = vmatprep.subr.bf16.mxu0 0
      %505 = vmatpush1.bf16.msra.mxu0 %v458
      %506 = vmatprep.subr.bf16.mxu0 0
      %507 = vmatpush2.bf16.msra.mxu0 %v473
      %508 = vmatprep.subr.bf16.mxu0 0
      %509 = vmatpush2.bf16.msra.mxu0 %v472
      %510 = vmatprep.subr.bf16.mxu0 0
      %511 = vmatpush2.bf16.msra.mxu0 %v471
      %512 = vmatprep.subr.bf16.mxu0 0
      %513 = vmatpush2.bf16.msra.mxu0 %v470
      %514 = vmatprep.subr.bf16.mxu0 0
      %515 = vmatpush2.bf16.msra.mxu0 %v469
      %516 = vmatprep.subr.bf16.mxu0 0
      %517 = vmatpush2.bf16.msra.mxu0 %v468
      %518 = vmatprep.subr.bf16.mxu0 0
      %519 = vmatpush2.bf16.msra.mxu0 %v467
      %520 = vmatprep.subr.bf16.mxu0 0
      %521 = vmatpush2.bf16.msra.mxu0 %v466
      %522 = vmatprep.mubr.bf16.mxu0 %v354
      %523 = vmatmul.mubr.bf16.gmra.mxu0 %v353
      %v524 = vpop.f32.mrf.mxu0
      %v525 = vadd.f32 %v392, %v524
      %v526 = vpop.f32.mrf.mxu0
      %v527 = vpop.f32.mrf.mxu0
      %v528 = vpop.f32.mrf.mxu0
      %529 = vdwg.mxu0
      %v530 = vld [vmem:[%s6] sm:$0x1]
      %v531 = vld [vmem:[%s7] sm:$0x1]
      %vm532 = vcmask 261120
      %v533 = vsel %vm532, %v525, 0.0
      %534 = vadd.xlane.f32.xlu0 %v533
      %v535 = vpop.xlane.xlu0 %534
      %v536 = vrcp.pop 32.0
      %v537 = vmul.f32 %v535, %v536
      %v538 = vsub.f32 %v525, %v537
      %v539 = vmul.f32 %v538, %v538
      %v540 = vsel %vm532, %v539, 0.0
      %541 = vadd.xlane.f32.xlu0 %v540
      %v542 = vpop.xlane.xlu0 %541
      %v543 = vmul.f32 %v542, %v536
      %v544 = vadd.f32 %v543, 1e-05
      %v545 = vrsqrt.pop %v544
      %v546 = vmul.f32 %v538, %v545
      %v548 = vlaneseq
      %v549 = vshrl.u32 %v548, 7
      %v550 = vsub.s32 0, %v549
      %v551 = vrot.slane %v530, %v550
      %v553 = vmul.f32 %v546, %v551
      %v555 = vlaneseq
      %v556 = vshrl.u32 %v555, 7
      %v557 = vsub.s32 0, %v556
      %v558 = vrot.slane %v531, %v557
      %v560 = vadd.f32 %v553, %v558
      %v561 = vlaneseq
      %v562 = vshrl.u32 %v561, 7
      %vm563 = vcmp.ge.s32.totalorder %v562, 1
      %vm564 = vcmp.le.s32.totalorder %v562, 4
      %vm565 = vmand %vm563, %vm564
      %v566 = vsel %vm565, 1, 0
      %v567 = vcvt.s32.f32 %v566
      %v568 = vld [vmem:[%s1] sm:$0xff]
      %v569 = vmul.f32 %v560, %v567
      %v570 = vadd.f32 %v568, %v569
      %571 = vst.msk [vmem:[%s303] sm:$0xff] %vm532, %v570
      %p572 = scmp.lt.s32.totalorder %s19, 1
      %s573 = scalar_select %p572, %s19, 1
      %s574 = smul.addr %s573, 8
      %s575 = scalar_lea.vmem %s8, %s574
      // Predicated region
      $region53: #{_lambda_.2} parent=51 // pred_check
        %p576 = pneg %p210
      $region54: #{_lambda_.2} parent=51 // pred_check_branch
        %578 = sbr.rel (%p576) target = $region56
      $region55: #{_lambda_.2} parent=51 // pred_region
        _
      $region56: #{_lambda_.2} parent=51 // pred_fallthru
        _
    $region52: #{_lambda_.2} parent=5 // pred_fallthru
      _
    %p579 = scmp.le.s32.totalorder 2, %s14
    // Predicated region
    $region57: #{_lambda_.2} parent=5 // pred_check
      %p580 = pneg %p579
    $region58: #{_lambda_.2} parent=5 // pred_check_branch
      %582 = sbr.rel (%p580) target = $region60
    $region59: #{_lambda_.2} parent=5 // pred_region
      %s583 = ssub.s32 %s14, 2
      // Predicated region
      $region61: #{_lambda_.2} parent=59 // pred_check
        %p584 = pneg %p216
      $region62: #{_lambda_.2} parent=59 // pred_check_branch
        %586 = sbr.rel (%p584) target = $region64
      $region63: #{_lambda_.2} parent=59 // pred_region
        %p587 = scmp.lt.s32.totalorder %s20, 1
        %s588 = scalar_select %p587, %s20, 1
        %s589 = smul.addr %s588, 8
        %s590 = scalar_lea.vmem %s8, %s589
      $region64: #{_lambda_.2} parent=59 // pred_fallthru
        _
    $region60: #{_lambda_.2} parent=5 // pred_fallthru
      _
  $region6: #{_lambda_.2} parent=0 // loop_footer
    %s18 = sadd.s32 1, %s14
  $region7: #{_lambda_.2} parent=0 // loop_footer_branch
    %13 = sbr.rel target = $region3
  $region8: #{_lambda_.2} parent=0 // loop_exit
    _

// kernel: _lambda_.3
$region0: #{_lambda_.3}
  #allocation0 [shape = 'u32[]', space=smem, size = 0x4, offset = 0x4, fixed_abs, tag = 'smem constant byte address 0x4 - core index']
  #allocation1 [shape = 'u32[144,128]{1,0:T(1,128)}', space=vmem, size = 0x12000, scoped, tag = 'internal scratch']
  %s0 = inlined_call_operand.vmem [shape: f32[2,8,32], index: 0, kind: input, shape index: {}]
  %s1 = inlined_call_operand.vmem [shape: f32[2,1,32], index: 1, kind: input, shape index: {}]
  %s2 = inlined_call_operand.vmem [shape: f32[2,1,32], index: 2, kind: input, shape index: {}]
  %s3 = inlined_call_operand.vmem [shape: bf16[2,32,32], index: 3, kind: input, shape index: {}]
  %s4 = inlined_call_operand.vmem [shape: bf16[2,32,32], index: 4, kind: input, shape index: {}]
  %s5 = inlined_call_operand.vmem [shape: bf16[2,32,32], index: 5, kind: input, shape index: {}]
  %s6 = inlined_call_operand.vmem [shape: bf16[2,32,32], index: 6, kind: input, shape index: {}]
  %s7 = inlined_call_operand.vmem [shape: f32[2,1,32], index: 7, kind: input, shape index: {}]
  %s8 = inlined_call_operand.vmem [shape: f32[2,1,32], index: 8, kind: input, shape index: {}]
  %s9 = inlined_call_operand.vmem [shape: f32[2,1,32], index: 9, kind: input, shape index: {}]
  %s10 = inlined_call_operand.vmem [shape: bf16[2,32,64], index: 10, kind: input, shape index: {}]
  %s11 = inlined_call_operand.vmem [shape: f32[2,1,64], index: 11, kind: input, shape index: {}]
  %s12 = inlined_call_operand.vmem [shape: bf16[2,64,32], index: 12, kind: input, shape index: {}]
  %s13 = inlined_call_operand.vmem [shape: f32[2,1,32], index: 13, kind: input, shape index: {}]
  %s14 = inlined_call_operand.vmem [shape: f32[1,32], index: 14, kind: input, shape index: {}]
  %s15 = inlined_call_operand.vmem [shape: f32[1,32], index: 15, kind: input, shape index: {}]
  %s16 = inlined_call_operand.vmem [shape: f32[2,8,32], index: 16, kind: output, shape index: {}]
  %s17 = sld [smem:[#allocation0]]
  $region97: #{_lambda_.3} parent=0
    _
  %s19 = ssub.s32 1, %s17
  %s20 = scalar_select 0, %s19, %s17
  loop: start=0, step=1, limit=4
  $region2: #{_lambda_.3} parent=0 // loop_pre_header
    _
  $region3: #{_lambda_.3} parent=0 // loop_header
    %s22 = sphi 0, %s26
    %p23 = scmp.ge.s32.totalorder %s22, 4
    %s32 = sphi 0, %s34
    %s35 = sphi 0, %s32
    %s36 = sphi 0, %s35
    %s52 = sphi 0, %s36
    %s56 = sphi 0, %s56
    %s58 = sphi 0, %s56
    %s59 = sphi 0, %s58
    %s73 = sphi 0, %s59
    %s77 = sphi 0, %s77
    %s79 = sphi 0, %s77
    %s80 = sphi 0, %s79
    %s94 = sphi 0, %s80
    %s98 = sphi 0, %s98
    %s100 = sphi 0, %s98
    %s101 = sphi 0, %s100
    %s115 = sphi 0, %s101
    %s119 = sphi 0, %s119
    %s121 = sphi 0, %s119
    %s122 = sphi 0, %s121
    %s136 = sphi 0, %s122
    %s140 = sphi 0, %s140
    %s142 = sphi 0, %s140
    %s143 = sphi 0, %s142
    %s157 = sphi 0, %s143
    %s161 = sphi 0, %s161
    %s163 = sphi 0, %s161
    %s164 = sphi 0, %s163
    %s178 = sphi 0, %s164
    %s182 = sphi 0, %s182
    %s184 = sphi 0, %s182
    %s185 = sphi 0, %s184
    %s199 = sphi 0, %s185
    %s203 = sphi 0, %s203
    %s205 = sphi 0, %s203
    %s206 = sphi 0, %s205
    %s220 = sphi 0, %s206
    %s224 = sphi 0, %s224
    %s226 = sphi 0, %s224
    %s227 = sphi 0, %s226
    %s241 = sphi 0, %s227
    %s245 = sphi 0, %s245
    %s247 = sphi 0, %s245
    %s248 = sphi 0, %s247
    %s262 = sphi 0, %s248
    %s266 = sphi 0, %s266
    %s268 = sphi 0, %s266
    %s269 = sphi 0, %s268
    %s283 = sphi 0, %s269
    %s287 = sphi 0, %s287
    %s289 = sphi 0, %s287
    %s290 = sphi 0, %s289
    %s304 = sphi 0, %s290
    %s308 = sphi 0, %s308
    %s310 = sphi 0, %s308
    %s311 = sphi 0, %s310
    %s325 = sphi 0, %s311
    %s329 = sphi 0, %s329
    %s331 = sphi 0, %s329
    %s332 = sphi 0, %s331
    %s346 = sphi 0, %s332
    %s350 = sphi 0, %s350
    %s352 = sphi 0, %s350
    %s353 = sphi 0, %s352
    %s367 = sphi 0, %s353
    %s373 = sphi 0, %s375
    %s376 = sphi 0, %s373
    %s377 = sphi 0, %s376
    %s393 = sphi 0, %s377
  $region4: #{_lambda_.3} parent=0 // loop_header_branch
    %25 = sbr.rel (%p23) target = $region8
  $region5: #{_lambda_.3} parent=0 // loop_body
    %s27 = ssub.s32 %s22, 1
    %s28 = ssub.s32 %s22, 2
    %s29 = sadd.s32 %s22, 1
    %s30 = ssub.s32 %s22, %s29
    %p31 = scmp.eq.s32.totalorder %s30, 0
    %s33 = sadd.s32 %s32, 1
    %s34 = scalar_select %p31, %s32, %s33
    %p37 = pneg %p31
    %p38 = scmp.eq.s32.totalorder %s22, 1
    %p39 = por %p37, %p38
    %p40 = scmp.ne.s32.totalorder %s32, %s35
    %p41 = scmp.eq.s32.totalorder %s22, 0
    %p42 = por %p40, %p41
    %p43 = scmp.ne.s32.totalorder %s32, %s35
    %p44 = scmp.eq.s32.totalorder %s27, 1
    %p45 = por %p43, %p44
    %p46 = scmp.ne.s32.totalorder %s35, %s36
    %p47 = scmp.eq.s32.totalorder %s27, 0
    %p48 = por %p46, %p47
    %p49 = scmp.ne.s32.totalorder %s35, %s36
    %p50 = scmp.eq.s32.totalorder %s28, 1
    %p51 = por %p49, %p50
    %p53 = scmp.ne.s32.totalorder %s36, %s52
    %p54 = scmp.eq.s32.totalorder %s28, 0
    %p55 = por %p53, %p54
    %s57 = sadd.s32 %s56, 1
    %p60 = scmp.eq.s32.totalorder %s22, 1
    %p61 = scmp.ne.s32.totalorder %s56, %s58
    %p62 = scmp.eq.s32.totalorder %s22, 0
    %p63 = por %p61, %p62
    %p64 = scmp.ne.s32.totalorder %s56, %s58
    %p65 = scmp.eq.s32.totalorder %s27, 1
    %p66 = por %p64, %p65
    %p67 = scmp.ne.s32.totalorder %s58, %s59
    %p68 = scmp.eq.s32.totalorder %s27, 0
    %p69 = por %p67, %p68
    %p70 = scmp.ne.s32.totalorder %s58, %s59
    %p71 = scmp.eq.s32.totalorder %s28, 1
    %p72 = por %p70, %p71
    %p74 = scmp.ne.s32.totalorder %s59, %s73
    %p75 = scmp.eq.s32.totalorder %s28, 0
    %p76 = por %p74, %p75
    %s78 = sadd.s32 %s77, 1
    %p81 = scmp.eq.s32.totalorder %s22, 1
    %p82 = scmp.ne.s32.totalorder %s77, %s79
    %p83 = scmp.eq.s32.totalorder %s22, 0
    %p84 = por %p82, %p83
    %p85 = scmp.ne.s32.totalorder %s77, %s79
    %p86 = scmp.eq.s32.totalorder %s27, 1
    %p87 = por %p85, %p86
    %p88 = scmp.ne.s32.totalorder %s79, %s80
    %p89 = scmp.eq.s32.totalorder %s27, 0
    %p90 = por %p88, %p89
    %p91 = scmp.ne.s32.totalorder %s79, %s80
    %p92 = scmp.eq.s32.totalorder %s28, 1
    %p93 = por %p91, %p92
    %p95 = scmp.ne.s32.totalorder %s80, %s94
    %p96 = scmp.eq.s32.totalorder %s28, 0
    %p97 = por %p95, %p96
    %s99 = sadd.s32 %s98, 1
    %p102 = scmp.eq.s32.totalorder %s22, 1
    %p103 = scmp.ne.s32.totalorder %s98, %s100
    %p104 = scmp.eq.s32.totalorder %s22, 0
    %p105 = por %p103, %p104
    %p106 = scmp.ne.s32.totalorder %s98, %s100
    %p107 = scmp.eq.s32.totalorder %s27, 1
    %p108 = por %p106, %p107
    %p109 = scmp.ne.s32.totalorder %s100, %s101
    %p110 = scmp.eq.s32.totalorder %s27, 0
    %p111 = por %p109, %p110
    %p112 = scmp.ne.s32.totalorder %s100, %s101
    %p113 = scmp.eq.s32.totalorder %s28, 1
    %p114 = por %p112, %p113
    %p116 = scmp.ne.s32.totalorder %s101, %s115
    %p117 = scmp.eq.s32.totalorder %s28, 0
    %p118 = por %p116, %p117
    %s120 = sadd.s32 %s119, 1
    %p123 = scmp.eq.s32.totalorder %s22, 1
    %p124 = scmp.ne.s32.totalorder %s119, %s121
    %p125 = scmp.eq.s32.totalorder %s22, 0
    %p126 = por %p124, %p125
    %p127 = scmp.ne.s32.totalorder %s119, %s121
    %p128 = scmp.eq.s32.totalorder %s27, 1
    %p129 = por %p127, %p128
    %p130 = scmp.ne.s32.totalorder %s121, %s122
    %p131 = scmp.eq.s32.totalorder %s27, 0
    %p132 = por %p130, %p131
    %p133 = scmp.ne.s32.totalorder %s121, %s122
    %p134 = scmp.eq.s32.totalorder %s28, 1
    %p135 = por %p133, %p134
    %p137 = scmp.ne.s32.totalorder %s122, %s136
    %p138 = scmp.eq.s32.totalorder %s28, 0
    %p139 = por %p137, %p138
    %s141 = sadd.s32 %s140, 1
    %p144 = scmp.eq.s32.totalorder %s22, 1
    %p145 = scmp.ne.s32.totalorder %s140, %s142
    %p146 = scmp.eq.s32.totalorder %s22, 0
    %p147 = por %p145, %p146
    %p148 = scmp.ne.s32.totalorder %s140, %s142
    %p149 = scmp.eq.s32.totalorder %s27, 1
    %p150 = por %p148, %p149
    %p151 = scmp.ne.s32.totalorder %s142, %s143
    %p152 = scmp.eq.s32.totalorder %s27, 0
    %p153 = por %p151, %p152
    %p154 = scmp.ne.s32.totalorder %s142, %s143
    %p155 = scmp.eq.s32.totalorder %s28, 1
    %p156 = por %p154, %p155
    %p158 = scmp.ne.s32.totalorder %s143, %s157
    %p159 = scmp.eq.s32.totalorder %s28, 0
    %p160 = por %p158, %p159
    %s162 = sadd.s32 %s161, 1
    %p165 = scmp.eq.s32.totalorder %s22, 1
    %p166 = scmp.ne.s32.totalorder %s161, %s163
    %p167 = scmp.eq.s32.totalorder %s22, 0
    %p168 = por %p166, %p167
    %p169 = scmp.ne.s32.totalorder %s161, %s163
    %p170 = scmp.eq.s32.totalorder %s27, 1
    %p171 = por %p169, %p170
    %p172 = scmp.ne.s32.totalorder %s163, %s164
    %p173 = scmp.eq.s32.totalorder %s27, 0
    %p174 = por %p172, %p173
    %p175 = scmp.ne.s32.totalorder %s163, %s164
    %p176 = scmp.eq.s32.totalorder %s28, 1
    %p177 = por %p175, %p176
    %p179 = scmp.ne.s32.totalorder %s164, %s178
    %p180 = scmp.eq.s32.totalorder %s28, 0
    %p181 = por %p179, %p180
    %s183 = sadd.s32 %s182, 1
    %p186 = scmp.eq.s32.totalorder %s22, 1
    %p187 = scmp.ne.s32.totalorder %s182, %s184
    %p188 = scmp.eq.s32.totalorder %s22, 0
    %p189 = por %p187, %p188
    %p190 = scmp.ne.s32.totalorder %s182, %s184
    %p191 = scmp.eq.s32.totalorder %s27, 1
    %p192 = por %p190, %p191
    %p193 = scmp.ne.s32.totalorder %s184, %s185
    %p194 = scmp.eq.s32.totalorder %s27, 0
    %p195 = por %p193, %p194
    %p196 = scmp.ne.s32.totalorder %s184, %s185
    %p197 = scmp.eq.s32.totalorder %s28, 1
    %p198 = por %p196, %p197
    %p200 = scmp.ne.s32.totalorder %s185, %s199
    %p201 = scmp.eq.s32.totalorder %s28, 0
    %p202 = por %p200, %p201
    %s204 = sadd.s32 %s203, 1
    %p207 = scmp.eq.s32.totalorder %s22, 1
    %p208 = scmp.ne.s32.totalorder %s203, %s205
    %p209 = scmp.eq.s32.totalorder %s22, 0
    %p210 = por %p208, %p209
    %p211 = scmp.ne.s32.totalorder %s203, %s205
    %p212 = scmp.eq.s32.totalorder %s27, 1
    %p213 = por %p211, %p212
    %p214 = scmp.ne.s32.totalorder %s205, %s206
    %p215 = scmp.eq.s32.totalorder %s27, 0
    %p216 = por %p214, %p215
    %p217 = scmp.ne.s32.totalorder %s205, %s206
    %p218 = scmp.eq.s32.totalorder %s28, 1
    %p219 = por %p217, %p218
    %p221 = scmp.ne.s32.totalorder %s206, %s220
    %p222 = scmp.eq.s32.totalorder %s28, 0
    %p223 = por %p221, %p222
    %s225 = sadd.s32 %s224, 1
    %p228 = scmp.eq.s32.totalorder %s22, 1
    %p229 = scmp.ne.s32.totalorder %s224, %s226
    %p230 = scmp.eq.s32.totalorder %s22, 0
    %p231 = por %p229, %p230
    %p232 = scmp.ne.s32.totalorder %s224, %s226
    %p233 = scmp.eq.s32.totalorder %s27, 1
    %p234 = por %p232, %p233
    %p235 = scmp.ne.s32.totalorder %s226, %s227
    %p236 = scmp.eq.s32.totalorder %s27, 0
    %p237 = por %p235, %p236
    %p238 = scmp.ne.s32.totalorder %s226, %s227
    %p239 = scmp.eq.s32.totalorder %s28, 1
    %p240 = por %p238, %p239
    %p242 = scmp.ne.s32.totalorder %s227, %s241
    %p243 = scmp.eq.s32.totalorder %s28, 0
    %p244 = por %p242, %p243
    %s246 = sadd.s32 %s245, 1
    %p249 = scmp.eq.s32.totalorder %s22, 1
    %p250 = scmp.ne.s32.totalorder %s245, %s247
    %p251 = scmp.eq.s32.totalorder %s22, 0
    %p252 = por %p250, %p251
    %p253 = scmp.ne.s32.totalorder %s245, %s247
    %p254 = scmp.eq.s32.totalorder %s27, 1
    %p255 = por %p253, %p254
    %p256 = scmp.ne.s32.totalorder %s247, %s248
    %p257 = scmp.eq.s32.totalorder %s27, 0
    %p258 = por %p256, %p257
    %p259 = scmp.ne.s32.totalorder %s247, %s248
    %p260 = scmp.eq.s32.totalorder %s28, 1
    %p261 = por %p259, %p260
    %p263 = scmp.ne.s32.totalorder %s248, %s262
    %p264 = scmp.eq.s32.totalorder %s28, 0
    %p265 = por %p263, %p264
    %s267 = sadd.s32 %s266, 1
    %p270 = scmp.eq.s32.totalorder %s22, 1
    %p271 = scmp.ne.s32.totalorder %s266, %s268
    %p272 = scmp.eq.s32.totalorder %s22, 0
    %p273 = por %p271, %p272
    %p274 = scmp.ne.s32.totalorder %s266, %s268
    %p275 = scmp.eq.s32.totalorder %s27, 1
    %p276 = por %p274, %p275
    %p277 = scmp.ne.s32.totalorder %s268, %s269
    %p278 = scmp.eq.s32.totalorder %s27, 0
    %p279 = por %p277, %p278
    %p280 = scmp.ne.s32.totalorder %s268, %s269
    %p281 = scmp.eq.s32.totalorder %s28, 1
    %p282 = por %p280, %p281
    %p284 = scmp.ne.s32.totalorder %s269, %s283
    %p285 = scmp.eq.s32.totalorder %s28, 0
    %p286 = por %p284, %p285
    %s288 = sadd.s32 %s287, 1
    %p291 = scmp.eq.s32.totalorder %s22, 1
    %p292 = scmp.ne.s32.totalorder %s287, %s289
    %p293 = scmp.eq.s32.totalorder %s22, 0
    %p294 = por %p292, %p293
    %p295 = scmp.ne.s32.totalorder %s287, %s289
    %p296 = scmp.eq.s32.totalorder %s27, 1
    %p297 = por %p295, %p296
    %p298 = scmp.ne.s32.totalorder %s289, %s290
    %p299 = scmp.eq.s32.totalorder %s27, 0
    %p300 = por %p298, %p299
    %p301 = scmp.ne.s32.totalorder %s289, %s290
    %p302 = scmp.eq.s32.totalorder %s28, 1
    %p303 = por %p301, %p302
    %p305 = scmp.ne.s32.totalorder %s290, %s304
    %p306 = scmp.eq.s32.totalorder %s28, 0
    %p307 = por %p305, %p306
    %s309 = sadd.s32 %s308, 1
    %p312 = scmp.eq.s32.totalorder %s22, 1
    %p313 = scmp.ne.s32.totalorder %s308, %s310
    %p314 = scmp.eq.s32.totalorder %s22, 0
    %p315 = por %p313, %p314
    %p316 = scmp.ne.s32.totalorder %s308, %s310
    %p317 = scmp.eq.s32.totalorder %s27, 1
    %p318 = por %p316, %p317
    %p319 = scmp.ne.s32.totalorder %s310, %s311
    %p320 = scmp.eq.s32.totalorder %s27, 0
    %p321 = por %p319, %p320
    %p322 = scmp.ne.s32.totalorder %s310, %s311
    %p323 = scmp.eq.s32.totalorder %s28, 1
    %p324 = por %p322, %p323
    %p326 = scmp.ne.s32.totalorder %s311, %s325
    %p327 = scmp.eq.s32.totalorder %s28, 0
    %p328 = por %p326, %p327
    %s330 = sadd.s32 %s329, 1
    %p333 = scmp.eq.s32.totalorder %s22, 1
    %p334 = scmp.ne.s32.totalorder %s329, %s331
    %p335 = scmp.eq.s32.totalorder %s22, 0
    %p336 = por %p334, %p335
    %p337 = scmp.ne.s32.totalorder %s329, %s331
    %p338 = scmp.eq.s32.totalorder %s27, 1
    %p339 = por %p337, %p338
    %p340 = scmp.ne.s32.totalorder %s331, %s332
    %p341 = scmp.eq.s32.totalorder %s27, 0
    %p342 = por %p340, %p341
    %p343 = scmp.ne.s32.totalorder %s331, %s332
    %p344 = scmp.eq.s32.totalorder %s28, 1
    %p345 = por %p343, %p344
    %p347 = scmp.ne.s32.totalorder %s332, %s346
    %p348 = scmp.eq.s32.totalorder %s28, 0
    %p349 = por %p347, %p348
    %s351 = sadd.s32 %s350, 1
    %p354 = scmp.eq.s32.totalorder %s22, 1
    %p355 = scmp.ne.s32.totalorder %s350, %s352
    %p356 = scmp.eq.s32.totalorder %s22, 0
    %p357 = por %p355, %p356
    %p358 = scmp.ne.s32.totalorder %s350, %s352
    %p359 = scmp.eq.s32.totalorder %s27, 1
    %p360 = por %p358, %p359
    %p361 = scmp.ne.s32.totalorder %s352, %s353
    %p362 = scmp.eq.s32.totalorder %s27, 0
    %p363 = por %p361, %p362
    %p364 = scmp.ne.s32.totalorder %s352, %s353
    %p365 = scmp.eq.s32.totalorder %s28, 1
    %p366 = por %p364, %p365
    %p368 = scmp.ne.s32.totalorder %s353, %s367
    %p369 = scmp.eq.s32.totalorder %s28, 0
    %p370 = por %p368, %p369
    %s371 = ssub.s32 %s22, %s29
    %p372 = scmp.eq.s32.totalorder %s371, 0
    %s374 = sadd.s32 %s373, 1
    %s375 = scalar_select %p372, %s373, %s374
    %p378 = pneg %p372
    %p379 = scmp.eq.s32.totalorder %s22, 1
    %p380 = por %p378, %p379
    %p381 = scmp.ne.s32.totalorder %s373, %s376
    %p382 = scmp.eq.s32.totalorder %s22, 0
    %p383 = por %p381, %p382
    %p384 = scmp.ne.s32.totalorder %s373, %s376
    %p385 = scmp.eq.s32.totalorder %s27, 1
    %p386 = por %p384, %p385
    %p387 = scmp.ne.s32.totalorder %s376, %s377
    %p388 = scmp.eq.s32.totalorder %s27, 0
    %p389 = por %p387, %p388
    %p390 = scmp.ne.s32.totalorder %s376, %s377
    %p391 = scmp.eq.s32.totalorder %s28, 1
    %p392 = por %p390, %p391
    %p394 = scmp.ne.s32.totalorder %s377, %s393
    %p395 = scmp.eq.s32.totalorder %s28, 0
    %p396 = por %p394, %p395
    %p397 = scmp.le.s32.totalorder 1, %s22
    %p398 = scmp.lt.s32.totalorder %s22, 3
    %p399 = pnand %p397, %p398
    %p400 = pneg %p399
    // Predicated region
    $region9: #{_lambda_.3} parent=5 // pred_check
      _
    $region10: #{_lambda_.3} parent=5 // pred_check_branch
      %402 = sbr.rel (%p399) target = $region12
    $region11: #{_lambda_.3} parent=5 // pred_region
      %s403 = ssub.s32 %s22, 1
      // Predicated region
      $region13: #{_lambda_.3} parent=11 // pred_check
        %p404 = pneg %p69
      $region14: #{_lambda_.3} parent=11 // pred_check_branch
        %406 = sbr.rel (%p404) target = $region16
      $region15: #{_lambda_.3} parent=11 // pred_region
        _
      $region16: #{_lambda_.3} parent=11 // pred_fallthru
        _
      // Predicated region
      $region17: #{_lambda_.3} parent=11 // pred_check
        %p407 = pneg %p90
      $region18: #{_lambda_.3} parent=11 // pred_check_branch
        %409 = sbr.rel (%p407) target = $region20
      $region19: #{_lambda_.3} parent=11 // pred_region
        _
      $region20: #{_lambda_.3} parent=11 // pred_fallthru
        _
      // Predicated region
      $region21: #{_lambda_.3} parent=11 // pred_check
        %p410 = pneg %p111
      $region22: #{_lambda_.3} parent=11 // pred_check_branch
        %412 = sbr.rel (%p410) target = $region24
      $region23: #{_lambda_.3} parent=11 // pred_region
        _
      $region24: #{_lambda_.3} parent=11 // pred_fallthru
        _
      // Predicated region
      $region25: #{_lambda_.3} parent=11 // pred_check
        %p413 = pneg %p132
      $region26: #{_lambda_.3} parent=11 // pred_check_branch
        %415 = sbr.rel (%p413) target = $region28
      $region27: #{_lambda_.3} parent=11 // pred_region
        _
      $region28: #{_lambda_.3} parent=11 // pred_fallthru
        _
      // Predicated region
      $region29: #{_lambda_.3} parent=11 // pred_check
        %p416 = pneg %p153
      $region30: #{_lambda_.3} parent=11 // pred_check_branch
        %418 = sbr.rel (%p416) target = $region32
      $region31: #{_lambda_.3} parent=11 // pred_region
        _
      $region32: #{_lambda_.3} parent=11 // pred_fallthru
        _
      // Predicated region
      $region33: #{_lambda_.3} parent=11 // pred_check
        %p419 = pneg %p174
      $region34: #{_lambda_.3} parent=11 // pred_check_branch
        %421 = sbr.rel (%p419) target = $region36
      $region35: #{_lambda_.3} parent=11 // pred_region
        _
      $region36: #{_lambda_.3} parent=11 // pred_fallthru
        _
      // Predicated region
      $region37: #{_lambda_.3} parent=11 // pred_check
        %p422 = pneg %p195
      $region38: #{_lambda_.3} parent=11 // pred_check_branch
        %424 = sbr.rel (%p422) target = $region40
      $region39: #{_lambda_.3} parent=11 // pred_region
        _
      $region40: #{_lambda_.3} parent=11 // pred_fallthru
        _
      // Predicated region
      $region41: #{_lambda_.3} parent=11 // pred_check
        %p425 = pneg %p216
      $region42: #{_lambda_.3} parent=11 // pred_check_branch
        %427 = sbr.rel (%p425) target = $region44
      $region43: #{_lambda_.3} parent=11 // pred_region
        _
      $region44: #{_lambda_.3} parent=11 // pred_fallthru
        _
      // Predicated region
      $region45: #{_lambda_.3} parent=11 // pred_check
        %p428 = pneg %p237
      $region46: #{_lambda_.3} parent=11 // pred_check_branch
        %430 = sbr.rel (%p428) target = $region48
      $region47: #{_lambda_.3} parent=11 // pred_region
        _
      $region48: #{_lambda_.3} parent=11 // pred_fallthru
        _
      // Predicated region
      $region49: #{_lambda_.3} parent=11 // pred_check
        %p431 = pneg %p258
      $region50: #{_lambda_.3} parent=11 // pred_check_branch
        %433 = sbr.rel (%p431) target = $region52
      $region51: #{_lambda_.3} parent=11 // pred_region
        _
      $region52: #{_lambda_.3} parent=11 // pred_fallthru
        _
      // Predicated region
      $region53: #{_lambda_.3} parent=11 // pred_check
        %p434 = pneg %p279
      $region54: #{_lambda_.3} parent=11 // pred_check_branch
        %436 = sbr.rel (%p434) target = $region56
      $region55: #{_lambda_.3} parent=11 // pred_region
        _
      $region56: #{_lambda_.3} parent=11 // pred_fallthru
        _
      // Predicated region
      $region57: #{_lambda_.3} parent=11 // pred_check
        %p437 = pneg %p300
      $region58: #{_lambda_.3} parent=11 // pred_check_branch
        %439 = sbr.rel (%p437) target = $region60
      $region59: #{_lambda_.3} parent=11 // pred_region
        _
      $region60: #{_lambda_.3} parent=11 // pred_fallthru
        _
      // Predicated region
      $region61: #{_lambda_.3} parent=11 // pred_check
        %p440 = pneg %p321
      $region62: #{_lambda_.3} parent=11 // pred_check_branch
        %442 = sbr.rel (%p440) target = $region64
      $region63: #{_lambda_.3} parent=11 // pred_region
        _
      $region64: #{_lambda_.3} parent=11 // pred_fallthru
        _
      // Predicated region
      $region65: #{_lambda_.3} parent=11 // pred_check
        %p443 = pneg %p342
      $region66: #{_lambda_.3} parent=11 // pred_check_branch
        %445 = sbr.rel (%p443) target = $region68
      $region67: #{_lambda_.3} parent=11 // pred_region
        _
      $region68: #{_lambda_.3} parent=11 // pred_fallthru
        _
      // Predicated region
      $region69: #{_lambda_.3} parent=11 // pred_check
        %p446 = pneg %p363
      $region70: #{_lambda_.3} parent=11 // pred_check_branch
        %448 = sbr.rel (%p446) target = $region72
      $region71: #{_lambda_.3} parent=11 // pred_region
        _
      $region72: #{_lambda_.3} parent=11 // pred_fallthru
        _
    $region12: #{_lambda_.3} parent=5 // pred_fallthru
      _
    %p449 = scmp.lt.s32.totalorder %s22, 2
    // Predicated region
    $region73: #{_lambda_.3} parent=5 // pred_check
      %p450 = pneg %p449
    $region74: #{_lambda_.3} parent=5 // pred_check_branch
      %452 = sbr.rel (%p450) target = $region76
    $region75: #{_lambda_.3} parent=5 // pred_region
      // Predicated region
      $region77: #{_lambda_.3} parent=75 // pred_check
        %p453 = pneg %p42
      $region78: #{_lambda_.3} parent=75 // pred_check_branch
        %455 = sbr.rel (%p453) target = $region80
      $region79: #{_lambda_.3} parent=75 // pred_region
        %p456 = scmp.lt.s32.totalorder %s22, 1
        %s457 = scalar_select %p456, %s22, 1
        %s458 = smul.addr %s457, 8
        %s459 = scalar_lea.vmem %s0, %s458
      $region80: #{_lambda_.3} parent=75 // pred_fallthru
        _
    $region76: #{_lambda_.3} parent=5 // pred_fallthru
      _
    %p460 = scmp.le.s32.totalorder 1, %s22
    %p461 = scmp.lt.s32.totalorder %s22, 3
    %p462 = pnand %p460, %p461
    %p463 = pneg %p462
    // Predicated region
    $region81: #{_lambda_.3} parent=5 // pred_check
      _
    $region82: #{_lambda_.3} parent=5 // pred_check_branch
      %465 = sbr.rel (%p462) target = $region84
    $region83: #{_lambda_.3} parent=5 // pred_region
      %s466 = ssub.s32 %s22, 1
      %p467 = scmp.lt.s32.totalorder %s27, 1
      %s468 = scalar_select %p467, %s27, 1
      %s469 = smul.addr %s468, 8
      %s470 = scalar_lea.vmem %s0, %s469
      %p471 = pneg %p48
      %p472 = pneg %p45
      %p473 = pneg %p69
      %p474 = pneg %p66
      %p475 = pneg %p90
      %p476 = pneg %p87
      %p477 = pneg %p111
      %p478 = pneg %p108
      %p479 = pneg %p132
      %p480 = pneg %p129
      %p481 = pneg %p153
      %p482 = pneg %p150
      %p483 = pneg %p174
      %p484 = pneg %p171
      %p485 = pneg %p195
      %p486 = pneg %p192
      %p487 = pneg %p216
      %p488 = pneg %p213
      %p489 = pneg %p237
      %p490 = pneg %p234
      %p491 = pneg %p258
      %p492 = pneg %p255
      %p493 = pneg %p279
      %p494 = pneg %p276
      %p495 = pneg %p300
      %p496 = pneg %p297
      %p497 = pneg %p321
      %p498 = pneg %p318
      %p499 = pneg %p342
      %p500 = pneg %p339
      %p501 = pneg %p363
      %p502 = pneg %p360
      %p503 = pneg %p389
      %p504 = pneg %p386
      %p505 = scmp.lt.s32.totalorder %s27, 1
      %s506 = scalar_select %p505, %s27, 1
      %s507 = smul.addr %s506, 8
      %s508 = scalar_lea.vmem %s16, %s507
      %p509 = scmp.lt.s32.totalorder %s27, 1
      %s510 = scalar_select %p509, %s27, 1
      %s511 = smul.addr %s510, 8
      %s512 = scalar_lea.vmem %s0, %s511
      %p513 = scmp.lt.s32.totalorder %s27, 1
      %s514 = scalar_select %p513, %s27, 1
      %s515 = smul.addr %s514, 8
      %s516 = scalar_lea.vmem %s16, %s515
      %v518 = vld [vmem:[%s512] sm:$0xff]
      %v519 = vlaneseq
      %v520 = vand.u32 %v519, 127
      %vm521 = vcmp.lt.s32.totalorder %v520, 5
      %v522 = vsel %vm521, 0.0, -1e+30
      %v523 = vld [vmem:[%s1] sm:$0x1]
      %v524 = vld [vmem:[%s2] sm:$0x1]
      %vm525 = vcmask 261120
      %v526 = vsel %vm525, %v518, 0.0
      %527 = vadd.xlane.f32.xlu0 %v526
      %v528 = vpop.xlane.xlu0 %527
      %v529 = vrcp.pop 32.0
      %v530 = vmul.f32 %v528, %v529
      %v531 = vsub.f32 %v518, %v530
      %v532 = vmul.f32 %v531, %v531
      %v533 = vsel %vm525, %v532, 0.0
      %534 = vadd.xlane.f32.xlu0 %v533
      %v535 = vpop.xlane.xlu0 %534
      %v536 = vmul.f32 %v535, %v529
      %v537 = vadd.f32 %v536, 1e-05
      %v538 = vrsqrt.pop %v537
      %v539 = vmul.f32 %v531, %v538
      %v541 = vlaneseq
      %v542 = vshrl.u32 %v541, 7
      %v543 = vsub.s32 0, %v542
      %v544 = vrot.slane %v523, %v543
      %v546 = vmul.f32 %v539, %v544
      %v548 = vlaneseq
      %v549 = vshrl.u32 %v548, 7
      %v550 = vsub.s32 0, %v549
      %v551 = vrot.slane %v524, %v550
      %v553 = vadd.f32 %v546, %v551
      %v554 = vpack.c.bf16 %v553, %v553
      %v555 = vld [vmem:[%s3] sm:$0xf]
      %v556 = vld [vmem:[%s3 + $0x4] sm:$0xf]
      %v557 = vld [vmem:[%s3 + $0x8] sm:$0xf]
      %v558 = vld [vmem:[%s3 + $0xc] sm:$0xf]
      %v563 = vunpack.c.l.b16 %v555
      %v564 = vunpack.c.l.b16 %v556
      %v565 = vunpack.c.l.b16 %v557
      %v566 = vunpack.c.l.b16 %v558
      %v567 = vpack.c.b16 %v564, %v563
      %v568 = vpack.c.b16 %v566, %v565
      %v572 = vsel %vm525, %v554, 0
      %574 = vmatprep.subr.bf16.mxu0 0
      %575 = vmatpush1.bf16.msra.mxu0 0
      %576 = vmatprep.subr.bf16.mxu0 0
      %577 = vmatpush1.bf16.msra.mxu0 0
      %578 = vmatprep.subr.bf16.mxu0 0
      %579 = vmatpush1.bf16.msra.mxu0 0
      %580 = vmatprep.subr.bf16.mxu0 0
      %581 = vmatpush1.bf16.msra.mxu0 0
      %582 = vmatprep.subr.bf16.mxu0 0
      %583 = vmatpush1.bf16.msra.mxu0 0
      %584 = vmatprep.subr.bf16.mxu0 0
      %585 = vmatpush1.bf16.msra.mxu0 0
      %586 = vmatprep.subr.bf16.mxu0 0
      %587 = vmatpush1.bf16.msra.mxu0 %v568
      %588 = vmatprep.subr.bf16.mxu0 0
      %589 = vmatpush1.bf16.msra.mxu0 %v567
      %590 = vmatprep.subr.bf16.mxu0 0
      %591 = vmatpush2.bf16.msra.mxu0 0
      %592 = vmatprep.subr.bf16.mxu0 0
      %593 = vmatpush2.bf16.msra.mxu0 0
      %594 = vmatprep.subr.bf16.mxu0 0
      %595 = vmatpush2.bf16.msra.mxu0 0
      %596 = vmatprep.subr.bf16.mxu0 0
      %597 = vmatpush2.bf16.msra.mxu0 0
      %598 = vmatprep.subr.bf16.mxu0 0
      %599 = vmatpush2.bf16.msra.mxu0 0
      %600 = vmatprep.subr.bf16.mxu0 0
      %601 = vmatpush2.bf16.msra.mxu0 0
      %602 = vmatprep.subr.bf16.mxu0 0
      %603 = vmatpush2.bf16.msra.mxu0 0
      %604 = vmatprep.subr.bf16.mxu0 0
      %605 = vmatpush2.bf16.msra.mxu0 0
      %606 = vmatprep.mubr.bf16.mxu0 0
      %607 = vmatmul.mubr.bf16.gmra.mxu0 %v572
      %v608 = vpop.f32.mrf.mxu0
      %v609 = vadd.f32 0.0, %v608
      %v610 = vpop.f32.mrf.mxu0
      %v611 = vpop.f32.mrf.mxu0
      %v612 = vpop.f32.mrf.mxu0
      %613 = vdwg.mxu0
      %v614 = vld [vmem:[%s4] sm:$0xf]
      %v615 = vld [vmem:[%s4 + $0x4] sm:$0xf]
      %v616 = vld [vmem:[%s4 + $0x8] sm:$0xf]
      %v617 = vld [vmem:[%s4 + $0xc] sm:$0xf]
      %v622 = vunpack.c.l.b16 %v614
      %v623 = vunpack.c.l.b16 %v615
      %v624 = vunpack.c.l.b16 %v616
      %v625 = vunpack.c.l.b16 %v617
      %v626 = vpack.c.b16 %v623, %v622
      %v627 = vpack.c.b16 %v625, %v624
      %630 = vmatprep.subr.bf16.mxu0 0
      %631 = vmatpush1.bf16.msra.mxu0 0
      %632 = vmatprep.subr.bf16.mxu0 0
      %633 = vmatpush1.bf16.msra.mxu0 0
      %634 = vmatprep.subr.bf16.mxu0 0
      %635 = vmatpush1.bf16.msra.mxu0 0
      %636 = vmatprep.subr.bf16.mxu0 0
      %637 = vmatpush1.bf16.msra.mxu0 0
      %638 = vmatprep.subr.bf16.mxu0 0
      %639 = vmatpush1.bf16.msra.mxu0 0
      %640 = vmatprep.subr.bf16.mxu0 0
      %641 = vmatpush1.bf16.msra.mxu0 0
      %642 = vmatprep.subr.bf16.mxu0 0
      %643 = vmatpush1.bf16.msra.mxu0 %v627
      %644 = vmatprep.subr.bf16.mxu0 0
      %645 = vmatpush1.bf16.msra.mxu0 %v626
      %646 = vmatprep.subr.bf16.mxu0 0
      %647 = vmatpush2.bf16.msra.mxu0 0
      %648 = vmatprep.subr.bf16.mxu0 0
      %649 = vmatpush2.bf16.msra.mxu0 0
      %650 = vmatprep.subr.bf16.mxu0 0
      %651 = vmatpush2.bf16.msra.mxu0 0
      %652 = vmatprep.subr.bf16.mxu0 0
      %653 = vmatpush2.bf16.msra.mxu0 0
      %654 = vmatprep.subr.bf16.mxu0 0
      %655 = vmatpush2.bf16.msra.mxu0 0
      %656 = vmatprep.subr.bf16.mxu0 0
      %657 = vmatpush2.bf16.msra.mxu0 0
      %658 = vmatprep.subr.bf16.mxu0 0
      %659 = vmatpush2.bf16.msra.mxu0 0
      %660 = vmatprep.subr.bf16.mxu0 0
      %661 = vmatpush2.bf16.msra.mxu0 0
      %662 = vmatprep.mubr.bf16.mxu0 0
      %663 = vmatmul.mubr.bf16.gmra.mxu0 %v572
      %v664 = vpop.f32.mrf.mxu0
      %v665 = vadd.f32 0.0, %v664
      %v666 = vpop.f32.mrf.mxu0
      %v667 = vpop.f32.mrf.mxu0
      %v668 = vpop.f32.mrf.mxu0
      %669 = vdwg.mxu0
      %v670 = vld [vmem:[%s5] sm:$0xf]
      %v671 = vld [vmem:[%s5 + $0x4] sm:$0xf]
      %v672 = vld [vmem:[%s5 + $0x8] sm:$0xf]
      %v673 = vld [vmem:[%s5 + $0xc] sm:$0xf]
      %v678 = vunpack.c.l.b16 %v670
      %v679 = vunpack.c.l.b16 %v671
      %v680 = vunpack.c.l.b16 %v672
      %v681 = vunpack.c.l.b16 %v673
      %v682 = vpack.c.b16 %v679, %v678
      %v683 = vpack.c.b16 %v681, %v680
      %686 = vmatprep.subr.bf16.mxu0 0
      %687 = vmatpush1.bf16.msra.mxu0 0
      %688 = vmatprep.subr.bf16.mxu0 0
      %689 = vmatpush1.bf16.msra.mxu0 0
      %690 = vmatprep.subr.bf16.mxu0 0
      %691 = vmatpush1.bf16.msra.mxu0 0
      %692 = vmatprep.subr.bf16.mxu0 0
      %693 = vmatpush1.bf16.msra.mxu0 0
      %694 = vmatprep.subr.bf16.mxu0 0
      %695 = vmatpush1.bf16.msra.mxu0 0
      %696 = vmatprep.subr.bf16.mxu0 0
      %697 = vmatpush1.bf16.msra.mxu0 0
      %698 = vmatprep.subr.bf16.mxu0 0
      %699 = vmatpush1.bf16.msra.mxu0 %v683
      %700 = vmatprep.subr.bf16.mxu0 0
      %701 = vmatpush1.bf16.msra.mxu0 %v682
      %702 = vmatprep.subr.bf16.mxu0 0
      %703 = vmatpush2.bf16.msra.mxu0 0
      %704 = vmatprep.subr.bf16.mxu0 0
      %705 = vmatpush2.bf16.msra.mxu0 0
      %706 = vmatprep.subr.bf16.mxu0 0
      %707 = vmatpush2.bf16.msra.mxu0 0
      %708 = vmatprep.subr.bf16.mxu0 0
      %709 = vmatpush2.bf16.msra.mxu0 0
      %710 = vmatprep.subr.bf16.mxu0 0
      %711 = vmatpush2.bf16.msra.mxu0 0
      %712 = vmatprep.subr.bf16.mxu0 0
      %713 = vmatpush2.bf16.msra.mxu0 0
      %714 = vmatprep.subr.bf16.mxu0 0
      %715 = vmatpush2.bf16.msra.mxu0 0
      %716 = vmatprep.subr.bf16.mxu0 0
      %717 = vmatpush2.bf16.msra.mxu0 0
      %718 = vmatprep.mubr.bf16.mxu0 0
      %719 = vmatmul.mubr.bf16.gmra.mxu0 %v572
      %v720 = vpop.f32.mrf.mxu0
      %v721 = vadd.f32 0.0, %v720
      %v722 = vpop.f32.mrf.mxu0
      %v723 = vpop.f32.mrf.mxu0
      %v724 = vpop.f32.mrf.mxu0
      %725 = vdwg.mxu0
      %v726 = vpack.c.bf16 %v609, %v609
      %v727 = vpack.c.bf16 %v665, %v665
      %v728 = vpack.c.bf16 %v721, %v721
      %vm729 = vcmask 130048
      %v731 = vsel %vm729, %v726, 0
      %v734 = vsel %vm729, %v727, 0
      %736 = vmatprep.subr.bf16.mxu0 0
      %737 = vmatpush1.bf16.xpose.msra.mxu0 0
      %738 = vmatprep.subr.bf16.mxu0 0
      %739 = vmatpush1.bf16.xpose.msra.mxu0 0
      %740 = vmatprep.subr.bf16.mxu0 0
      %741 = vmatpush1.bf16.xpose.msra.mxu0 0
      %742 = vmatprep.subr.bf16.mxu0 0
      %743 = vmatpush1.bf16.xpose.msra.mxu0 0
      %744 = vmatprep.subr.bf16.mxu0 0
      %745 = vmatpush1.bf16.xpose.msra.mxu0 0
      %746 = vmatprep.subr.bf16.mxu0 0
      %747 = vmatpush1.bf16.xpose.msra.mxu0 0
      %748 = vmatprep.subr.bf16.mxu0 0
      %749 = vmatpush1.bf16.xpose.msra.mxu0 0
      %750 = vmatprep.subr.bf16.mxu0 0
      %751 = vmatpush1.bf16.xpose.msra.mxu0 %v734
      %752 = vmatprep.subr.bf16.mxu0 0
      %753 = vmatpush2.bf16.xpose.msra.mxu0 0
      %754 = vmatprep.subr.bf16.mxu0 0
      %755 = vmatpush2.bf16.xpose.msra.mxu0 0
      %756 = vmatprep.subr.bf16.mxu0 0
      %757 = vmatpush2.bf16.xpose.msra.mxu0 0
      %758 = vmatprep.subr.bf16.mxu0 0
      %759 = vmatpush2.bf16.xpose.msra.mxu0 0
      %760 = vmatprep.subr.bf16.mxu0 0
      %761 = vmatpush2.bf16.xpose.msra.mxu0 0
      %762 = vmatprep.subr.bf16.mxu0 0
      %763 = vmatpush2.bf16.xpose.msra.mxu0 0
      %764 = vmatprep.subr.bf16.mxu0 0
      %765 = vmatpush2.bf16.xpose.msra.mxu0 0
      %766 = vmatprep.subr.bf16.mxu0 0
      %767 = vmatpush2.bf16.xpose.msra.mxu0 0
      %768 = vmatprep.mubr.bf16.mxu0 0
      %769 = vmatmul.mubr.bf16.gmra.mxu0 %v731
      %v770 = vpop.f32.mrf.mxu0
      %v771 = vadd.f32 %v522, %v770
      %v772 = vpop.f32.mrf.mxu0
      %v773 = vpop.f32.mrf.mxu0
      %v774 = vpop.f32.mrf.mxu0
      %775 = vdwg.mxu0
      %vm776 = vcmask 64512
      %v777 = vsel %vm776, %v771, -inf
      %778 = vmax.xlane.f32.xlu0 %v777
      %v779 = vpop.xlane.xlu0 %778
      %v780 = vsub.f32 %v771, %v779
      %v781 = vmul.f32 %v780, 1.442695
      %v782 = vpow.pop %v781
      %v783 = vsel %vm776, %v782, 0.0
      %784 = vadd.xlane.f32.xlu0 %v783
      %v785 = vpop.xlane.xlu0 %784
      %v786 = vrcp.pop %v785
      %v787 = vmul.f32 %v782, %v786
      %v788 = vpack.c.bf16 %v787, %v787
      %v790 = vsel %vm776, %v788, 0
      %vm792 = vcmask 1043456
      %v794 = vsel %vm792, %v728, 0
      %796 = vmatprep.subr.bf16.mxu0 0
      %797 = vmatpush1.bf16.msra.mxu0 0
      %798 = vmatprep.subr.bf16.mxu0 0
      %799 = vmatpush1.bf16.msra.mxu0 0
      %800 = vmatprep.subr.bf16.mxu0 0
      %801 = vmatpush1.bf16.msra.mxu0 0
      %802 = vmatprep.subr.bf16.mxu0 0
      %803 = vmatpush1.bf16.msra.mxu0 0
      %804 = vmatprep.subr.bf16.mxu0 0
      %805 = vmatpush1.bf16.msra.mxu0 0
      %806 = vmatprep.subr.bf16.mxu0 0
      %807 = vmatpush1.bf16.msra.mxu0 0
      %808 = vmatprep.subr.bf16.mxu0 0
      %809 = vmatpush1.bf16.msra.mxu0 0
      %810 = vmatprep.subr.bf16.mxu0 0
      %811 = vmatpush1.bf16.msra.mxu0 %v794
      %812 = vmatprep.subr.bf16.mxu0 0
      %813 = vmatpush2.bf16.msra.mxu0 0
      %814 = vmatprep.subr.bf16.mxu0 0
      %815 = vmatpush2.bf16.msra.mxu0 0
      %816 = vmatprep.subr.bf16.mxu0 0
      %817 = vmatpush2.bf16.msra.mxu0 0
      %818 = vmatprep.subr.bf16.mxu0 0
      %819 = vmatpush2.bf16.msra.mxu0 0
      %820 = vmatprep.subr.bf16.mxu0 0
      %821 = vmatpush2.bf16.msra.mxu0 0
      %822 = vmatprep.subr.bf16.mxu0 0
      %823 = vmatpush2.bf16.msra.mxu0 0
      %824 = vmatprep.subr.bf16.mxu0 0
      %825 = vmatpush2.bf16.msra.mxu0 0
      %826 = vmatprep.subr.bf16.mxu0 0
      %827 = vmatpush2.bf16.msra.mxu0 0
      %828 = vmatprep.mubr.bf16.mxu0 0
      %829 = vmatmul.mubr.bf16.gmra.mxu0 %v790
      %v830 = vpop.f32.mrf.mxu0
      %v831 = vadd.f32 0.0, %v830
      %v832 = vpop.f32.mrf.mxu0
      %v833 = vpop.f32.mrf.mxu0
      %v834 = vpop.f32.mrf.mxu0
      %835 = vdwg.mxu0
      %837 = vrot.lane.b32.xlu0 %v726, 112
      %v838 = vpop.permute.xlu0 %837
      %840 = vrot.lane.b32.xlu0 %v727, 112
      %v841 = vpop.permute.xlu0 %840
      %v843 = vsel %vm729, %v838, 0
      %v846 = vsel %vm729, %v841, 0
      %848 = vmatprep.subr.bf16.mxu0 0
      %849 = vmatpush1.bf16.xpose.msra.mxu0 0
      %850 = vmatprep.subr.bf16.mxu0 0
      %851 = vmatpush1.bf16.xpose.msra.mxu0 0
      %852 = vmatprep.subr.bf16.mxu0 0
      %853 = vmatpush1.bf16.xpose.msra.mxu0 0
      %854 = vmatprep.subr.bf16.mxu0 0
      %855 = vmatpush1.bf16.xpose.msra.mxu0 0
      %856 = vmatprep.subr.bf16.mxu0 0
      %857 = vmatpush1.bf16.xpose.msra.mxu0 0
      %858 = vmatprep.subr.bf16.mxu0 0
      %859 = vmatpush1.bf16.xpose.msra.mxu0 0
      %860 = vmatprep.subr.bf16.mxu0 0
      %861 = vmatpush1.bf16.xpose.msra.mxu0 0
      %862 = vmatprep.subr.bf16.mxu0 0
      %863 = vmatpush1.bf16.xpose.msra.mxu0 %v846
      %864 = vmatprep.subr.bf16.mxu0 0
      %865 = vmatpush2.bf16.xpose.msra.mxu0 0
      %866 = vmatprep.subr.bf16.mxu0 0
      %867 = vmatpush2.bf16.xpose.msra.mxu0 0
      %868 = vmatprep.subr.bf16.mxu0 0
      %869 = vmatpush2.bf16.xpose.msra.mxu0 0
      %870 = vmatprep.subr.bf16.mxu0 0
      %871 = vmatpush2.bf16.xpose.msra.mxu0 0
      %872 = vmatprep.subr.bf16.mxu0 0
      %873 = vmatpush2.bf16.xpose.msra.mxu0 0
      %874 = vmatprep.subr.bf16.mxu0 0
      %875 = vmatpush2.bf16.xpose.msra.mxu0 0
      %876 = vmatprep.subr.bf16.mxu0 0
      %877 = vmatpush2.bf16.xpose.msra.mxu0 0
      %878 = vmatprep.subr.bf16.mxu0 0
      %879 = vmatpush2.bf16.xpose.msra.mxu0 0
      %880 = vmatprep.mubr.bf16.mxu0 0
      %881 = vmatmul.mubr.bf16.gmra.mxu0 %v843
      %v882 = vpop.f32.mrf.mxu0
      %v883 = vadd.f32 %v522, %v882
      %v884 = vpop.f32.mrf.mxu0
      %v885 = vpop.f32.mrf.mxu0
      %v886 = vpop.f32.mrf.mxu0
      %887 = vdwg.mxu0
      %v888 = vsel %vm776, %v883, -inf
      %889 = vmax.xlane.f32.xlu0 %v888
      %v890 = vpop.xlane.xlu0 %889
      %v891 = vsub.f32 %v883, %v890
      %v892 = vmul.f32 %v891, 1.442695
      %v893 = vpow.pop %v892
      %v894 = vsel %vm776, %v893, 0.0
      %895 = vadd.xlane.f32.xlu0 %v894
      %v896 = vpop.xlane.xlu0 %895
      %v897 = vrcp.pop %v896
      %v898 = vmul.f32 %v893, %v897
      %v899 = vpack.c.bf16 %v898, %v898
      %901 = vrot.lane.b32.xlu0 %v728, 112
      %v902 = vpop.permute.xlu0 %901
      %v904 = vsel %vm776, %v899, 0
      %v907 = vsel %vm792, %v902, 0
      %909 = vmatprep.subr.bf16.mxu0 0
      %910 = vmatpush1.bf16.msra.mxu0 0
      %911 = vmatprep.subr.bf16.mxu0 0
      %912 = vmatpush1.bf16.msra.mxu0 0
      %913 = vmatprep.subr.bf16.mxu0 0
      %914 = vmatpush1.bf16.msra.mxu0 0
      %915 = vmatprep.subr.bf16.mxu0 0
      %916 = vmatpush1.bf16.msra.mxu0 0
      %917 = vmatprep.subr.bf16.mxu0 0
      %918 = vmatpush1.bf16.msra.mxu0 0
      %919 = vmatprep.subr.bf16.mxu0 0
      %920 = vmatpush1.bf16.msra.mxu0 0
      %921 = vmatprep.subr.bf16.mxu0 0
      %922 = vmatpush1.bf16.msra.mxu0 0
      %923 = vmatprep.subr.bf16.mxu0 0
      %924 = vmatpush1.bf16.msra.mxu0 %v907
      %925 = vmatprep.subr.bf16.mxu0 0
      %926 = vmatpush2.bf16.msra.mxu0 0
      %927 = vmatprep.subr.bf16.mxu0 0
      %928 = vmatpush2.bf16.msra.mxu0 0
      %929 = vmatprep.subr.bf16.mxu0 0
      %930 = vmatpush2.bf16.msra.mxu0 0
      %931 = vmatprep.subr.bf16.mxu0 0
      %932 = vmatpush2.bf16.msra.mxu0 0
      %933 = vmatprep.subr.bf16.mxu0 0
      %934 = vmatpush2.bf16.msra.mxu0 0
      %935 = vmatprep.subr.bf16.mxu0 0
      %936 = vmatpush2.bf16.msra.mxu0 0
      %937 = vmatprep.subr.bf16.mxu0 0
      %938 = vmatpush2.bf16.msra.mxu0 0
      %939 = vmatprep.subr.bf16.mxu0 0
      %940 = vmatpush2.bf16.msra.mxu0 0
      %941 = vmatprep.mubr.bf16.mxu0 0
      %942 = vmatmul.mubr.bf16.gmra.mxu0 %v904
      %v943 = vpop.f32.mrf.mxu0
      %v944 = vadd.f32 0.0, %v943
      %v945 = vpop.f32.mrf.mxu0
      %v946 = vpop.f32.mrf.mxu0
      %v947 = vpop.f32.mrf.mxu0
      %948 = vdwg.mxu0
      %950 = vrot.lane.b32.xlu0 %v944, 16
      %v951 = vpop.permute.xlu0 %950
      %v953 = vsel %vm729, %v831, %v951
      %v954 = vpack.c.bf16 %v953, %v953
      %v955 = vld [vmem:[%s6] sm:$0xf]
      %v956 = vld [vmem:[%s6 + $0x4] sm:$0xf]
      %v957 = vld [vmem:[%s6 + $0x8] sm:$0xf]
      %v958 = vld [vmem:[%s6 + $0xc] sm:$0xf]
      %v963 = vunpack.c.l.b16 %v955
      %v964 = vunpack.c.l.b16 %v956
      %v965 = vunpack.c.l.b16 %v957
      %v966 = vunpack.c.l.b16 %v958
      %v967 = vpack.c.b16 %v964, %v963
      %v968 = vpack.c.b16 %v966, %v965
      %v972 = vsel %vm525, %v954, 0
      %974 = vmatprep.subr.bf16.mxu0 0
      %975 = vmatpush1.bf16.msra.mxu0 0
      %976 = vmatprep.subr.bf16.mxu0 0
      %977 = vmatpush1.bf16.msra.mxu0 0
      %978 = vmatprep.subr.bf16.mxu0 0
      %979 = vmatpush1.bf16.msra.mxu0 0
      %980 = vmatprep.subr.bf16.mxu0 0
      %981 = vmatpush1.bf16.msra.mxu0 0
      %982 = vmatprep.subr.bf16.mxu0 0
      %983 = vmatpush1.bf16.msra.mxu0 0
      %984 = vmatprep.subr.bf16.mxu0 0
      %985 = vmatpush1.bf16.msra.mxu0 0
      %986 = vmatprep.subr.bf16.mxu0 0
      %987 = vmatpush1.bf16.msra.mxu0 %v968
      %988 = vmatprep.subr.bf16.mxu0 0
      %989 = vmatpush1.bf16.msra.mxu0 %v967
      %990 = vmatprep.subr.bf16.mxu0 0
      %991 = vmatpush2.bf16.msra.mxu0 0
      %992 = vmatprep.subr.bf16.mxu0 0
      %993 = vmatpush2.bf16.msra.mxu0 0
      %994 = vmatprep.subr.bf16.mxu0 0
      %995 = vmatpush2.bf16.msra.mxu0 0
      %996 = vmatprep.subr.bf16.mxu0 0
      %997 = vmatpush2.bf16.msra.mxu0 0
      %998 = vmatprep.subr.bf16.mxu0 0
      %999 = vmatpush2.bf16.msra.mxu0 0
      %1000 = vmatprep.subr.bf16.mxu0 0
      %1001 = vmatpush2.bf16.msra.mxu0 0
      %1002 = vmatprep.subr.bf16.mxu0 0
      %1003 = vmatpush2.bf16.msra.mxu0 0
      %1004 = vmatprep.subr.bf16.mxu0 0
      %1005 = vmatpush2.bf16.msra.mxu0 0
      %1006 = vmatprep.mubr.bf16.mxu0 0
      %1007 = vmatmul.mubr.bf16.gmra.mxu0 %v972
      %v1008 = vpop.f32.mrf.mxu0
      %v1009 = vadd.f32 0.0, %v1008
      %v1010 = vpop.f32.mrf.mxu0
      %v1011 = vpop.f32.mrf.mxu0
      %v1012 = vpop.f32.mrf.mxu0
      %1013 = vdwg.mxu0
      %v1014 = vadd.f32 %v518, %v1009
      %v1015 = vld [vmem:[%s7] sm:$0x1]
      %v1017 = vlaneseq
      %v1018 = vshrl.u32 %v1017, 7
      %v1019 = vsub.s32 0, %v1018
      %v1020 = vrot.slane %v1015, %v1019
      %v1022 = vadd.f32 %v1014, %v1020
      %v1023 = vld [vmem:[%s8] sm:$0x1]
      %v1024 = vld [vmem:[%s9] sm:$0x1]
      %v1025 = vsel %vm525, %v1022, 0.0
      %1026 = vadd.xlane.f32.xlu0 %v1025
      %v1027 = vpop.xlane.xlu0 %1026
      %v1028 = vmul.f32 %v1027, %v529
      %v1029 = vsub.f32 %v1022, %v1028
      %v1030 = vmul.f32 %v1029, %v1029
      %v1031 = vsel %vm525, %v1030, 0.0
      %1032 = vadd.xlane.f32.xlu0 %v1031
      %v1033 = vpop.xlane.xlu0 %1032
      %v1034 = vmul.f32 %v1033, %v529
      %v1035 = vadd.f32 %v1034, 1e-05
      %v1036 = vrsqrt.pop %v1035
      %v1037 = vmul.f32 %v1029, %v1036
      %v1039 = vlaneseq
      %v1040 = vshrl.u32 %v1039, 7
      %v1041 = vsub.s32 0, %v1040
      %v1042 = vrot.slane %v1023, %v1041
      %v1044 = vmul.f32 %v1037, %v1042
      %v1046 = vlaneseq
      %v1047 = vshrl.u32 %v1046, 7
      %v1048 = vsub.s32 0, %v1047
      %v1049 = vrot.slane %v1024, %v1048
      %v1051 = vadd.f32 %v1044, %v1049
      %v1052 = vpack.c.bf16 %v1051, %v1051
      %v1053 = vld [vmem:[%s10] sm:$0xf]
      %v1054 = vld [vmem:[%s10 + $0x4] sm:$0xf]
      %v1055 = vld [vmem:[%s10 + $0x8] sm:$0xf]
      %v1056 = vld [vmem:[%s10 + $0xc] sm:$0xf]
      %v1057 = vld [vmem:[%s11] sm:$0x1]
      %v1059 = vlaneseq
      %v1060 = vshrl.u32 %v1059, 7
      %v1061 = vsub.s32 0, %v1060
      %v1062 = vrot.slane %v1057, %v1061
      %v1068 = vunpack.c.l.b16 %v1053
      %v1069 = vunpack.c.l.b16 %v1054
      %v1070 = vunpack.c.l.b16 %v1055
      %v1071 = vunpack.c.l.b16 %v1056
      %v1072 = vpack.c.b16 %v1069, %v1068
      %v1073 = vpack.c.b16 %v1071, %v1070
      %v1077 = vsel %vm525, %v1052, 0
      %1079 = vmatprep.subr.bf16.mxu0 0
      %1080 = vmatpush1.bf16.msra.mxu0 0
      %1081 = vmatprep.subr.bf16.mxu0 0
      %1082 = vmatpush1.bf16.msra.mxu0 0
      %1083 = vmatprep.subr.bf16.mxu0 0
      %1084 = vmatpush1.bf16.msra.mxu0 0
      %1085 = vmatprep.subr.bf16.mxu0 0
      %1086 = vmatpush1.bf16.msra.mxu0 0
      %1087 = vmatprep.subr.bf16.mxu0 0
      %1088 = vmatpush1.bf16.msra.mxu0 0
      %1089 = vmatprep.subr.bf16.mxu0 0
      %1090 = vmatpush1.bf16.msra.mxu0 0
      %1091 = vmatprep.subr.bf16.mxu0 0
      %1092 = vmatpush1.bf16.msra.mxu0 %v1073
      %1093 = vmatprep.subr.bf16.mxu0 0
      %1094 = vmatpush1.bf16.msra.mxu0 %v1072
      %1095 = vmatprep.subr.bf16.mxu0 0
      %1096 = vmatpush2.bf16.msra.mxu0 0
      %1097 = vmatprep.subr.bf16.mxu0 0
      %1098 = vmatpush2.bf16.msra.mxu0 0
      %1099 = vmatprep.subr.bf16.mxu0 0
      %1100 = vmatpush2.bf16.msra.mxu0 0
      %1101 = vmatprep.subr.bf16.mxu0 0
      %1102 = vmatpush2.bf16.msra.mxu0 0
      %1103 = vmatprep.subr.bf16.mxu0 0
      %1104 = vmatpush2.bf16.msra.mxu0 0
      %1105 = vmatprep.subr.bf16.mxu0 0
      %1106 = vmatpush2.bf16.msra.mxu0 0
      %1107 = vmatprep.subr.bf16.mxu0 0
      %1108 = vmatpush2.bf16.msra.mxu0 0
      %1109 = vmatprep.subr.bf16.mxu0 0
      %1110 = vmatpush2.bf16.msra.mxu0 0
      %1111 = vmatprep.mubr.bf16.mxu0 0
      %1112 = vmatmul.mubr.bf16.gmra.mxu0 %v1077
      %v1113 = vpop.f32.mrf.mxu0
      %v1114 = vadd.f32 %v1062, %v1113
      %v1115 = vpop.f32.mrf.mxu0
      %v1116 = vpop.f32.mrf.mxu0
      %v1117 = vpop.f32.mrf.mxu0
      %1118 = vdwg.mxu0
      %v1119 = vmul.f32 %v1114, %v1114
      %v1120 = vmul.f32 %v1114, %v1119
      %v1121 = vmul.f32 %v1120, 0.044715
      %v1122 = vadd.f32 %v1114, %v1121
      %v1123 = vmul.f32 %v1122, 0.7978846
      %v1124 = vtanh.pop %v1123
      %v1125 = vadd.f32 %v1124, 1.0
      %v1126 = vmul.f32 %v1125, 0.5
      %v1127 = vmul.f32 %v1114, %v1126
      %v1128 = vpack.c.bf16 %v1127, %v1127
      %v1129 = vld [vmem:[%s12] sm:$0xf]
      %v1130 = vld [vmem:[%s12 + $0x4] sm:$0xf]
      %v1131 = vld [vmem:[%s12 + $0x8] sm:$0xf]
      %v1132 = vld [vmem:[%s12 + $0xc] sm:$0xf]
      %v1133 = vld [vmem:[%s12 + $0x10] sm:$0xf]
      %v1134 = vld [vmem:[%s12 + $0x14] sm:$0xf]
      %v1135 = vld [vmem:[%s12 + $0x18] sm:$0xf]
      %v1136 = vld [vmem:[%s12 + $0x1c] sm:$0xf]
      %v1145 = vunpack.c.l.b16 %v1129
      %v1146 = vunpack.c.l.b16 %v1130
      %v1147 = vunpack.c.l.b16 %v1131
      %v1148 = vunpack.c.l.b16 %v1132
      %v1149 = vunpack.c.l.b16 %v1133
      %v1150 = vunpack.c.l.b16 %v1134
      %v1151 = vunpack.c.l.b16 %v1135
      %v1152 = vunpack.c.l.b16 %v1136
      %v1153 = vpack.c.b16 %v1146, %v1145
      %v1154 = vpack.c.b16 %v1148, %v1147
      %v1155 = vpack.c.b16 %v1150, %v1149
      %v1156 = vpack.c.b16 %v1152, %v1151
      %vm1161 = vcmask 523264
      %v1163 = vsel %vm1161, %v1128, 0
      %1165 = vmatprep.subr.bf16.mxu0 0
      %1166 = vmatpush1.bf16.msra.mxu0 0
      %1167 = vmatprep.subr.bf16.mxu0 0
      %1168 = vmatpush1.bf16.msra.mxu0 0
      %1169 = vmatprep.subr.bf16.mxu0 0
      %1170 = vmatpush1.bf16.msra.mxu0 0
      %1171 = vmatprep.subr.bf16.mxu0 0
      %1172 = vmatpush1.bf16.msra.mxu0 0
      %1173 = vmatprep.subr.bf16.mxu0 0
      %1174 = vmatpush1.bf16.msra.mxu0 %v1156
      %1175 = vmatprep.subr.bf16.mxu0 0
      %1176 = vmatpush1.bf16.msra.mxu0 %v1155
      %1177 = vmatprep.subr.bf16.mxu0 0
      %1178 = vmatpush1.bf16.msra.mxu0 %v1154
      %1179 = vmatprep.subr.bf16.mxu0 0
      %1180 = vmatpush1.bf16.msra.mxu0 %v1153
      %1181 = vmatprep.subr.bf16.mxu0 0
      %1182 = vmatpush2.bf16.msra.mxu0 0
      %1183 = vmatprep.subr.bf16.mxu0 0
      %1184 = vmatpush2.bf16.msra.mxu0 0
      %1185 = vmatprep.subr.bf16.mxu0 0
      %1186 = vmatpush2.bf16.msra.mxu0 0
      %1187 = vmatprep.subr.bf16.mxu0 0
      %1188 = vmatpush2.bf16.msra.mxu0 0
      %1189 = vmatprep.subr.bf16.mxu0 0
      %1190 = vmatpush2.bf16.msra.mxu0 0
      %1191 = vmatprep.subr.bf16.mxu0 0
      %1192 = vmatpush2.bf16.msra.mxu0 0
      %1193 = vmatprep.subr.bf16.mxu0 0
      %1194 = vmatpush2.bf16.msra.mxu0 0
      %1195 = vmatprep.subr.bf16.mxu0 0
      %1196 = vmatpush2.bf16.msra.mxu0 0
      %1197 = vmatprep.mubr.bf16.mxu0 0
      %1198 = vmatmul.mubr.bf16.gmra.mxu0 %v1163
      %v1199 = vpop.f32.mrf.mxu0
      %v1200 = vadd.f32 0.0, %v1199
      %v1201 = vpop.f32.mrf.mxu0
      %v1202 = vpop.f32.mrf.mxu0
      %v1203 = vpop.f32.mrf.mxu0
      %1204 = vdwg.mxu0
      %v1205 = vadd.f32 %v1022, %v1200
      %v1206 = vld [vmem:[%s13] sm:$0x1]
      %v1208 = vlaneseq
      %v1209 = vshrl.u32 %v1208, 7
      %v1210 = vsub.s32 0, %v1209
      %v1211 = vrot.slane %v1206, %v1210
      %v1213 = vadd.f32 %v1205, %v1211
      %s1214 = scalar_lea.vmem %s1, 1
      %v1215 = vld [vmem:[%s1214] sm:$0x1]
      %s1216 = scalar_lea.vmem %s2, 1
      %v1217 = vld [vmem:[%s1216] sm:$0x1]
      %v1218 = vsel %vm525, %v1213, 0.0
      %1219 = vadd.xlane.f32.xlu0 %v1218
      %v1220 = vpop.xlane.xlu0 %1219
      %v1221 = vmul.f32 %v1220, %v529
      %v1222 = vsub.f32 %v1213, %v1221
      %v1223 = vmul.f32 %v1222, %v1222
      %v1224 = vsel %vm525, %v1223, 0.0
      %1225 = vadd.xlane.f32.xlu0 %v1224
      %v1226 = vpop.xlane.xlu0 %1225
      %v1227 = vmul.f32 %v1226, %v529
      %v1228 = vadd.f32 %v1227, 1e-05
      %v1229 = vrsqrt.pop %v1228
      %v1230 = vmul.f32 %v1222, %v1229
      %v1232 = vlaneseq
      %v1233 = vshrl.u32 %v1232, 7
      %v1234 = vsub.s32 0, %v1233
      %v1235 = vrot.slane %v1215, %v1234
      %v1237 = vmul.f32 %v1230, %v1235
      %v1239 = vlaneseq
      %v1240 = vshrl.u32 %v1239, 7
      %v1241 = vsub.s32 0, %v1240
      %v1242 = vrot.slane %v1217, %v1241
      %v1244 = vadd.f32 %v1237, %v1242
      %v1245 = vpack.c.bf16 %v1244, %v1244
      %s1246 = scalar_lea.vmem %s3, 16
      %v1247 = vld [vmem:[%s1246] sm:$0xf]
      %v1248 = vld [vmem:[%s1246 + $0x4] sm:$0xf]
      %v1249 = vld [vmem:[%s1246 + $0x8] sm:$0xf]
      %v1250 = vld [vmem:[%s1246 + $0xc] sm:$0xf]
      %v1255 = vunpack.c.l.b16 %v1247
      %v1256 = vunpack.c.l.b16 %v1248
      %v1257 = vunpack.c.l.b16 %v1249
      %v1258 = vunpack.c.l.b16 %v1250
      %v1259 = vpack.c.b16 %v1256, %v1255
      %v1260 = vpack.c.b16 %v1258, %v1257
      %v1264 = vsel %vm525, %v1245, 0
      %1266 = vmatprep.subr.bf16.mxu0 0
      %1267 = vmatpush1.bf16.msra.mxu0 0
      %1268 = vmatprep.subr.bf16.mxu0 0
      %1269 = vmatpush1.bf16.msra.mxu0 0
      %1270 = vmatprep.subr.bf16.mxu0 0
      %1271 = vmatpush1.bf16.msra.mxu0 0
      %1272 = vmatprep.subr.bf16.mxu0 0
      %1273 = vmatpush1.bf16.msra.mxu0 0
      %1274 = vmatprep.subr.bf16.mxu0 0
      %1275 = vmatpush1.bf16.msra.mxu0 0
      %1276 = vmatprep.subr.bf16.mxu0 0
      %1277 = vmatpush1.bf16.msra.mxu0 0
      %1278 = vmatprep.subr.bf16.mxu0 0
      %1279 = vmatpush1.bf16.msra.mxu0 %v1260
      %1280 = vmatprep.subr.bf16.mxu0 0
      %1281 = vmatpush1.bf16.msra.mxu0 %v1259
      %1282 = vmatprep.subr.bf16.mxu0 0
      %1283 = vmatpush2.bf16.msra.mxu0 0
      %1284 = vmatprep.subr.bf16.mxu0 0
      %1285 = vmatpush2.bf16.msra.mxu0 0
      %1286 = vmatprep.subr.bf16.mxu0 0
      %1287 = vmatpush2.bf16.msra.mxu0 0
      %1288 = vmatprep.subr.bf16.mxu0 0
      %1289 = vmatpush2.bf16.msra.mxu0 0
      %1290 = vmatprep.subr.bf16.mxu0 0
      %1291 = vmatpush2.bf16.msra.mxu0 0
      %1292 = vmatprep.subr.bf16.mxu0 0
      %1293 = vmatpush2.bf16.msra.mxu0 0
      %1294 = vmatprep.subr.bf16.mxu0 0
      %1295 = vmatpush2.bf16.msra.mxu0 0
      %1296 = vmatprep.subr.bf16.mxu0 0
      %1297 = vmatpush2.bf16.msra.mxu0 0
      %1298 = vmatprep.mubr.bf16.mxu0 0
      %1299 = vmatmul.mubr.bf16.gmra.mxu0 %v1264
      %v1300 = vpop.f32.mrf.mxu0
      %v1301 = vadd.f32 0.0, %v1300
      %v1302 = vpop.f32.mrf.mxu0
      %v1303 = vpop.f32.mrf.mxu0
      %v1304 = vpop.f32.mrf.mxu0
      %1305 = vdwg.mxu0
      %s1306 = scalar_lea.vmem %s4, 16
      %v1307 = vld [vmem:[%s1306] sm:$0xf]
      %v1308 = vld [vmem:[%s1306 + $0x4] sm:$0xf]
      %v1309 = vld [vmem:[%s1306 + $0x8] sm:$0xf]
      %v1310 = vld [vmem:[%s1306 + $0xc] sm:$0xf]
      %v1315 = vunpack.c.l.b16 %v1307
      %v1316 = vunpack.c.l.b16 %v1308
      %v1317 = vunpack.c.l.b16 %v1309
      %v1318 = vunpack.c.l.b16 %v1310
      %v1319 = vpack.c.b16 %v1316, %v1315
      %v1320 = vpack.c.b16 %v1318, %v1317
      %1323 = vmatprep.subr.bf16.mxu0 0
      %1324 = vmatpush1.bf16.msra.mxu0 0
      %1325 = vmatprep.subr.bf16.mxu0 0
      %1326 = vmatpush1.bf16.msra.mxu0 0
      %1327 = vmatprep.subr.bf16.mxu0 0
      %1328 = vmatpush1.bf16.msra.mxu0 0
      %1329 = vmatprep.subr.bf16.mxu0 0
      %1330 = vmatpush1.bf16.msra.mxu0 0
      %1331 = vmatprep.subr.bf16.mxu0 0
      %1332 = vmatpush1.bf16.msra.mxu0 0
      %1333 = vmatprep.subr.bf16.mxu0 0
      %1334 = vmatpush1.bf16.msra.mxu0 0
      %1335 = vmatprep.subr.bf16.mxu0 0
      %1336 = vmatpush1.bf16.msra.mxu0 %v1320
      %1337 = vmatprep.subr.bf16.mxu0 0
      %1338 = vmatpush1.bf16.msra.mxu0 %v1319
      %1339 = vmatprep.subr.bf16.mxu0 0
      %1340 = vmatpush2.bf16.msra.mxu0 0
      %1341 = vmatprep.subr.bf16.mxu0 0
      %1342 = vmatpush2.bf16.msra.mxu0 0
      %1343 = vmatprep.subr.bf16.mxu0 0
      %1344 = vmatpush2.bf16.msra.mxu0 0
      %1345 = vmatprep.subr.bf16.mxu0 0
      %1346 = vmatpush2.bf16.msra.mxu0 0
      %1347 = vmatprep.subr.bf16.mxu0 0
      %1348 = vmatpush2.bf16.msra.mxu0 0
      %1349 = vmatprep.subr.bf16.mxu0 0
      %1350 = vmatpush2.bf16.msra.mxu0 0
      %1351 = vmatprep.subr.bf16.mxu0 0
      %1352 = vmatpush2.bf16.msra.mxu0 0
      %1353 = vmatprep.subr.bf16.mxu0 0
      %1354 = vmatpush2.bf16.msra.mxu0 0
      %1355 = vmatprep.mubr.bf16.mxu0 0
      %1356 = vmatmul.mubr.bf16.gmra.mxu0 %v1264
      %v1357 = vpop.f32.mrf.mxu0
      %v1358 = vadd.f32 0.0, %v1357
      %v1359 = vpop.f32.mrf.mxu0
      %v1360 = vpop.f32.mrf.mxu0
      %v1361 = vpop.f32.mrf.mxu0
      %1362 = vdwg.mxu0
      %s1363 = scalar_lea.vmem %s5, 16
      %v1364 = vld [vmem:[%s1363] sm:$0xf]
      %v1365 = vld [vmem:[%s1363 + $0x4] sm:$0xf]
      %v1366 = vld [vmem:[%s1363 + $0x8] sm:$0xf]
      %v1367 = vld [vmem:[%s1363 + $0xc] sm:$0xf]
      %v1372 = vunpack.c.l.b16 %v1364
      %v1373 = vunpack.c.l.b16 %v1365
      %v1374 = vunpack.c.l.b16 %v1366
      %v1375 = vunpack.c.l.b16 %v1367
      %v1376 = vpack.c.b16 %v1373, %v1372
      %v1377 = vpack.c.b16 %v1375, %v1374
      %1380 = vmatprep.subr.bf16.mxu0 0
      %1381 = vmatpush1.bf16.msra.mxu0 0
      %1382 = vmatprep.subr.bf16.mxu0 0
      %1383 = vmatpush1.bf16.msra.mxu0 0
      %1384 = vmatprep.subr.bf16.mxu0 0
      %1385 = vmatpush1.bf16.msra.mxu0 0
      %1386 = vmatprep.subr.bf16.mxu0 0
      %1387 = vmatpush1.bf16.msra.mxu0 0
      %1388 = vmatprep.subr.bf16.mxu0 0
      %1389 = vmatpush1.bf16.msra.mxu0 0
      %1390 = vmatprep.subr.bf16.mxu0 0
      %1391 = vmatpush1.bf16.msra.mxu0 0
      %1392 = vmatprep.subr.bf16.mxu0 0
      %1393 = vmatpush1.bf16.msra.mxu0 %v1377
      %1394 = vmatprep.subr.bf16.mxu0 0
      %1395 = vmatpush1.bf16.msra.mxu0 %v1376
      %1396 = vmatprep.subr.bf16.mxu0 0
      %1397 = vmatpush2.bf16.msra.mxu0 0
      %1398 = vmatprep.subr.bf16.mxu0 0
      %1399 = vmatpush2.bf16.msra.mxu0 0
      %1400 = vmatprep.subr.bf16.mxu0 0
      %1401 = vmatpush2.bf16.msra.mxu0 0
      %1402 = vmatprep.subr.bf16.mxu0 0
      %1403 = vmatpush2.bf16.msra.mxu0 0
      %1404 = vmatprep.subr.bf16.mxu0 0
      %1405 = vmatpush2.bf16.msra.mxu0 0
      %1406 = vmatprep.subr.bf16.mxu0 0
      %1407 = vmatpush2.bf16.msra.mxu0 0
      %1408 = vmatprep.subr.bf16.mxu0 0
      %1409 = vmatpush2.bf16.msra.mxu0 0
      %1410 = vmatprep.subr.bf16.mxu0 0
      %1411 = vmatpush2.bf16.msra.mxu0 0
      %1412 = vmatprep.mubr.bf16.mxu0 0
      %1413 = vmatmul.mubr.bf16.gmra.mxu0 %v1264
      %v1414 = vpop.f32.mrf.mxu0
      %v1415 = vadd.f32 0.0, %v1414
      %v1416 = vpop.f32.mrf.mxu0
      %v1417 = vpop.f32.mrf.mxu0
      %v1418 = vpop.f32.mrf.mxu0
      %1419 = vdwg.mxu0
      %v1420 = vpack.c.bf16 %v1301, %v1301
      %v1421 = vpack.c.bf16 %v1358, %v1358
      %v1422 = vpack.c.bf16 %v1415, %v1415
      %v1424 = vsel %vm729, %v1420, 0
      %v1427 = vsel %vm729, %v1421, 0
      %1429 = vmatprep.subr.bf16.mxu0 0
      %1430 = vmatpush1.bf16.xpose.msra.mxu0 0
      %1431 = vmatprep.subr.bf16.mxu0 0
      %1432 = vmatpush1.bf16.xpose.msra.mxu0 0
      %1433 = vmatprep.subr.bf16.mxu0 0
      %1434 = vmatpush1.bf16.xpose.msra.mxu0 0
      %1435 = vmatprep.subr.bf16.mxu0 0
      %1436 = vmatpush1.bf16.xpose.msra.mxu0 0
      %1437 = vmatprep.subr.bf16.mxu0 0
      %1438 = vmatpush1.bf16.xpose.msra.mxu0 0
      %1439 = vmatprep.subr.bf16.mxu0 0
      %1440 = vmatpush1.bf16.xpose.msra.mxu0 0
      %1441 = vmatprep.subr.bf16.mxu0 0
      %1442 = vmatpush1.bf16.xpose.msra.mxu0 0
      %1443 = vmatprep.subr.bf16.mxu0 0
      %1444 = vmatpush1.bf16.xpose.msra.mxu0 %v1427
      %1445 = vmatprep.subr.bf16.mxu0 0
      %1446 = vmatpush2.bf16.xpose.msra.mxu0 0
      %1447 = vmatprep.subr.bf16.mxu0 0
      %1448 = vmatpush2.bf16.xpose.msra.mxu0 0
      %1449 = vmatprep.subr.bf16.mxu0 0
      %1450 = vmatpush2.bf16.xpose.msra.mxu0 0
      %1451 = vmatprep.subr.bf16.mxu0 0
      %1452 = vmatpush2.bf16.xpose.msra.mxu0 0
      %1453 = vmatprep.subr.bf16.mxu0 0
      %1454 = vmatpush2.bf16.xpose.msra.mxu0 0
      %1455 = vmatprep.subr.bf16.mxu0 0
      %1456 = vmatpush2.bf16.xpose.msra.mxu0 0
      %1457 = vmatprep.subr.bf16.mxu0 0
      %1458 = vmatpush2.bf16.xpose.msra.mxu0 0
      %1459 = vmatprep.subr.bf16.mxu0 0
      %1460 = vmatpush2.bf16.xpose.msra.mxu0 0
      %1461 = vmatprep.mubr.bf16.mxu0 0
      %1462 = vmatmul.mubr.bf16.gmra.mxu0 %v1424
      %v1463 = vpop.f32.mrf.mxu0
      %v1464 = vadd.f32 %v522, %v1463
      %v1465 = vpop.f32.mrf.mxu0
      %v1466 = vpop.f32.mrf.mxu0
      %v1467 = vpop.f32.mrf.mxu0
      %1468 = vdwg.mxu0
      %v1469 = vsel %vm776, %v1464, -inf
      %1470 = vmax.xlane.f32.xlu0 %v1469
      %v1471 = vpop.xlane.xlu0 %1470
      %v1472 = vsub.f32 %v1464, %v1471
      %v1473 = vmul.f32 %v1472, 1.442695
      %v1474 = vpow.pop %v1473
      %v1475 = vsel %vm776, %v1474, 0.0
      %1476 = vadd.xlane.f32.xlu0 %v1475
      %v1477 = vpop.xlane.xlu0 %1476
      %v1478 = vrcp.pop %v1477
      %v1479 = vmul.f32 %v1474, %v1478
      %v1480 = vpack.c.bf16 %v1479, %v1479
      %v1482 = vsel %vm776, %v1480, 0
      %v1485 = vsel %vm792, %v1422, 0
      %1487 = vmatprep.subr.bf16.mxu0 0
      %1488 = vmatpush1.bf16.msra.mxu0 0
      %1489 = vmatprep.subr.bf16.mxu0 0
      %1490 = vmatpush1.bf16.msra.mxu0 0
      %1491 = vmatprep.subr.bf16.mxu0 0
      %1492 = vmatpush1.bf16.msra.mxu0 0
      %1493 = vmatprep.subr.bf16.mxu0 0
      %1494 = vmatpush1.bf16.msra.mxu0 0
      %1495 = vmatprep.subr.bf16.mxu0 0
      %1496 = vmatpush1.bf16.msra.mxu0 0
      %1497 = vmatprep.subr.bf16.mxu0 0
      %1498 = vmatpush1.bf16.msra.mxu0 0
      %1499 = vmatprep.subr.bf16.mxu0 0
      %1500 = vmatpush1.bf16.msra.mxu0 0
      %1501 = vmatprep.subr.bf16.mxu0 0
      %1502 = vmatpush1.bf16.msra.mxu0 %v1485
      %1503 = vmatprep.subr.bf16.mxu0 0
      %1504 = vmatpush2.bf16.msra.mxu0 0
      %1505 = vmatprep.subr.bf16.mxu0 0
      %1506 = vmatpush2.bf16.msra.mxu0 0
      %1507 = vmatprep.subr.bf16.mxu0 0
      %1508 = vmatpush2.bf16.msra.mxu0 0
      %1509 = vmatprep.subr.bf16.mxu0 0
      %1510 = vmatpush2.bf16.msra.mxu0 0
      %1511 = vmatprep.subr.bf16.mxu0 0
      %1512 = vmatpush2.bf16.msra.mxu0 0
      %1513 = vmatprep.subr.bf16.mxu0 0
      %1514 = vmatpush2.bf16.msra.mxu0 0
      %1515 = vmatprep.subr.bf16.mxu0 0
      %1516 = vmatpush2.bf16.msra.mxu0 0
      %1517 = vmatprep.subr.bf16.mxu0 0
      %1518 = vmatpush2.bf16.msra.mxu0 0
      %1519 = vmatprep.mubr.bf16.mxu0 0
      %1520 = vmatmul.mubr.bf16.gmra.mxu0 %v1482
      %v1521 = vpop.f32.mrf.mxu0
      %v1522 = vadd.f32 0.0, %v1521
      %v1523 = vpop.f32.mrf.mxu0
      %v1524 = vpop.f32.mrf.mxu0
      %v1525 = vpop.f32.mrf.mxu0
      %1526 = vdwg.mxu0
      %1528 = vrot.lane.b32.xlu0 %v1420, 112
      %v1529 = vpop.permute.xlu0 %1528
      %1531 = vrot.lane.b32.xlu0 %v1421, 112
      %v1532 = vpop.permute.xlu0 %1531
      %v1534 = vsel %vm729, %v1529, 0
      %v1537 = vsel %vm729, %v1532, 0
      %1539 = vmatprep.subr.bf16.mxu0 0
      %1540 = vmatpush1.bf16.xpose.msra.mxu0 0
      %1541 = vmatprep.subr.bf16.mxu0 0
      %1542 = vmatpush1.bf16.xpose.msra.mxu0 0
      %1543 = vmatprep.subr.bf16.mxu0 0
      %1544 = vmatpush1.bf16.xpose.msra.mxu0 0
      %1545 = vmatprep.subr.bf16.mxu0 0
      %1546 = vmatpush1.bf16.xpose.msra.mxu0 0
      %1547 = vmatprep.subr.bf16.mxu0 0
      %1548 = vmatpush1.bf16.xpose.msra.mxu0 0
      %1549 = vmatprep.subr.bf16.mxu0 0
      %1550 = vmatpush1.bf16.xpose.msra.mxu0 0
      %1551 = vmatprep.subr.bf16.mxu0 0
      %1552 = vmatpush1.bf16.xpose.msra.mxu0 0
      %1553 = vmatprep.subr.bf16.mxu0 0
      %1554 = vmatpush1.bf16.xpose.msra.mxu0 %v1537
      %1555 = vmatprep.subr.bf16.mxu0 0
      %1556 = vmatpush2.bf16.xpose.msra.mxu0 0
      %1557 = vmatprep.subr.bf16.mxu0 0
      %1558 = vmatpush2.bf16.xpose.msra.mxu0 0
      %1559 = vmatprep.subr.bf16.mxu0 0
      %1560 = vmatpush2.bf16.xpose.msra.mxu0 0
      %1561 = vmatprep.subr.bf16.mxu0 0
      %1562 = vmatpush2.bf16.xpose.msra.mxu0 0
      %1563 = vmatprep.subr.bf16.mxu0 0
      %1564 = vmatpush2.bf16.xpose.msra.mxu0 0
      %1565 = vmatprep.subr.bf16.mxu0 0
      %1566 = vmatpush2.bf16.xpose.msra.mxu0 0
      %1567 = vmatprep.subr.bf16.mxu0 0
      %1568 = vmatpush2.bf16.xpose.msra.mxu0 0
      %1569 = vmatprep.subr.bf16.mxu0 0
      %1570 = vmatpush2.bf16.xpose.msra.mxu0 0
      %1571 = vmatprep.mubr.bf16.mxu0 0
      %1572 = vmatmul.mubr.bf16.gmra.mxu0 %v1534
      %v1573 = vpop.f32.mrf.mxu0
      %v1574 = vadd.f32 %v522, %v1573
      %v1575 = vpop.f32.mrf.mxu0
      %v1576 = vpop.f32.mrf.mxu0
      %v1577 = vpop.f32.mrf.mxu0
      %1578 = vdwg.mxu0
      %v1579 = vsel %vm776, %v1574, -inf
      %1580 = vmax.xlane.f32.xlu0 %v1579
      %v1581 = vpop.xlane.xlu0 %1580
      %v1582 = vsub.f32 %v1574, %v1581
      %v1583 = vmul.f32 %v1582, 1.442695
      %v1584 = vpow.pop %v1583
      %v1585 = vsel %vm776, %v1584, 0.0
      %1586 = vadd.xlane.f32.xlu0 %v1585
      %v1587 = vpop.xlane.xlu0 %1586
      %v1588 = vrcp.pop %v1587
      %v1589 = vmul.f32 %v1584, %v1588
      %v1590 = vpack.c.bf16 %v1589, %v1589
      %1592 = vrot.lane.b32.xlu0 %v1422, 112
      %v1593 = vpop.permute.xlu0 %1592
      %v1595 = vsel %vm776, %v1590, 0
      %v1598 = vsel %vm792, %v1593, 0
      %1600 = vmatprep.subr.bf16.mxu0 0
      %1601 = vmatpush1.bf16.msra.mxu0 0
      %1602 = vmatprep.subr.bf16.mxu0 0
      %1603 = vmatpush1.bf16.msra.mxu0 0
      %1604 = vmatprep.subr.bf16.mxu0 0
      %1605 = vmatpush1.bf16.msra.mxu0 0
      %1606 = vmatprep.subr.bf16.mxu0 0
      %1607 = vmatpush1.bf16.msra.mxu0 0
      %1608 = vmatprep.subr.bf16.mxu0 0
      %1609 = vmatpush1.bf16.msra.mxu0 0
      %1610 = vmatprep.subr.bf16.mxu0 0
      %1611 = vmatpush1.bf16.msra.mxu0 0
      %1612 = vmatprep.subr.bf16.mxu0 0
      %1613 = vmatpush1.bf16.msra.mxu0 0
      %1614 = vmatprep.subr.bf16.mxu0 0
      %1615 = vmatpush1.bf16.msra.mxu0 %v1598
      %1616 = vmatprep.subr.bf16.mxu0 0
      %1617 = vmatpush2.bf16.msra.mxu0 0
      %1618 = vmatprep.subr.bf16.mxu0 0
      %1619 = vmatpush2.bf16.msra.mxu0 0
      %1620 = vmatprep.subr.bf16.mxu0 0
      %1621 = vmatpush2.bf16.msra.mxu0 0
      %1622 = vmatprep.subr.bf16.mxu0 0
      %1623 = vmatpush2.bf16.msra.mxu0 0
      %1624 = vmatprep.subr.bf16.mxu0 0
      %1625 = vmatpush2.bf16.msra.mxu0 0
      %1626 = vmatprep.subr.bf16.mxu0 0
      %1627 = vmatpush2.bf16.msra.mxu0 0
      %1628 = vmatprep.subr.bf16.mxu0 0
      %1629 = vmatpush2.bf16.msra.mxu0 0
      %1630 = vmatprep.subr.bf16.mxu0 0
      %1631 = vmatpush2.bf16.msra.mxu0 0
      %1632 = vmatprep.mubr.bf16.mxu0 0
      %1633 = vmatmul.mubr.bf16.gmra.mxu0 %v1595
      %v1634 = vpop.f32.mrf.mxu0
      %v1635 = vadd.f32 0.0, %v1634
      %v1636 = vpop.f32.mrf.mxu0
      %v1637 = vpop.f32.mrf.mxu0
      %v1638 = vpop.f32.mrf.mxu0
      %1639 = vdwg.mxu0
      %1641 = vrot.lane.b32.xlu0 %v1635, 16
      %v1642 = vpop.permute.xlu0 %1641
      %v1644 = vsel %vm729, %v1522, %v1642
      %v1645 = vpack.c.bf16 %v1644, %v1644
      %s1646 = scalar_lea.vmem %s6, 16
      %v1647 = vld [vmem:[%s1646] sm:$0xf]
      %v1648 = vld [vmem:[%s1646 + $0x4] sm:$0xf]
      %v1649 = vld [vmem:[%s1646 + $0x8] sm:$0xf]
      %v1650 = vld [vmem:[%s1646 + $0xc] sm:$0xf]
      %v1655 = vunpack.c.l.b16 %v1647
      %v1656 = vunpack.c.l.b16 %v1648
      %v1657 = vunpack.c.l.b16 %v1649
      %v1658 = vunpack.c.l.b16 %v1650
      %v1659 = vpack.c.b16 %v1656, %v1655
      %v1660 = vpack.c.b16 %v1658, %v1657
      %v1664 = vsel %vm525, %v1645, 0
      %1666 = vmatprep.subr.bf16.mxu0 0
      %1667 = vmatpush1.bf16.msra.mxu0 0
      %1668 = vmatprep.subr.bf16.mxu0 0
      %1669 = vmatpush1.bf16.msra.mxu0 0
      %1670 = vmatprep.subr.bf16.mxu0 0
      %1671 = vmatpush1.bf16.msra.mxu0 0
      %1672 = vmatprep.subr.bf16.mxu0 0
      %1673 = vmatpush1.bf16.msra.mxu0 0
      %1674 = vmatprep.subr.bf16.mxu0 0
      %1675 = vmatpush1.bf16.msra.mxu0 0
      %1676 = vmatprep.subr.bf16.mxu0 0
      %1677 = vmatpush1.bf16.msra.mxu0 0
      %1678 = vmatprep.subr.bf16.mxu0 0
      %1679 = vmatpush1.bf16.msra.mxu0 %v1660
      %1680 = vmatprep.subr.bf16.mxu0 0
      %1681 = vmatpush1.bf16.msra.mxu0 %v1659
      %1682 = vmatprep.subr.bf16.mxu0 0
      %1683 = vmatpush2.bf16.msra.mxu0 0
      %1684 = vmatprep.subr.bf16.mxu0 0
      %1685 = vmatpush2.bf16.msra.mxu0 0
      %1686 = vmatprep.subr.bf16.mxu0 0
      %1687 = vmatpush2.bf16.msra.mxu0 0
      %1688 = vmatprep.subr.bf16.mxu0 0
      %1689 = vmatpush2.bf16.msra.mxu0 0
      %1690 = vmatprep.subr.bf16.mxu0 0
      %1691 = vmatpush2.bf16.msra.mxu0 0
      %1692 = vmatprep.subr.bf16.mxu0 0
      %1693 = vmatpush2.bf16.msra.mxu0 0
      %1694 = vmatprep.subr.bf16.mxu0 0
      %1695 = vmatpush2.bf16.msra.mxu0 0
      %1696 = vmatprep.subr.bf16.mxu0 0
      %1697 = vmatpush2.bf16.msra.mxu0 0
      %1698 = vmatprep.mubr.bf16.mxu0 0
      %1699 = vmatmul.mubr.bf16.gmra.mxu0 %v1664
      %v1700 = vpop.f32.mrf.mxu0
      %v1701 = vadd.f32 0.0, %v1700
      %v1702 = vpop.f32.mrf.mxu0
      %v1703 = vpop.f32.mrf.mxu0
      %v1704 = vpop.f32.mrf.mxu0
      %1705 = vdwg.mxu0
      %v1706 = vadd.f32 %v1213, %v1701
      %s1707 = scalar_lea.vmem %s7, 1
      %v1708 = vld [vmem:[%s1707] sm:$0x1]
      %v1710 = vlaneseq
      %v1711 = vshrl.u32 %v1710, 7
      %v1712 = vsub.s32 0, %v1711
      %v1713 = vrot.slane %v1708, %v1712
      %v1715 = vadd.f32 %v1706, %v1713
      %s1716 = scalar_lea.vmem %s8, 1
      %v1717 = vld [vmem:[%s1716] sm:$0x1]
      %s1718 = scalar_lea.vmem %s9, 1
      %v1719 = vld [vmem:[%s1718] sm:$0x1]
      %v1720 = vsel %vm525, %v1715, 0.0
      %1721 = vadd.xlane.f32.xlu0 %v1720
      %v1722 = vpop.xlane.xlu0 %1721
      %v1723 = vmul.f32 %v1722, %v529
      %v1724 = vsub.f32 %v1715, %v1723
      %v1725 = vmul.f32 %v1724, %v1724
      %v1726 = vsel %vm525, %v1725, 0.0
      %1727 = vadd.xlane.f32.xlu0 %v1726
      %v1728 = vpop.xlane.xlu0 %1727
      %v1729 = vmul.f32 %v1728, %v529
      %v1730 = vadd.f32 %v1729, 1e-05
      %v1731 = vrsqrt.pop %v1730
      %v1732 = vmul.f32 %v1724, %v1731
      %v1734 = vlaneseq
      %v1735 = vshrl.u32 %v1734, 7
      %v1736 = vsub.s32 0, %v1735
      %v1737 = vrot.slane %v1717, %v1736
      %v1739 = vmul.f32 %v1732, %v1737
      %v1741 = vlaneseq
      %v1742 = vshrl.u32 %v1741, 7
      %v1743 = vsub.s32 0, %v1742
      %v1744 = vrot.slane %v1719, %v1743
      %v1746 = vadd.f32 %v1739, %v1744
      %v1747 = vpack.c.bf16 %v1746, %v1746
      %s1748 = scalar_lea.vmem %s10, 16
      %v1749 = vld [vmem:[%s1748] sm:$0xf]
      %v1750 = vld [vmem:[%s1748 + $0x4] sm:$0xf]
      %v1751 = vld [vmem:[%s1748 + $0x8] sm:$0xf]
      %v1752 = vld [vmem:[%s1748 + $0xc] sm:$0xf]
      %s1753 = scalar_lea.vmem %s11, 1
      %v1754 = vld [vmem:[%s1753] sm:$0x1]
      %v1756 = vlaneseq
      %v1757 = vshrl.u32 %v1756, 7
      %v1758 = vsub.s32 0, %v1757
      %v1759 = vrot.slane %v1754, %v1758
      %v1765 = vunpack.c.l.b16 %v1749
      %v1766 = vunpack.c.l.b16 %v1750
      %v1767 = vunpack.c.l.b16 %v1751
      %v1768 = vunpack.c.l.b16 %v1752
      %v1769 = vpack.c.b16 %v1766, %v1765
      %v1770 = vpack.c.b16 %v1768, %v1767
      %v1774 = vsel %vm525, %v1747, 0
      %1776 = vmatprep.subr.bf16.mxu0 0
      %1777 = vmatpush1.bf16.msra.mxu0 0
      %1778 = vmatprep.subr.bf16.mxu0 0
      %1779 = vmatpush1.bf16.msra.mxu0 0
      %1780 = vmatprep.subr.bf16.mxu0 0
      %1781 = vmatpush1.bf16.msra.mxu0 0
      %1782 = vmatprep.subr.bf16.mxu0 0
      %1783 = vmatpush1.bf16.msra.mxu0 0
      %1784 = vmatprep.subr.bf16.mxu0 0
      %1785 = vmatpush1.bf16.msra.mxu0 0
      %1786 = vmatprep.subr.bf16.mxu0 0
      %1787 = vmatpush1.bf16.msra.mxu0 0
      %1788 = vmatprep.subr.bf16.mxu0 0
      %1789 = vmatpush1.bf16.msra.mxu0 %v1770
      %1790 = vmatprep.subr.bf16.mxu0 0
      %1791 = vmatpush1.bf16.msra.mxu0 %v1769
      %1792 = vmatprep.subr.bf16.mxu0 0
      %1793 = vmatpush2.bf16.msra.mxu0 0
      %1794 = vmatprep.subr.bf16.mxu0 0
      %1795 = vmatpush2.bf16.msra.mxu0 0
      %1796 = vmatprep.subr.bf16.mxu0 0
      %1797 = vmatpush2.bf16.msra.mxu0 0
      %1798 = vmatprep.subr.bf16.mxu0 0
      %1799 = vmatpush2.bf16.msra.mxu0 0
      %1800 = vmatprep.subr.bf16.mxu0 0
      %1801 = vmatpush2.bf16.msra.mxu0 0
      %1802 = vmatprep.subr.bf16.mxu0 0
      %1803 = vmatpush2.bf16.msra.mxu0 0
      %1804 = vmatprep.subr.bf16.mxu0 0
      %1805 = vmatpush2.bf16.msra.mxu0 0
      %1806 = vmatprep.subr.bf16.mxu0 0
      %1807 = vmatpush2.bf16.msra.mxu0 0
      %1808 = vmatprep.mubr.bf16.mxu0 0
      %1809 = vmatmul.mubr.bf16.gmra.mxu0 %v1774
      %v1810 = vpop.f32.mrf.mxu0
      %v1811 = vadd.f32 %v1759, %v1810
      %v1812 = vpop.f32.mrf.mxu0
      %v1813 = vpop.f32.mrf.mxu0
      %v1814 = vpop.f32.mrf.mxu0
      %1815 = vdwg.mxu0
      %v1816 = vmul.f32 %v1811, %v1811
      %v1817 = vmul.f32 %v1811, %v1816
      %v1818 = vmul.f32 %v1817, 0.044715
      %v1819 = vadd.f32 %v1811, %v1818
      %v1820 = vmul.f32 %v1819, 0.7978846
      %v1821 = vtanh.pop %v1820
      %v1822 = vadd.f32 %v1821, 1.0
      %v1823 = vmul.f32 %v1822, 0.5
      %v1824 = vmul.f32 %v1811, %v1823
      %v1825 = vpack.c.bf16 %v1824, %v1824
      %s1826 = scalar_lea.vmem %s12, 32
      %v1827 = vld [vmem:[%s1826] sm:$0xf]
      %v1828 = vld [vmem:[%s1826 + $0x4] sm:$0xf]
      %v1829 = vld [vmem:[%s1826 + $0x8] sm:$0xf]
      %v1830 = vld [vmem:[%s1826 + $0xc] sm:$0xf]
      %v1831 = vld [vmem:[%s1826 + $0x10] sm:$0xf]
      %v1832 = vld [vmem:[%s1826 + $0x14] sm:$0xf]
      %v1833 = vld [vmem:[%s1826 + $0x18] sm:$0xf]
      %v1834 = vld [vmem:[%s1826 + $0x1c] sm:$0xf]
      %v1843 = vunpack.c.l.b16 %v1827
      %v1844 = vunpack.c.l.b16 %v1828
      %v1845 = vunpack.c.l.b16 %v1829
      %v1846 = vunpack.c.l.b16 %v1830
      %v1847 = vunpack.c.l.b16 %v1831
      %v1848 = vunpack.c.l.b16 %v1832
      %v1849 = vunpack.c.l.b16 %v1833
      %v1850 = vunpack.c.l.b16 %v1834
      %v1851 = vpack.c.b16 %v1844, %v1843
      %v1852 = vpack.c.b16 %v1846, %v1845
      %v1853 = vpack.c.b16 %v1848, %v1847
      %v1854 = vpack.c.b16 %v1850, %v1849
      %v1860 = vsel %vm1161, %v1825, 0
      %1862 = vmatprep.subr.bf16.mxu0 0
      %1863 = vmatpush1.bf16.msra.mxu0 0
      %1864 = vmatprep.subr.bf16.mxu0 0
      %1865 = vmatpush1.bf16.msra.mxu0 0
      %1866 = vmatprep.subr.bf16.mxu0 0
      %1867 = vmatpush1.bf16.msra.mxu0 0
      %1868 = vmatprep.subr.bf16.mxu0 0
      %1869 = vmatpush1.bf16.msra.mxu0 0
      %1870 = vmatprep.subr.bf16.mxu0 0
      %1871 = vmatpush1.bf16.msra.mxu0 %v1854
      %1872 = vmatprep.subr.bf16.mxu0 0
      %1873 = vmatpush1.bf16.msra.mxu0 %v1853
      %1874 = vmatprep.subr.bf16.mxu0 0
      %1875 = vmatpush1.bf16.msra.mxu0 %v1852
      %1876 = vmatprep.subr.bf16.mxu0 0
      %1877 = vmatpush1.bf16.msra.mxu0 %v1851
      %1878 = vmatprep.subr.bf16.mxu0 0
      %1879 = vmatpush2.bf16.msra.mxu0 0
      %1880 = vmatprep.subr.bf16.mxu0 0
      %1881 = vmatpush2.bf16.msra.mxu0 0
      %1882 = vmatprep.subr.bf16.mxu0 0
      %1883 = vmatpush2.bf16.msra.mxu0 0
      %1884 = vmatprep.subr.bf16.mxu0 0
      %1885 = vmatpush2.bf16.msra.mxu0 0
      %1886 = vmatprep.subr.bf16.mxu0 0
      %1887 = vmatpush2.bf16.msra.mxu0 0
      %1888 = vmatprep.subr.bf16.mxu0 0
      %1889 = vmatpush2.bf16.msra.mxu0 0
      %1890 = vmatprep.subr.bf16.mxu0 0
      %1891 = vmatpush2.bf16.msra.mxu0 0
      %1892 = vmatprep.subr.bf16.mxu0 0
      %1893 = vmatpush2.bf16.msra.mxu0 0
      %1894 = vmatprep.mubr.bf16.mxu0 0
      %1895 = vmatmul.mubr.bf16.gmra.mxu0 %v1860
      %v1896 = vpop.f32.mrf.mxu0
      %v1897 = vadd.f32 0.0, %v1896
      %v1898 = vpop.f32.mrf.mxu0
      %v1899 = vpop.f32.mrf.mxu0
      %v1900 = vpop.f32.mrf.mxu0
      %1901 = vdwg.mxu0
      %v1902 = vadd.f32 %v1715, %v1897
      %s1903 = scalar_lea.vmem %s13, 1
      %v1904 = vld [vmem:[%s1903] sm:$0x1]
      %v1906 = vlaneseq
      %v1907 = vshrl.u32 %v1906, 7
      %v1908 = vsub.s32 0, %v1907
      %v1909 = vrot.slane %v1904, %v1908
      %v1911 = vadd.f32 %v1902, %v1909
      %v1912 = vld [vmem:[%s14] sm:$0x1]
      %v1913 = vld [vmem:[%s15] sm:$0x1]
      %v1914 = vsel %vm525, %v1911, 0.0
      %1915 = vadd.xlane.f32.xlu0 %v1914
      %v1916 = vpop.xlane.xlu0 %1915
      %v1917 = vmul.f32 %v1916, %v529
      %v1918 = vsub.f32 %v1911, %v1917
      %v1919 = vmul.f32 %v1918, %v1918
      %v1920 = vsel %vm525, %v1919, 0.0
      %1921 = vadd.xlane.f32.xlu0 %v1920
      %v1922 = vpop.xlane.xlu0 %1921
      %v1923 = vmul.f32 %v1922, %v529
      %v1924 = vadd.f32 %v1923, 1e-05
      %v1925 = vrsqrt.pop %v1924
      %v1926 = vmul.f32 %v1918, %v1925
      %v1928 = vlaneseq
      %v1929 = vshrl.u32 %v1928, 7
      %v1930 = vsub.s32 0, %v1929
      %v1931 = vrot.slane %v1912, %v1930
      %v1933 = vmul.f32 %v1926, %v1931
      %v1935 = vlaneseq
      %v1936 = vshrl.u32 %v1935, 7
      %v1937 = vsub.s32 0, %v1936
      %v1938 = vrot.slane %v1913, %v1937
      %v1940 = vadd.f32 %v1933, %v1938
      %1941 = vst.msk [vmem:[%s516] sm:$0xff] %vm525, %v1940
      %p1942 = scmp.lt.s32.totalorder %s27, 1
      %s1943 = scalar_select %p1942, %s27, 1
      %s1944 = smul.addr %s1943, 8
      %s1945 = scalar_lea.vmem %s16, %s1944
      // Predicated region
      $region85: #{_lambda_.3} parent=83 // pred_check
        %p1946 = pneg %p386
      $region86: #{_lambda_.3} parent=83 // pred_check_branch
        %1948 = sbr.rel (%p1946) target = $region88
      $region87: #{_lambda_.3} parent=83 // pred_region
        _
      $region88: #{_lambda_.3} parent=83 // pred_fallthru
        _
    $region84: #{_lambda_.3} parent=5 // pred_fallthru
      _
    %p1949 = scmp.le.s32.totalorder 2, %s22
    // Predicated region
    $region89: #{_lambda_.3} parent=5 // pred_check
      %p1950 = pneg %p1949
    $region90: #{_lambda_.3} parent=5 // pred_check_branch
      %1952 = sbr.rel (%p1950) target = $region92
    $region91: #{_lambda_.3} parent=5 // pred_region
      %s1953 = ssub.s32 %s22, 2
      // Predicated region
      $region93: #{_lambda_.3} parent=91 // pred_check
        %p1954 = pneg %p392
      $region94: #{_lambda_.3} parent=91 // pred_check_branch
        %1956 = sbr.rel (%p1954) target = $region96
      $region95: #{_lambda_.3} parent=91 // pred_region
        %p1957 = scmp.lt.s32.totalorder %s28, 1
        %s1958 = scalar_select %p1957, %s28, 1
        %s1959 = smul.addr %s1958, 8
        %s1960 = scalar_lea.vmem %s16, %s1959
      $region96: #{_lambda_.3} parent=91 // pred_fallthru
        _
    $region92: #{_lambda_.3} parent=5 // pred_fallthru
      _
  $region6: #{_lambda_.3} parent=0 // loop_footer
    %s26 = sadd.s32 1, %s22
  $region7: #{_lambda_.3} parent=0 // loop_footer_branch
    %21 = sbr.rel target = $region3
  $region8: #{_lambda_.3} parent=0 // loop_exit
    _

</llo_original>
